<compile_context>
chip_gen: v7x
topology: tpu7x:2x2x1
jax: 0.10.0
libtpu: 0.0.40
codegen_flags: <defaults>
</compile_context>

<pallas_src>
import functools

import jax
import jax.numpy as jnp
from jax.experimental import pallas as pl
from jax.experimental.pallas import tpu as pltpu


def _round_up(n, m):
    return -(-n // m) * m


# --------------------------------------------------------------------------- #
# Kernel
# --------------------------------------------------------------------------- #
def _vae_kernel(x_ref, w1_ref, b1_ref, w2_ref, b2_ref, wh_ref, bh_ref,
                wd_ref, bd_ref, eps_ref, out_ref, *, input_dim, latent_dim):
    f32 = jnp.float32
    D, L = input_dim, latent_dim
    cdt = w1_ref.dtype          # MXU operand dtype (f32 or bf16); accum is f32

    x = x_ref[...].astype(cdt)

    # ---- encoder: Linear -> ReLU -> Linear -> ReLU (f32 accumulate) ----
    h1 = jnp.dot(x, w1_ref[...], preferred_element_type=f32) + b1_ref[...]
    h1 = jnp.maximum(h1, 0.0).astype(cdt)
    h2 = jnp.dot(h1, w2_ref[...], preferred_element_type=f32) + b2_ref[...]
    h2 = jnp.maximum(h2, 0.0).astype(cdt)

    # ---- fused latent heads: lanes [0:L)=mu, [L:2L)=log_var ----
    heads = jnp.dot(h2, wh_ref[...], preferred_element_type=f32) + bh_ref[...]
    mu = heads[:, :L]
    lv = heads[:, L:]

    # ---- reparameterize (f32): z = mu + eps * exp(0.5 * log_var) ----
    z = mu + eps_ref[...] * jnp.exp(0.5 * lv)

    # ---- decode: Linear -> Sigmoid (bernoulli output dist) ----
    logits = (jnp.dot(z.astype(cdt), wd_ref[...], preferred_element_type=f32)
              + bd_ref[...])
    # numerically stable sigmoid; divide goes to the EUP via approx reciprocal.
    e = jnp.exp(-jnp.abs(logits))
    inv = pl.reciprocal(1.0 + e, approx=True)
    recon = jnp.where(logits >= 0.0, inv, 1.0 - inv)   # exact identity form

    # ---- single packed, lane-dense output slab: [recon | mu | log_var] ----
    out_ref[:, :D] = recon
    out_ref[:, D:D + 2 * L] = heads
    pad = out_ref.shape[1] - (D + 2 * L)
    if pad:  # static; keep any alignment-pad lanes deterministic
        out_ref[:, D + 2 * L:] = jnp.zeros((out_ref.shape[0], pad), f32)


# --------------------------------------------------------------------------- #
# One-time parameter prep (hoisted out of the per-call path)
# --------------------------------------------------------------------------- #
def prepare_params(params, matmul_dtype=jnp.float32):
    """Fuse fc_mu/fc_log_var into one head and cast MXU operands once.

    Biases stay float32: they add into the f32 accumulators and all
    elementwise math is f32 (important on v5e, which has no bf16 VPU/EUP).
    bf16 operands are a win on every generation (v5e's MXU is bf16-native).
    """
    w1, b1, w2, b2, wmu, bmu, wlv, blv, wd, bd = params
    assert wd.shape[0] == wmu.shape[1], \
        "decoder_linear input dim must equal latent_dim (module constraint)"
    wh = jnp.concatenate([wmu, wlv], axis=1)   # [H2, 2L]
    bh = jnp.concatenate([bmu, blv], axis=1)   # [1, 2L]
    cast = lambda w: w.astype(matmul_dtype)
    return (cast(w1), b1, cast(w2), b2, cast(wh), bh, cast(wd), bd)


# --------------------------------------------------------------------------- #
# Forward wrapper
# --------------------------------------------------------------------------- #
def vae_forward(x, prep, eps, *, batch_tile=512):
    """Fused VAE forward. Returns (recon_x, mu, log_var), all float32."""
    B, D = x.shape
    w1, b1, w2, b2, wh, bh, wd, bd = prep
    H1, H2 = w1.shape[1], w2.shape[1]
    L = wd.shape[0]

    W = D + 2 * L                               # packed useful width
    WP = _round_up(max(W, 128), 128)            # lane-dense output width

    # No batch padding: ragged tails are handled by Pallas' partial last block
    # (OOB rows compute on garbage, their stores are masked, nothing reads them).
    bt = min(batch_tile, _round_up(B, 8))
    grid = (pl.cdiv(B, bt),)
    const = lambda i: (0, 0)                    # whole parameter block each step

    grid_spec = pl.GridSpec(
        grid=grid,
        in_specs=[
            pl.BlockSpec((bt, D), lambda i: (i, 0)),          # x
            pl.BlockSpec(w1.shape, const), pl.BlockSpec(b1.shape, const),
            pl.BlockSpec(w2.shape, const), pl.BlockSpec(b2.shape, const),
            pl.BlockSpec(wh.shape, const), pl.BlockSpec(bh.shape, const),
            pl.BlockSpec(wd.shape, const), pl.BlockSpec(bd.shape, const),
            pl.BlockSpec((bt, L), lambda i: (i, 0)),          # eps
        ],
        out_specs=pl.BlockSpec((bt, WP), lambda i: (i, 0)),   # packed output
    )

    flops = 2 * B * (D * H1 + H1 * H2 + H2 * 2 * L + L * D)
    transcendentals = B * (L + D)
    bytes_accessed = int(
        x.size * x.dtype.itemsize + eps.size * eps.dtype.itemsize
        + sum(a.size * a.dtype.itemsize for a in prep)
        + B * WP * 4)
    cost = pl.CostEstimate(flops=int(flops),
                           transcendentals=int(transcendentals),
                           bytes_accessed=bytes_accessed)

    packed = pl.pallas_call(
        functools.partial(_vae_kernel, input_dim=D, latent_dim=L),
        out_shape=jax.ShapeDtypeStruct((B, WP), jnp.float32),
        grid_spec=grid_spec,
        compiler_params=pltpu.CompilerParams(
            dimension_semantics=("parallel",)),   # shards row blocks across TCs
        cost_estimate=cost,
    )(x, w1, b1, w2, b2, wh, bh, wd, bd, eps)

    recon = packed[:, :D]
    mu = packed[:, D:D + L]
    log_var = packed[:, D + L:D + 2 * L]
    return recon, mu, log_var


# --------------------------------------------------------------------------- #
# Parameter init + plain-JAX reference
# --------------------------------------------------------------------------- #
def init_params(key, input_dim, hidden_dims, latent_dim):
    """Deterministic parameter init (shapes match the PyTorch module).

    Weights are [in_features, out_features]; biases are [1, out_features].
    """
    dims = []
    prev = input_dim
    for h in hidden_dims:
        dims.append((prev, h))          # encoder Linear layers
        prev = h
    enc_out = prev
    dims.append((enc_out, latent_dim))  # fc_mu
    dims.append((enc_out, latent_dim))  # fc_log_var
    # decoder_linear: in_features == hidden_dims[0] (== latent_dim by construction)
    dims.append((hidden_dims[0], input_dim))

    params = []
    for (din, dout) in dims:
        key, kw, kb = jax.random.split(key, 3)
        bound = 1.0 / jnp.sqrt(din)
        w = jax.random.uniform(kw, (din, dout), jnp.float32, -bound, bound)
        b = jax.random.uniform(kb, (1, dout), jnp.float32, -bound, bound)
        params.extend([w, b])
    return tuple(params)


def vae_forward_ref(x, params, eps):
    """Plain-JAX reference of the same forward pass (for verification)."""
    w1, b1, w2, b2, wmu, bmu, wlv, blv, wd, bd = params
    dot = functools.partial(jnp.dot, precision=jax.lax.Precision.HIGHEST)
    h = jnp.maximum(dot(x, w1) + b1, 0.0)
    h = jnp.maximum(dot(h, w2) + b2, 0.0)
    mu = dot(h, wmu) + bmu
    lv = dot(h, wlv) + blv
    z = mu + eps * jnp.exp(0.5 * lv)
    recon = jax.nn.sigmoid(dot(z, wd) + bd)
    return recon, mu, lv


# --------------------------------------------------------------------------- #
# Self-test
# --------------------------------------------------------------------------- #
if __name__ == "__main__":
    # Shapes consistent with the module's forward:
    #   input_dim=64, hidden_dims=[32, 16], latent_dim=32 (== hidden_dims[0]).
    # B=1024 with batch_tile=512 -> grid=2 (one block per v7x TensorCore).
    B, INPUT_DIM, LATENT_DIM = 1024, 64, 32
    HIDDEN_DIMS = [32, 16]

    root = jax.random.PRNGKey(0)
    k_params, k_x, k_eps = jax.random.split(root, 3)

    params = init_params(k_params, INPUT_DIM, HIDDEN_DIMS, LATENT_DIM)
    x = jax.random.uniform(k_x, (B, INPUT_DIM), jnp.float32)      # MNIST-like pixels
    eps = jax.random.normal(k_eps, (B, LATENT_DIM), jnp.float32)  # reparam noise
    # TODO(synk): torch.randn_like is replaced by an explicit eps input (RNG
    # sampled outside the kernel) to keep the forward deterministic.

    recon_ref, mu_ref, lv_ref = vae_forward_ref(x, params, eps)

    fwd = jax.jit(vae_forward)   # batch_tile=512 default baked in

    # ---- f32 matmul path (matches the reference; recon tolerance covers the
    #      EUP approximate reciprocal used for the sigmoid divide). ----
    prep_f32 = prepare_params(params, jnp.float32)
    recon, mu, log_var = jax.block_until_ready(fwd(x, prep_f32, eps))
    assert recon.shape == (B, INPUT_DIM)
    assert mu.shape == (B, LATENT_DIM) and log_var.shape == (B, LATENT_DIM)
    assert jnp.allclose(mu, mu_ref, atol=1e-4, rtol=1e-4)
    assert jnp.allclose(log_var, lv_ref, atol=1e-4, rtol=1e-4)
    assert jnp.allclose(recon, recon_ref, atol=5e-3, rtol=5e-3)

    # ---- ragged batch: exercises the masked partial last block (no jnp.pad). ----
    Br = 600
    recon_r, mu_r, lv_r = jax.block_until_ready(
        fwd(x[:Br], prep_f32, eps[:Br]))
    assert recon_r.shape == (Br, INPUT_DIM)
    assert jnp.allclose(mu_r, mu_ref[:Br], atol=1e-4, rtol=1e-4)
    assert jnp.allclose(lv_r, lv_ref[:Br], atol=1e-4, rtol=1e-4)
    assert jnp.allclose(recon_r, recon_ref[:Br], atol=5e-3, rtol=5e-3)

    # ---- bf16 MXU-operand path (f32 accumulate + f32 elementwise; valid on
    #      v5e/v6e/v7x alike). ----
    prep_bf16 = prepare_params(params, jnp.bfloat16)
    recon_bf, mu_bf, lv_bf = jax.block_until_ready(fwd(x, prep_bf16, eps))
    assert jnp.allclose(mu_bf, mu_ref, atol=6e-2, rtol=6e-2)
    assert jnp.allclose(lv_bf, lv_ref, atol=6e-2, rtol=6e-2)
    assert jnp.allclose(recon_bf, recon_ref, atol=6e-2, rtol=6e-2)

    print("KERNEL_OK")
</pallas_src>

<mosaic_0001>
module attributes {stable_mosaic.version = 11 : i64} {
  func.func @_vae_kernel(%arg0: i32, %arg1: memref<512x64xf32, #tpu.memory_space<vmem>>, %arg2: memref<64x32xf32, #tpu.memory_space<vmem>>, %arg3: memref<1x32xf32, #tpu.memory_space<vmem>>, %arg4: memref<32x16xf32, #tpu.memory_space<vmem>>, %arg5: memref<1x16xf32, #tpu.memory_space<vmem>>, %arg6: memref<16x64xf32, #tpu.memory_space<vmem>>, %arg7: memref<1x64xf32, #tpu.memory_space<vmem>>, %arg8: memref<32x64xf32, #tpu.memory_space<vmem>>, %arg9: memref<1x64xf32, #tpu.memory_space<vmem>>, %arg10: memref<512x32xf32, #tpu.memory_space<vmem>>, %arg11: memref<512x128xf32, #tpu.memory_space<vmem>>) attributes {dimension_semantics = [#tpu.dimension_semantics<parallel>], iteration_bounds = array<i64: 2>, scalar_prefetch = 0 : i64, scratch_operands = 0 : i64, tpu.core_type = #tpu.core_type<tc>, window_params = [{transform_indices = @transform_0, window_bounds = array<i64: 512, 64>}, {pipeline_mode = #tpu.pipeline_mode<synchronous>, transform_indices = @transform_1, window_bounds = array<i64: 64, 32>}, {pipeline_mode = #tpu.pipeline_mode<synchronous>, transform_indices = @transform_2, window_bounds = array<i64: 1, 32>}, {pipeline_mode = #tpu.pipeline_mode<synchronous>, transform_indices = @transform_3, window_bounds = array<i64: 32, 16>}, {pipeline_mode = #tpu.pipeline_mode<synchronous>, transform_indices = @transform_4, window_bounds = array<i64: 1, 16>}, {pipeline_mode = #tpu.pipeline_mode<synchronous>, transform_indices = @transform_5, window_bounds = array<i64: 16, 64>}, {pipeline_mode = #tpu.pipeline_mode<synchronous>, transform_indices = @transform_6, window_bounds = array<i64: 1, 64>}, {pipeline_mode = #tpu.pipeline_mode<synchronous>, transform_indices = @transform_7, window_bounds = array<i64: 32, 64>}, {pipeline_mode = #tpu.pipeline_mode<synchronous>, transform_indices = @transform_8, window_bounds = array<i64: 1, 64>}, {transform_indices = @transform_9, window_bounds = array<i64: 512, 32>}, {transform_indices = @transform_10, window_bounds = array<i64: 512, 128>}]} {
    %c0 = arith.constant 0 : index
    %c0_0 = arith.constant 0 : index
    %0 = vector.load %arg1[%c0, %c0_0] : memref<512x64xf32, #tpu.memory_space<vmem>>, vector<512x64xf32>
    %c0_1 = arith.constant 0 : index
    %c0_2 = arith.constant 0 : index
    %1 = vector.load %arg2[%c0_1, %c0_2] : memref<64x32xf32, #tpu.memory_space<vmem>>, vector<64x32xf32>
    %cst = arith.constant dense<0.000000e+00> : vector<512x32xf32>
    %2 = tpu.matmul %0, %1, %cst {dimension_numbers = #tpu.dot_dimension_numbers<[1], [0], [0], [1], [0, 0, 1, 1], [], []>} : vector<512x64xf32>, vector<64x32xf32>, vector<512x32xf32> -> vector<512x32xf32>
    %c0_3 = arith.constant 0 : index
    %c0_4 = arith.constant 0 : index
    %3 = vector.load %arg3[%c0_3, %c0_4] : memref<1x32xf32, #tpu.memory_space<vmem>>, vector<1x32xf32>
    %4 = vector.broadcast %3 : vector<1x32xf32> to vector<512x32xf32>
    %5 = arith.addf %2, %4 : vector<512x32xf32>
    %cst_5 = arith.constant 0.000000e+00 : f32
    %6 = vector.broadcast %cst_5 : f32 to vector<512x32xf32>
    %7 = arith.maximumf %5, %6 : vector<512x32xf32>
    %c0_6 = arith.constant 0 : index
    %c0_7 = arith.constant 0 : index
    %8 = vector.load %arg4[%c0_6, %c0_7] : memref<32x16xf32, #tpu.memory_space<vmem>>, vector<32x16xf32>
    %cst_8 = arith.constant dense<0.000000e+00> : vector<512x16xf32>
    %9 = tpu.matmul %7, %8, %cst_8 {dimension_numbers = #tpu.dot_dimension_numbers<[1], [0], [0], [1], [0, 0, 1, 1], [], []>} : vector<512x32xf32>, vector<32x16xf32>, vector<512x16xf32> -> vector<512x16xf32>
    %c0_9 = arith.constant 0 : index
    %c0_10 = arith.constant 0 : index
    %10 = vector.load %arg5[%c0_9, %c0_10] : memref<1x16xf32, #tpu.memory_space<vmem>>, vector<1x16xf32>
    %11 = vector.broadcast %10 : vector<1x16xf32> to vector<512x16xf32>
    %12 = arith.addf %9, %11 : vector<512x16xf32>
    %cst_11 = arith.constant 0.000000e+00 : f32
    %13 = vector.broadcast %cst_11 : f32 to vector<512x16xf32>
    %14 = arith.maximumf %12, %13 : vector<512x16xf32>
    %c0_12 = arith.constant 0 : index
    %c0_13 = arith.constant 0 : index
    %15 = vector.load %arg6[%c0_12, %c0_13] : memref<16x64xf32, #tpu.memory_space<vmem>>, vector<16x64xf32>
    %cst_14 = arith.constant dense<0.000000e+00> : vector<512x64xf32>
    %16 = tpu.matmul %14, %15, %cst_14 {dimension_numbers = #tpu.dot_dimension_numbers<[1], [0], [0], [1], [0, 0, 1, 1], [], []>} : vector<512x16xf32>, vector<16x64xf32>, vector<512x64xf32> -> vector<512x64xf32>
    %c0_15 = arith.constant 0 : index
    %c0_16 = arith.constant 0 : index
    %17 = vector.load %arg7[%c0_15, %c0_16] : memref<1x64xf32, #tpu.memory_space<vmem>>, vector<1x64xf32>
    %18 = vector.broadcast %17 : vector<1x64xf32> to vector<512x64xf32>
    %19 = arith.addf %16, %18 : vector<512x64xf32>
    %20 = vector.extract_strided_slice %19 {offsets = [0, 0], sizes = [512, 32], strides = [1, 1]} : vector<512x64xf32> to vector<512x32xf32>
    %21 = vector.extract_strided_slice %19 {offsets = [0, 32], sizes = [512, 32], strides = [1, 1]} : vector<512x64xf32> to vector<512x32xf32>
    %c0_17 = arith.constant 0 : index
    %c0_18 = arith.constant 0 : index
    %22 = vector.load %arg10[%c0_17, %c0_18] : memref<512x32xf32, #tpu.memory_space<vmem>>, vector<512x32xf32>
    %cst_19 = arith.constant 5.000000e-01 : f32
    %23 = vector.broadcast %cst_19 : f32 to vector<512x32xf32>
    %24 = arith.mulf %23, %21 : vector<512x32xf32>
    %25 = math.exp %24 : vector<512x32xf32>
    %26 = arith.mulf %22, %25 : vector<512x32xf32>
    %27 = arith.addf %20, %26 : vector<512x32xf32>
    %c0_20 = arith.constant 0 : index
    %c0_21 = arith.constant 0 : index
    %28 = vector.load %arg8[%c0_20, %c0_21] : memref<32x64xf32, #tpu.memory_space<vmem>>, vector<32x64xf32>
    %cst_22 = arith.constant dense<0.000000e+00> : vector<512x64xf32>
    %29 = tpu.matmul %27, %28, %cst_22 {dimension_numbers = #tpu.dot_dimension_numbers<[1], [0], [0], [1], [0, 0, 1, 1], [], []>} : vector<512x32xf32>, vector<32x64xf32>, vector<512x64xf32> -> vector<512x64xf32>
    %c0_23 = arith.constant 0 : index
    %c0_24 = arith.constant 0 : index
    %30 = vector.load %arg9[%c0_23, %c0_24] : memref<1x64xf32, #tpu.memory_space<vmem>>, vector<1x64xf32>
    %31 = vector.broadcast %30 : vector<1x64xf32> to vector<512x64xf32>
    %32 = arith.addf %29, %31 : vector<512x64xf32>
    %33 = math.absf %32 : vector<512x64xf32>
    %cst_25 = arith.constant 0.000000e+00 : f32
    %34 = vector.broadcast %cst_25 : f32 to vector<512x64xf32>
    %35 = arith.subf %34, %33 : vector<512x64xf32>
    %36 = math.exp %35 : vector<512x64xf32>
    %cst_26 = arith.constant 1.000000e+00 : f32
    %37 = vector.broadcast %cst_26 : f32 to vector<512x64xf32>
    %38 = arith.addf %37, %36 : vector<512x64xf32>
    %39 = tpu.reciprocal %38 {approx = true} : vector<512x64xf32> -> vector<512x64xf32>
    %cst_27 = arith.constant 0.000000e+00 : f32
    %40 = vector.broadcast %cst_27 : f32 to vector<512x64xf32>
    %41 = arith.cmpf oge, %32, %40 : vector<512x64xf32>
    %cst_28 = arith.constant 1.000000e+00 : f32
    %42 = vector.broadcast %cst_28 : f32 to vector<512x64xf32>
    %43 = arith.subf %42, %39 : vector<512x64xf32>
    %44 = arith.select %41, %39, %43 : vector<512x64xi1>, vector<512x64xf32>
    %c0_29 = arith.constant 0 : index
    %c0_30 = arith.constant 0 : index
    %45 = vector.load %arg11[%c0_29, %c0_30] : memref<512x128xf32, #tpu.memory_space<vmem>>, vector<512x64xf32>
    tpu.vector_store %arg11[%c0_29, %c0_30], %44 {strides = array<i32>} : memref<512x128xf32, #tpu.memory_space<vmem>>, vector<512x64xf32>,
    %c0_31 = arith.constant 0 : index
    %c64 = arith.constant 64 : index
    %46 = vector.load %arg11[%c0_31, %c64] : memref<512x128xf32, #tpu.memory_space<vmem>>, vector<512x64xf32>
    tpu.vector_store %arg11[%c0_31, %c64], %19 {strides = array<i32>} : memref<512x128xf32, #tpu.memory_space<vmem>>, vector<512x64xf32>,
    return
  }
  func.func @transform_0(%arg0: i32) -> (i32, i32) {
    %c0_i32 = arith.constant 0 : i32
    %c0_i32_0 = arith.constant 0 : i32
    return %arg0, %c0_i32 : i32, i32
  }
  func.func @transform_1(%arg0: i32) -> (i32, i32) {
    %c0_i32 = arith.constant 0 : i32
    %c0_i32_0 = arith.constant 0 : i32
    %c0_i32_1 = arith.constant 0 : i32
    return %c0_i32, %c0_i32_0 : i32, i32
  }
  func.func @transform_2(%arg0: i32) -> (i32, i32) {
    %c0_i32 = arith.constant 0 : i32
    %c0_i32_0 = arith.constant 0 : i32
    %c0_i32_1 = arith.constant 0 : i32
    return %c0_i32, %c0_i32_0 : i32, i32
  }
  func.func @transform_3(%arg0: i32) -> (i32, i32) {
    %c0_i32 = arith.constant 0 : i32
    %c0_i32_0 = arith.constant 0 : i32
    %c0_i32_1 = arith.constant 0 : i32
    return %c0_i32, %c0_i32_0 : i32, i32
  }
  func.func @transform_4(%arg0: i32) -> (i32, i32) {
    %c0_i32 = arith.constant 0 : i32
    %c0_i32_0 = arith.constant 0 : i32
    %c0_i32_1 = arith.constant 0 : i32
    return %c0_i32, %c0_i32_0 : i32, i32
  }
  func.func @transform_5(%arg0: i32) -> (i32, i32) {
    %c0_i32 = arith.constant 0 : i32
    %c0_i32_0 = arith.constant 0 : i32
    %c0_i32_1 = arith.constant 0 : i32
    return %c0_i32, %c0_i32_0 : i32, i32
  }
  func.func @transform_6(%arg0: i32) -> (i32, i32) {
    %c0_i32 = arith.constant 0 : i32
    %c0_i32_0 = arith.constant 0 : i32
    %c0_i32_1 = arith.constant 0 : i32
    return %c0_i32, %c0_i32_0 : i32, i32
  }
  func.func @transform_7(%arg0: i32) -> (i32, i32) {
    %c0_i32 = arith.constant 0 : i32
    %c0_i32_0 = arith.constant 0 : i32
    %c0_i32_1 = arith.constant 0 : i32
    return %c0_i32, %c0_i32_0 : i32, i32
  }
  func.func @transform_8(%arg0: i32) -> (i32, i32) {
    %c0_i32 = arith.constant 0 : i32
    %c0_i32_0 = arith.constant 0 : i32
    %c0_i32_1 = arith.constant 0 : i32
    return %c0_i32, %c0_i32_0 : i32, i32
  }
  func.func @transform_9(%arg0: i32) -> (i32, i32) {
    %c0_i32 = arith.constant 0 : i32
    %c0_i32_0 = arith.constant 0 : i32
    return %arg0, %c0_i32 : i32, i32
  }
  func.func @transform_10(%arg0: i32) -> (i32, i32) {
    %c0_i32 = arith.constant 0 : i32
    %c0_i32_0 = arith.constant 0 : i32
    return %arg0, %c0_i32 : i32, i32
  }
}

</mosaic_0001>

<llo_original>
// kernel: vae_forward.1
$region0: #{vae_forward.1}
  #allocation0 [shape = 'u32[]', space=smem, size = 0x4, offset = 0x4, fixed_abs, tag = 'smem constant byte address 0x4 - core index']
  #allocation1 [shape = 'u32[144,128]{1,0:T(1,128)}', space=vmem, size = 0x12000, scoped, tag = 'internal scratch']
  %s0 = inlined_call_operand.vmem [shape: f32[1024,64], index: 0, kind: input, shape index: {}]
  %s1 = inlined_call_operand.vmem [shape: f32[64,32], index: 1, kind: input, shape index: {}]
  %s2 = inlined_call_operand.vmem [shape: f32[1,32], index: 2, kind: input, shape index: {}]
  %s3 = inlined_call_operand.vmem [shape: f32[32,16], index: 3, kind: input, shape index: {}]
  %s4 = inlined_call_operand.vmem [shape: f32[1,16], index: 4, kind: input, shape index: {}]
  %s5 = inlined_call_operand.vmem [shape: f32[16,64], index: 5, kind: input, shape index: {}]
  %s6 = inlined_call_operand.vmem [shape: f32[1,64], index: 6, kind: input, shape index: {}]
  %s7 = inlined_call_operand.vmem [shape: f32[32,64], index: 7, kind: input, shape index: {}]
  %s8 = inlined_call_operand.vmem [shape: f32[1,64], index: 8, kind: input, shape index: {}]
  %s9 = inlined_call_operand.vmem [shape: f32[1024,32], index: 9, kind: input, shape index: {}]
  %s10 = inlined_call_operand.vmem [shape: f32[1024,128], index: 10, kind: output, shape index: {}]
  %s11 = sld [smem:[#allocation0]]
  $region73: #{vae_forward.1} parent=0
    _
  %s13 = ssub.s32 1, %s11
  %s14 = scalar_select 0, %s13, %s11
  loop: start=0, step=1, limit=4
  $region2: #{vae_forward.1} parent=0 // loop_pre_header
    _
  $region3: #{vae_forward.1} parent=0 // loop_header
    %s16 = sphi 0, %s20
    %p17 = scmp.ge.s32.totalorder %s16, 4
    %s26 = sphi 0, %s28
    %s29 = sphi 0, %s26
    %s30 = sphi 0, %s29
    %s46 = sphi 0, %s30
    %s50 = sphi 0, %s50
    %s52 = sphi 0, %s50
    %s53 = sphi 0, %s52
    %s67 = sphi 0, %s53
    %s71 = sphi 0, %s71
    %s73 = sphi 0, %s71
    %s74 = sphi 0, %s73
    %s88 = sphi 0, %s74
    %s92 = sphi 0, %s92
    %s94 = sphi 0, %s92
    %s95 = sphi 0, %s94
    %s109 = sphi 0, %s95
    %s113 = sphi 0, %s113
    %s115 = sphi 0, %s113
    %s116 = sphi 0, %s115
    %s130 = sphi 0, %s116
    %s134 = sphi 0, %s134
    %s136 = sphi 0, %s134
    %s137 = sphi 0, %s136
    %s151 = sphi 0, %s137
    %s155 = sphi 0, %s155
    %s157 = sphi 0, %s155
    %s158 = sphi 0, %s157
    %s172 = sphi 0, %s158
    %s176 = sphi 0, %s176
    %s178 = sphi 0, %s176
    %s179 = sphi 0, %s178
    %s193 = sphi 0, %s179
    %s197 = sphi 0, %s197
    %s199 = sphi 0, %s197
    %s200 = sphi 0, %s199
    %s214 = sphi 0, %s200
    %s220 = sphi 0, %s222
    %s223 = sphi 0, %s220
    %s224 = sphi 0, %s223
    %s240 = sphi 0, %s224
    %s246 = sphi 0, %s248
    %s249 = sphi 0, %s246
    %s250 = sphi 0, %s249
    %s266 = sphi 0, %s250
  $region4: #{vae_forward.1} parent=0 // loop_header_branch
    %19 = sbr.rel (%p17) target = $region8
  $region5: #{vae_forward.1} parent=0 // loop_body
    %s21 = ssub.s32 %s16, 1
    %s22 = ssub.s32 %s16, 2
    %s23 = sadd.s32 %s16, 1
    %s24 = ssub.s32 %s16, %s23
    %p25 = scmp.eq.s32.totalorder %s24, 0
    %s27 = sadd.s32 %s26, 1
    %s28 = scalar_select %p25, %s26, %s27
    %p31 = pneg %p25
    %p32 = scmp.eq.s32.totalorder %s16, 1
    %p33 = por %p31, %p32
    %p34 = scmp.ne.s32.totalorder %s26, %s29
    %p35 = scmp.eq.s32.totalorder %s16, 0
    %p36 = por %p34, %p35
    %p37 = scmp.ne.s32.totalorder %s26, %s29
    %p38 = scmp.eq.s32.totalorder %s21, 1
    %p39 = por %p37, %p38
    %p40 = scmp.ne.s32.totalorder %s29, %s30
    %p41 = scmp.eq.s32.totalorder %s21, 0
    %p42 = por %p40, %p41
    %p43 = scmp.ne.s32.totalorder %s29, %s30
    %p44 = scmp.eq.s32.totalorder %s22, 1
    %p45 = por %p43, %p44
    %p47 = scmp.ne.s32.totalorder %s30, %s46
    %p48 = scmp.eq.s32.totalorder %s22, 0
    %p49 = por %p47, %p48
    %s51 = sadd.s32 %s50, 1
    %p54 = scmp.eq.s32.totalorder %s16, 1
    %p55 = scmp.ne.s32.totalorder %s50, %s52
    %p56 = scmp.eq.s32.totalorder %s16, 0
    %p57 = por %p55, %p56
    %p58 = scmp.ne.s32.totalorder %s50, %s52
    %p59 = scmp.eq.s32.totalorder %s21, 1
    %p60 = por %p58, %p59
    %p61 = scmp.ne.s32.totalorder %s52, %s53
    %p62 = scmp.eq.s32.totalorder %s21, 0
    %p63 = por %p61, %p62
    %p64 = scmp.ne.s32.totalorder %s52, %s53
    %p65 = scmp.eq.s32.totalorder %s22, 1
    %p66 = por %p64, %p65
    %p68 = scmp.ne.s32.totalorder %s53, %s67
    %p69 = scmp.eq.s32.totalorder %s22, 0
    %p70 = por %p68, %p69
    %s72 = sadd.s32 %s71, 1
    %p75 = scmp.eq.s32.totalorder %s16, 1
    %p76 = scmp.ne.s32.totalorder %s71, %s73
    %p77 = scmp.eq.s32.totalorder %s16, 0
    %p78 = por %p76, %p77
    %p79 = scmp.ne.s32.totalorder %s71, %s73
    %p80 = scmp.eq.s32.totalorder %s21, 1
    %p81 = por %p79, %p80
    %p82 = scmp.ne.s32.totalorder %s73, %s74
    %p83 = scmp.eq.s32.totalorder %s21, 0
    %p84 = por %p82, %p83
    %p85 = scmp.ne.s32.totalorder %s73, %s74
    %p86 = scmp.eq.s32.totalorder %s22, 1
    %p87 = por %p85, %p86
    %p89 = scmp.ne.s32.totalorder %s74, %s88
    %p90 = scmp.eq.s32.totalorder %s22, 0
    %p91 = por %p89, %p90
    %s93 = sadd.s32 %s92, 1
    %p96 = scmp.eq.s32.totalorder %s16, 1
    %p97 = scmp.ne.s32.totalorder %s92, %s94
    %p98 = scmp.eq.s32.totalorder %s16, 0
    %p99 = por %p97, %p98
    %p100 = scmp.ne.s32.totalorder %s92, %s94
    %p101 = scmp.eq.s32.totalorder %s21, 1
    %p102 = por %p100, %p101
    %p103 = scmp.ne.s32.totalorder %s94, %s95
    %p104 = scmp.eq.s32.totalorder %s21, 0
    %p105 = por %p103, %p104
    %p106 = scmp.ne.s32.totalorder %s94, %s95
    %p107 = scmp.eq.s32.totalorder %s22, 1
    %p108 = por %p106, %p107
    %p110 = scmp.ne.s32.totalorder %s95, %s109
    %p111 = scmp.eq.s32.totalorder %s22, 0
    %p112 = por %p110, %p111
    %s114 = sadd.s32 %s113, 1
    %p117 = scmp.eq.s32.totalorder %s16, 1
    %p118 = scmp.ne.s32.totalorder %s113, %s115
    %p119 = scmp.eq.s32.totalorder %s16, 0
    %p120 = por %p118, %p119
    %p121 = scmp.ne.s32.totalorder %s113, %s115
    %p122 = scmp.eq.s32.totalorder %s21, 1
    %p123 = por %p121, %p122
    %p124 = scmp.ne.s32.totalorder %s115, %s116
    %p125 = scmp.eq.s32.totalorder %s21, 0
    %p126 = por %p124, %p125
    %p127 = scmp.ne.s32.totalorder %s115, %s116
    %p128 = scmp.eq.s32.totalorder %s22, 1
    %p129 = por %p127, %p128
    %p131 = scmp.ne.s32.totalorder %s116, %s130
    %p132 = scmp.eq.s32.totalorder %s22, 0
    %p133 = por %p131, %p132
    %s135 = sadd.s32 %s134, 1
    %p138 = scmp.eq.s32.totalorder %s16, 1
    %p139 = scmp.ne.s32.totalorder %s134, %s136
    %p140 = scmp.eq.s32.totalorder %s16, 0
    %p141 = por %p139, %p140
    %p142 = scmp.ne.s32.totalorder %s134, %s136
    %p143 = scmp.eq.s32.totalorder %s21, 1
    %p144 = por %p142, %p143
    %p145 = scmp.ne.s32.totalorder %s136, %s137
    %p146 = scmp.eq.s32.totalorder %s21, 0
    %p147 = por %p145, %p146
    %p148 = scmp.ne.s32.totalorder %s136, %s137
    %p149 = scmp.eq.s32.totalorder %s22, 1
    %p150 = por %p148, %p149
    %p152 = scmp.ne.s32.totalorder %s137, %s151
    %p153 = scmp.eq.s32.totalorder %s22, 0
    %p154 = por %p152, %p153
    %s156 = sadd.s32 %s155, 1
    %p159 = scmp.eq.s32.totalorder %s16, 1
    %p160 = scmp.ne.s32.totalorder %s155, %s157
    %p161 = scmp.eq.s32.totalorder %s16, 0
    %p162 = por %p160, %p161
    %p163 = scmp.ne.s32.totalorder %s155, %s157
    %p164 = scmp.eq.s32.totalorder %s21, 1
    %p165 = por %p163, %p164
    %p166 = scmp.ne.s32.totalorder %s157, %s158
    %p167 = scmp.eq.s32.totalorder %s21, 0
    %p168 = por %p166, %p167
    %p169 = scmp.ne.s32.totalorder %s157, %s158
    %p170 = scmp.eq.s32.totalorder %s22, 1
    %p171 = por %p169, %p170
    %p173 = scmp.ne.s32.totalorder %s158, %s172
    %p174 = scmp.eq.s32.totalorder %s22, 0
    %p175 = por %p173, %p174
    %s177 = sadd.s32 %s176, 1
    %p180 = scmp.eq.s32.totalorder %s16, 1
    %p181 = scmp.ne.s32.totalorder %s176, %s178
    %p182 = scmp.eq.s32.totalorder %s16, 0
    %p183 = por %p181, %p182
    %p184 = scmp.ne.s32.totalorder %s176, %s178
    %p185 = scmp.eq.s32.totalorder %s21, 1
    %p186 = por %p184, %p185
    %p187 = scmp.ne.s32.totalorder %s178, %s179
    %p188 = scmp.eq.s32.totalorder %s21, 0
    %p189 = por %p187, %p188
    %p190 = scmp.ne.s32.totalorder %s178, %s179
    %p191 = scmp.eq.s32.totalorder %s22, 1
    %p192 = por %p190, %p191
    %p194 = scmp.ne.s32.totalorder %s179, %s193
    %p195 = scmp.eq.s32.totalorder %s22, 0
    %p196 = por %p194, %p195
    %s198 = sadd.s32 %s197, 1
    %p201 = scmp.eq.s32.totalorder %s16, 1
    %p202 = scmp.ne.s32.totalorder %s197, %s199
    %p203 = scmp.eq.s32.totalorder %s16, 0
    %p204 = por %p202, %p203
    %p205 = scmp.ne.s32.totalorder %s197, %s199
    %p206 = scmp.eq.s32.totalorder %s21, 1
    %p207 = por %p205, %p206
    %p208 = scmp.ne.s32.totalorder %s199, %s200
    %p209 = scmp.eq.s32.totalorder %s21, 0
    %p210 = por %p208, %p209
    %p211 = scmp.ne.s32.totalorder %s199, %s200
    %p212 = scmp.eq.s32.totalorder %s22, 1
    %p213 = por %p211, %p212
    %p215 = scmp.ne.s32.totalorder %s200, %s214
    %p216 = scmp.eq.s32.totalorder %s22, 0
    %p217 = por %p215, %p216
    %s218 = ssub.s32 %s16, %s23
    %p219 = scmp.eq.s32.totalorder %s218, 0
    %s221 = sadd.s32 %s220, 1
    %s222 = scalar_select %p219, %s220, %s221
    %p225 = pneg %p219
    %p226 = scmp.eq.s32.totalorder %s16, 1
    %p227 = por %p225, %p226
    %p228 = scmp.ne.s32.totalorder %s220, %s223
    %p229 = scmp.eq.s32.totalorder %s16, 0
    %p230 = por %p228, %p229
    %p231 = scmp.ne.s32.totalorder %s220, %s223
    %p232 = scmp.eq.s32.totalorder %s21, 1
    %p233 = por %p231, %p232
    %p234 = scmp.ne.s32.totalorder %s223, %s224
    %p235 = scmp.eq.s32.totalorder %s21, 0
    %p236 = por %p234, %p235
    %p237 = scmp.ne.s32.totalorder %s223, %s224
    %p238 = scmp.eq.s32.totalorder %s22, 1
    %p239 = por %p237, %p238
    %p241 = scmp.ne.s32.totalorder %s224, %s240
    %p242 = scmp.eq.s32.totalorder %s22, 0
    %p243 = por %p241, %p242
    %s244 = ssub.s32 %s16, %s23
    %p245 = scmp.eq.s32.totalorder %s244, 0
    %s247 = sadd.s32 %s246, 1
    %s248 = scalar_select %p245, %s246, %s247
    %p251 = pneg %p245
    %p252 = scmp.eq.s32.totalorder %s16, 1
    %p253 = por %p251, %p252
    %p254 = scmp.ne.s32.totalorder %s246, %s249
    %p255 = scmp.eq.s32.totalorder %s16, 0
    %p256 = por %p254, %p255
    %p257 = scmp.ne.s32.totalorder %s246, %s249
    %p258 = scmp.eq.s32.totalorder %s21, 1
    %p259 = por %p257, %p258
    %p260 = scmp.ne.s32.totalorder %s249, %s250
    %p261 = scmp.eq.s32.totalorder %s21, 0
    %p262 = por %p260, %p261
    %p263 = scmp.ne.s32.totalorder %s249, %s250
    %p264 = scmp.eq.s32.totalorder %s22, 1
    %p265 = por %p263, %p264
    %p267 = scmp.ne.s32.totalorder %s250, %s266
    %p268 = scmp.eq.s32.totalorder %s22, 0
    %p269 = por %p267, %p268
    %p270 = scmp.le.s32.totalorder 1, %s16
    %p271 = scmp.lt.s32.totalorder %s16, 3
    %p272 = pnand %p270, %p271
    %p273 = pneg %p272
    // Predicated region
    $region9: #{vae_forward.1} parent=5 // pred_check
      _
    $region10: #{vae_forward.1} parent=5 // pred_check_branch
      %275 = sbr.rel (%p272) target = $region12
    $region11: #{vae_forward.1} parent=5 // pred_region
      %s276 = ssub.s32 %s16, 1
      // Predicated region
      $region13: #{vae_forward.1} parent=11 // pred_check
        %p277 = pneg %p63
      $region14: #{vae_forward.1} parent=11 // pred_check_branch
        %279 = sbr.rel (%p277) target = $region16
      $region15: #{vae_forward.1} parent=11 // pred_region
        _
      $region16: #{vae_forward.1} parent=11 // pred_fallthru
        _
      // Predicated region
      $region17: #{vae_forward.1} parent=11 // pred_check
        %p280 = pneg %p84
      $region18: #{vae_forward.1} parent=11 // pred_check_branch
        %282 = sbr.rel (%p280) target = $region20
      $region19: #{vae_forward.1} parent=11 // pred_region
        _
      $region20: #{vae_forward.1} parent=11 // pred_fallthru
        _
      // Predicated region
      $region21: #{vae_forward.1} parent=11 // pred_check
        %p283 = pneg %p105
      $region22: #{vae_forward.1} parent=11 // pred_check_branch
        %285 = sbr.rel (%p283) target = $region24
      $region23: #{vae_forward.1} parent=11 // pred_region
        _
      $region24: #{vae_forward.1} parent=11 // pred_fallthru
        _
      // Predicated region
      $region25: #{vae_forward.1} parent=11 // pred_check
        %p286 = pneg %p126
      $region26: #{vae_forward.1} parent=11 // pred_check_branch
        %288 = sbr.rel (%p286) target = $region28
      $region27: #{vae_forward.1} parent=11 // pred_region
        _
      $region28: #{vae_forward.1} parent=11 // pred_fallthru
        _
      // Predicated region
      $region29: #{vae_forward.1} parent=11 // pred_check
        %p289 = pneg %p147
      $region30: #{vae_forward.1} parent=11 // pred_check_branch
        %291 = sbr.rel (%p289) target = $region32
      $region31: #{vae_forward.1} parent=11 // pred_region
        _
      $region32: #{vae_forward.1} parent=11 // pred_fallthru
        _
      // Predicated region
      $region33: #{vae_forward.1} parent=11 // pred_check
        %p292 = pneg %p168
      $region34: #{vae_forward.1} parent=11 // pred_check_branch
        %294 = sbr.rel (%p292) target = $region36
      $region35: #{vae_forward.1} parent=11 // pred_region
        _
      $region36: #{vae_forward.1} parent=11 // pred_fallthru
        _
      // Predicated region
      $region37: #{vae_forward.1} parent=11 // pred_check
        %p295 = pneg %p189
      $region38: #{vae_forward.1} parent=11 // pred_check_branch
        %297 = sbr.rel (%p295) target = $region40
      $region39: #{vae_forward.1} parent=11 // pred_region
        _
      $region40: #{vae_forward.1} parent=11 // pred_fallthru
        _
      // Predicated region
      $region41: #{vae_forward.1} parent=11 // pred_check
        %p298 = pneg %p210
      $region42: #{vae_forward.1} parent=11 // pred_check_branch
        %300 = sbr.rel (%p298) target = $region44
      $region43: #{vae_forward.1} parent=11 // pred_region
        _
      $region44: #{vae_forward.1} parent=11 // pred_fallthru
        _
    $region12: #{vae_forward.1} parent=5 // pred_fallthru
      _
    %p301 = scmp.lt.s32.totalorder %s16, 2
    // Predicated region
    $region45: #{vae_forward.1} parent=5 // pred_check
      %p302 = pneg %p301
    $region46: #{vae_forward.1} parent=5 // pred_check_branch
      %304 = sbr.rel (%p302) target = $region48
    $region47: #{vae_forward.1} parent=5 // pred_region
      // Predicated region
      $region49: #{vae_forward.1} parent=47 // pred_check
        %p305 = pneg %p36
      $region50: #{vae_forward.1} parent=47 // pred_check_branch
        %307 = sbr.rel (%p305) target = $region52
      $region51: #{vae_forward.1} parent=47 // pred_region
        %s308 = smul.u32 64, %s16
        %p309 = scmp.lt.s32.totalorder %s308, 127
        %s310 = scalar_select %p309, %s308, 127
        %s311 = smul.addr %s310, 8
        %s312 = scalar_lea.vmem %s0, %s311
        %s313 = smul.u32 64, %s16
      $region52: #{vae_forward.1} parent=47 // pred_fallthru
        _
      // Predicated region
      $region53: #{vae_forward.1} parent=47 // pred_check
        %p314 = pneg %p230
      $region54: #{vae_forward.1} parent=47 // pred_check_branch
        %316 = sbr.rel (%p314) target = $region56
      $region55: #{vae_forward.1} parent=47 // pred_region
        %s317 = smul.u32 64, %s16
        %p318 = scmp.lt.s32.totalorder %s317, 127
        %s319 = scalar_select %p318, %s317, 127
        %s320 = smul.addr %s319, 8
        %s321 = scalar_lea.vmem %s9, %s320
        %s322 = smul.u32 64, %s16
      $region56: #{vae_forward.1} parent=47 // pred_fallthru
        _
    $region48: #{vae_forward.1} parent=5 // pred_fallthru
      _
    %p323 = scmp.le.s32.totalorder 1, %s16
    %p324 = scmp.lt.s32.totalorder %s16, 3
    %p325 = pnand %p323, %p324
    %p326 = pneg %p325
    // Predicated region
    $region57: #{vae_forward.1} parent=5 // pred_check
      _
    $region58: #{vae_forward.1} parent=5 // pred_check_branch
      %328 = sbr.rel (%p325) target = $region60
    $region59: #{vae_forward.1} parent=5 // pred_region
      %s329 = ssub.s32 %s16, 1
      %s330 = smul.u32 64, %s21
      %p331 = scmp.lt.s32.totalorder %s330, 127
      %s332 = scalar_select %p331, %s330, 127
      %s333 = smul.addr %s332, 8
      %s334 = scalar_lea.vmem %s0, %s333
      %p335 = pneg %p42
      %p336 = pneg %p39
      %p337 = pneg %p63
      %p338 = pneg %p60
      %p339 = pneg %p84
      %p340 = pneg %p81
      %p341 = pneg %p105
      %p342 = pneg %p102
      %p343 = pneg %p126
      %p344 = pneg %p123
      %p345 = pneg %p147
      %p346 = pneg %p144
      %p347 = pneg %p168
      %p348 = pneg %p165
      %p349 = pneg %p189
      %p350 = pneg %p186
      %p351 = pneg %p210
      %p352 = pneg %p207
      %s353 = smul.u32 64, %s21
      %p354 = scmp.lt.s32.totalorder %s353, 127
      %s355 = scalar_select %p354, %s353, 127
      %s356 = smul.addr %s355, 8
      %s357 = scalar_lea.vmem %s9, %s356
      %p358 = pneg %p236
      %p359 = pneg %p233
      %p360 = pneg %p262
      %p361 = pneg %p259
      %s362 = smul.u32 64, %s21
      %p363 = scmp.lt.s32.totalorder %s362, 127
      %s364 = scalar_select %p363, %s362, 127
      %s365 = smul.addr %s364, 8
      %s366 = scalar_lea.vmem %s10, %s365
      %s367 = smul.u32 64, %s21
      %p368 = scmp.lt.s32.totalorder %s367, 127
      %s369 = scalar_select %p368, %s367, 127
      %s370 = smul.addr %s369, 8
      %s371 = scalar_lea.vmem %s0, %s370
      %s372 = smul.u32 64, %s21
      %s373 = smul.u32 64, %s21
      %p374 = scmp.lt.s32.totalorder %s373, 127
      %s375 = scalar_select %p374, %s373, 127
      %s376 = smul.addr %s375, 8
      %s377 = scalar_lea.vmem %s9, %s376
      %s378 = smul.u32 64, %s21
      %s379 = smul.u32 64, %s21
      %p380 = scmp.lt.s32.totalorder %s379, 127
      %s381 = scalar_select %p380, %s379, 127
      %s382 = smul.addr %s381, 8
      %s383 = scalar_lea.vmem %s10, %s382
      %s384 = smul.u32 64, %s21
      %v385 = vld [vmem:[%s371] sm:$0xff]
      %v386 = vld [vmem:[%s371 + $0x8] sm:$0xff]
      %v387 = vld [vmem:[%s371 + $0x10] sm:$0xff]
      %v388 = vld [vmem:[%s371 + $0x18] sm:$0xff]
      %v389 = vld [vmem:[%s371 + $0x20] sm:$0xff]
      %v390 = vld [vmem:[%s371 + $0x28] sm:$0xff]
      %v391 = vld [vmem:[%s371 + $0x30] sm:$0xff]
      %v392 = vld [vmem:[%s371 + $0x38] sm:$0xff]
      %v393 = vld [vmem:[%s371 + $0x40] sm:$0xff]
      %v394 = vld [vmem:[%s371 + $0x48] sm:$0xff]
      %v395 = vld [vmem:[%s371 + $0x50] sm:$0xff]
      %v396 = vld [vmem:[%s371 + $0x58] sm:$0xff]
      %v397 = vld [vmem:[%s371 + $0x60] sm:$0xff]
      %v398 = vld [vmem:[%s371 + $0x68] sm:$0xff]
      %v399 = vld [vmem:[%s371 + $0x70] sm:$0xff]
      %v400 = vld [vmem:[%s371 + $0x78] sm:$0xff]
      %v401 = vld [vmem:[%s371 + $0x80] sm:$0xff]
      %v402 = vld [vmem:[%s371 + $0x88] sm:$0xff]
      %v403 = vld [vmem:[%s371 + $0x90] sm:$0xff]
      %v404 = vld [vmem:[%s371 + $0x98] sm:$0xff]
      %v405 = vld [vmem:[%s371 + $0xa0] sm:$0xff]
      %v406 = vld [vmem:[%s371 + $0xa8] sm:$0xff]
      %v407 = vld [vmem:[%s371 + $0xb0] sm:$0xff]
      %v408 = vld [vmem:[%s371 + $0xb8] sm:$0xff]
      %v409 = vld [vmem:[%s371 + $0xc0] sm:$0xff]
      %v410 = vld [vmem:[%s371 + $0xc8] sm:$0xff]
      %v411 = vld [vmem:[%s371 + $0xd0] sm:$0xff]
      %v412 = vld [vmem:[%s371 + $0xd8] sm:$0xff]
      %v413 = vld [vmem:[%s371 + $0xe0] sm:$0xff]
      %v414 = vld [vmem:[%s371 + $0xe8] sm:$0xff]
      %v415 = vld [vmem:[%s371 + $0xf0] sm:$0xff]
      %v416 = vld [vmem:[%s371 + $0xf8] sm:$0xff]
      %v417 = vld [vmem:[%s371 + $0x100] sm:$0xff]
      %v418 = vld [vmem:[%s371 + $0x108] sm:$0xff]
      %v419 = vld [vmem:[%s371 + $0x110] sm:$0xff]
      %v420 = vld [vmem:[%s371 + $0x118] sm:$0xff]
      %v421 = vld [vmem:[%s371 + $0x120] sm:$0xff]
      %v422 = vld [vmem:[%s371 + $0x128] sm:$0xff]
      %v423 = vld [vmem:[%s371 + $0x130] sm:$0xff]
      %v424 = vld [vmem:[%s371 + $0x138] sm:$0xff]
      %v425 = vld [vmem:[%s371 + $0x140] sm:$0xff]
      %v426 = vld [vmem:[%s371 + $0x148] sm:$0xff]
      %v427 = vld [vmem:[%s371 + $0x150] sm:$0xff]
      %v428 = vld [vmem:[%s371 + $0x158] sm:$0xff]
      %v429 = vld [vmem:[%s371 + $0x160] sm:$0xff]
      %v430 = vld [vmem:[%s371 + $0x168] sm:$0xff]
      %v431 = vld [vmem:[%s371 + $0x170] sm:$0xff]
      %v432 = vld [vmem:[%s371 + $0x178] sm:$0xff]
      %v433 = vld [vmem:[%s371 + $0x180] sm:$0xff]
      %v434 = vld [vmem:[%s371 + $0x188] sm:$0xff]
      %v435 = vld [vmem:[%s371 + $0x190] sm:$0xff]
      %v436 = vld [vmem:[%s371 + $0x198] sm:$0xff]
      %v437 = vld [vmem:[%s371 + $0x1a0] sm:$0xff]
      %v438 = vld [vmem:[%s371 + $0x1a8] sm:$0xff]
      %v439 = vld [vmem:[%s371 + $0x1b0] sm:$0xff]
      %v440 = vld [vmem:[%s371 + $0x1b8] sm:$0xff]
      %v441 = vld [vmem:[%s371 + $0x1c0] sm:$0xff]
      %v442 = vld [vmem:[%s371 + $0x1c8] sm:$0xff]
      %v443 = vld [vmem:[%s371 + $0x1d0] sm:$0xff]
      %v444 = vld [vmem:[%s371 + $0x1d8] sm:$0xff]
      %v445 = vld [vmem:[%s371 + $0x1e0] sm:$0xff]
      %v446 = vld [vmem:[%s371 + $0x1e8] sm:$0xff]
      %v447 = vld [vmem:[%s371 + $0x1f0] sm:$0xff]
      %v448 = vld [vmem:[%s371 + $0x1f8] sm:$0xff]
      %v449 = vld [vmem:[%s1] sm:$0xff]
      %v450 = vld [vmem:[%s1 + $0x8] sm:$0xff]
      %v451 = vld [vmem:[%s1 + $0x10] sm:$0xff]
      %v452 = vld [vmem:[%s1 + $0x18] sm:$0xff]
      %v453 = vld [vmem:[%s1 + $0x20] sm:$0xff]
      %v454 = vld [vmem:[%s1 + $0x28] sm:$0xff]
      %v455 = vld [vmem:[%s1 + $0x30] sm:$0xff]
      %v456 = vld [vmem:[%s1 + $0x38] sm:$0xff]
      %v457 = vld [vmem:[%s2] sm:$0x1]
      %v459 = vlaneseq
      %v460 = vshrl.u32 %v459, 7
      %v461 = vsub.s32 0, %v460
      %v462 = vrot.slane %v457, %v461
      %vm464 = vcmask 523264
      %v466 = vsel %vm464, %v385, 0
      %v469 = vsel %vm464, %v386, 0
      %v472 = vsel %vm464, %v387, 0
      %v475 = vsel %vm464, %v388, 0
      %v478 = vsel %vm464, %v389, 0
      %v481 = vsel %vm464, %v390, 0
      %v484 = vsel %vm464, %v391, 0
      %v487 = vsel %vm464, %v392, 0
      %v490 = vsel %vm464, %v393, 0
      %v493 = vsel %vm464, %v394, 0
      %v496 = vsel %vm464, %v395, 0
      %v499 = vsel %vm464, %v396, 0
      %v502 = vsel %vm464, %v397, 0
      %v505 = vsel %vm464, %v398, 0
      %v508 = vsel %vm464, %v399, 0
      %v511 = vsel %vm464, %v400, 0
      %v514 = vsel %vm464, %v401, 0
      %v517 = vsel %vm464, %v402, 0
      %v520 = vsel %vm464, %v403, 0
      %v523 = vsel %vm464, %v404, 0
      %v526 = vsel %vm464, %v405, 0
      %v529 = vsel %vm464, %v406, 0
      %v532 = vsel %vm464, %v407, 0
      %v535 = vsel %vm464, %v408, 0
      %v538 = vsel %vm464, %v409, 0
      %v541 = vsel %vm464, %v410, 0
      %v544 = vsel %vm464, %v411, 0
      %v547 = vsel %vm464, %v412, 0
      %v550 = vsel %vm464, %v413, 0
      %v553 = vsel %vm464, %v414, 0
      %v556 = vsel %vm464, %v415, 0
      %v559 = vsel %vm464, %v416, 0
      %v562 = vsel %vm464, %v417, 0
      %v565 = vsel %vm464, %v418, 0
      %v568 = vsel %vm464, %v419, 0
      %v571 = vsel %vm464, %v420, 0
      %v574 = vsel %vm464, %v421, 0
      %v577 = vsel %vm464, %v422, 0
      %v580 = vsel %vm464, %v423, 0
      %v583 = vsel %vm464, %v424, 0
      %v586 = vsel %vm464, %v425, 0
      %v589 = vsel %vm464, %v426, 0
      %v592 = vsel %vm464, %v427, 0
      %v595 = vsel %vm464, %v428, 0
      %v598 = vsel %vm464, %v429, 0
      %v601 = vsel %vm464, %v430, 0
      %v604 = vsel %vm464, %v431, 0
      %v607 = vsel %vm464, %v432, 0
      %v610 = vsel %vm464, %v433, 0
      %v613 = vsel %vm464, %v434, 0
      %v616 = vsel %vm464, %v435, 0
      %v619 = vsel %vm464, %v436, 0
      %v622 = vsel %vm464, %v437, 0
      %v625 = vsel %vm464, %v438, 0
      %v628 = vsel %vm464, %v439, 0
      %v631 = vsel %vm464, %v440, 0
      %v634 = vsel %vm464, %v441, 0
      %v637 = vsel %vm464, %v442, 0
      %v640 = vsel %vm464, %v443, 0
      %v643 = vsel %vm464, %v444, 0
      %v646 = vsel %vm464, %v445, 0
      %v649 = vsel %vm464, %v446, 0
      %v652 = vsel %vm464, %v447, 0
      %v655 = vsel %vm464, %v448, 0
      %657 = vmatprep.subr.mxu0 0.0
      %658 = vmatpush1.msra.mxu0 %v449
      %659 = vmatprep.subr.mxu0 0.0
      %660 = vmatpush1.msra.mxu0 %v450
      %661 = vmatprep.subr.mxu0 0.0
      %662 = vmatpush1.msra.mxu0 %v451
      %663 = vmatprep.subr.mxu0 0.0
      %664 = vmatpush1.msra.mxu0 %v452
      %665 = vmatprep.subr.mxu0 0.0
      %666 = vmatpush1.msra.mxu0 %v453
      %667 = vmatprep.subr.mxu0 0.0
      %668 = vmatpush1.msra.mxu0 %v454
      %669 = vmatprep.subr.mxu0 0.0
      %670 = vmatpush1.msra.mxu0 %v455
      %671 = vmatprep.subr.mxu0 0.0
      %672 = vmatpush1.msra.mxu0 %v456
      %673 = vmatprep.subr.mxu0 0.0
      %674 = vmatpush1.msra.mxu0 0.0
      %675 = vmatprep.subr.mxu0 0.0
      %676 = vmatpush1.msra.mxu0 0.0
      %677 = vmatprep.subr.mxu0 0.0
      %678 = vmatpush1.msra.mxu0 0.0
      %679 = vmatprep.subr.mxu0 0.0
      %680 = vmatpush1.msra.mxu0 0.0
      %681 = vmatprep.subr.mxu0 0.0
      %682 = vmatpush1.msra.mxu0 0.0
      %683 = vmatprep.subr.mxu0 0.0
      %684 = vmatpush1.msra.mxu0 0.0
      %685 = vmatprep.subr.mxu0 0.0
      %686 = vmatpush1.msra.mxu0 0.0
      %687 = vmatprep.subr.mxu0 0.0
      %688 = vmatpush1.msra.mxu0 0.0
      %689 = vmatprep.subr.mxu0 0.0
      %690 = vmatpush1.msra.mxu0 0.0
      %691 = vmatprep.subr.mxu0 0.0
      %692 = vmatpush1.msra.mxu0 0.0
      %693 = vmatprep.subr.mxu0 0.0
      %694 = vmatpush1.msra.mxu0 0.0
      %695 = vmatprep.subr.mxu0 0.0
      %696 = vmatpush1.msra.mxu0 0.0
      %697 = vmatprep.subr.mxu0 0.0
      %698 = vmatpush1.msra.mxu0 0.0
      %699 = vmatprep.subr.mxu0 0.0
      %700 = vmatpush1.msra.mxu0 0.0
      %701 = vmatprep.subr.mxu0 0.0
      %702 = vmatpush1.msra.mxu0 0.0
      %703 = vmatprep.subr.mxu0 0.0
      %704 = vmatpush1.msra.mxu0 0.0
      %705 = vmatprep.subr.mxu0 0.0
      %706 = vmatpush1.msra.mxu0 0.0
      %707 = vmatprep.subr.mxu0 0.0
      %708 = vmatpush1.msra.mxu0 0.0
      %709 = vmatprep.subr.mxu0 0.0
      %710 = vmatpush1.msra.mxu0 0.0
      %711 = vmatprep.subr.mxu0 0.0
      %712 = vmatpush1.msra.mxu0 0.0
      %713 = vmatprep.subr.mxu0 0.0
      %714 = vmatpush1.msra.mxu0 0.0
      %715 = vmatprep.subr.mxu0 0.0
      %716 = vmatpush1.msra.mxu0 0.0
      %717 = vmatprep.subr.mxu0 0.0
      %718 = vmatpush1.msra.mxu0 0.0
      %719 = vmatprep.subr.mxu0 0.0
      %720 = vmatpush1.msra.mxu0 0.0
      %721 = vmatprep.mubr.f32.mxu0 0.0
      %722 = vmatmul.mubr.f32.gmra.mrb[0].mxu0 %v466
      %v723 = vpop.f32.mrb[0].mxu0
      %v724 = vadd.f32 %v462, %v723
      %v725 = vpop.f32.mrb[0].mxu0
      %726 = vmatprep.mubr.f32.mxu0 0.0
      %727 = vmatmul.mubr.f32.gmra.mrb[0].mxu0 %v469
      %v728 = vpop.f32.mrb[0].mxu0
      %v729 = vadd.f32 %v462, %v728
      %v730 = vpop.f32.mrb[0].mxu0
      %731 = vmatprep.mubr.f32.mxu0 0.0
      %732 = vmatmul.mubr.f32.gmra.mrb[0].mxu0 %v472
      %v733 = vpop.f32.mrb[0].mxu0
      %v734 = vadd.f32 %v462, %v733
      %v735 = vpop.f32.mrb[0].mxu0
      %736 = vmatprep.mubr.f32.mxu0 0.0
      %737 = vmatmul.mubr.f32.gmra.mrb[0].mxu0 %v475
      %v738 = vpop.f32.mrb[0].mxu0
      %v739 = vadd.f32 %v462, %v738
      %v740 = vpop.f32.mrb[0].mxu0
      %741 = vmatprep.mubr.f32.mxu0 0.0
      %742 = vmatmul.mubr.f32.gmra.mrb[0].mxu0 %v478
      %v743 = vpop.f32.mrb[0].mxu0
      %v744 = vadd.f32 %v462, %v743
      %v745 = vpop.f32.mrb[0].mxu0
      %746 = vmatprep.mubr.f32.mxu0 0.0
      %747 = vmatmul.mubr.f32.gmra.mrb[0].mxu0 %v481
      %v748 = vpop.f32.mrb[0].mxu0
      %v749 = vadd.f32 %v462, %v748
      %v750 = vpop.f32.mrb[0].mxu0
      %751 = vmatprep.mubr.f32.mxu0 0.0
      %752 = vmatmul.mubr.f32.gmra.mrb[0].mxu0 %v484
      %v753 = vpop.f32.mrb[0].mxu0
      %v754 = vadd.f32 %v462, %v753
      %v755 = vpop.f32.mrb[0].mxu0
      %756 = vmatprep.mubr.f32.mxu0 0.0
      %757 = vmatmul.mubr.f32.gmra.mrb[0].mxu0 %v487
      %v758 = vpop.f32.mrb[0].mxu0
      %v759 = vadd.f32 %v462, %v758
      %v760 = vpop.f32.mrb[0].mxu0
      %761 = vmatprep.mubr.f32.mxu0 0.0
      %762 = vmatmul.mubr.f32.gmra.mrb[0].mxu0 %v490
      %v763 = vpop.f32.mrb[0].mxu0
      %v764 = vadd.f32 %v462, %v763
      %v765 = vpop.f32.mrb[0].mxu0
      %766 = vmatprep.mubr.f32.mxu0 0.0
      %767 = vmatmul.mubr.f32.gmra.mrb[0].mxu0 %v493
      %v768 = vpop.f32.mrb[0].mxu0
      %v769 = vadd.f32 %v462, %v768
      %v770 = vpop.f32.mrb[0].mxu0
      %771 = vmatprep.mubr.f32.mxu0 0.0
      %772 = vmatmul.mubr.f32.gmra.mrb[0].mxu0 %v496
      %v773 = vpop.f32.mrb[0].mxu0
      %v774 = vadd.f32 %v462, %v773
      %v775 = vpop.f32.mrb[0].mxu0
      %776 = vmatprep.mubr.f32.mxu0 0.0
      %777 = vmatmul.mubr.f32.gmra.mrb[0].mxu0 %v499
      %v778 = vpop.f32.mrb[0].mxu0
      %v779 = vadd.f32 %v462, %v778
      %v780 = vpop.f32.mrb[0].mxu0
      %781 = vmatprep.mubr.f32.mxu0 0.0
      %782 = vmatmul.mubr.f32.gmra.mrb[0].mxu0 %v502
      %v783 = vpop.f32.mrb[0].mxu0
      %v784 = vadd.f32 %v462, %v783
      %v785 = vpop.f32.mrb[0].mxu0
      %786 = vmatprep.mubr.f32.mxu0 0.0
      %787 = vmatmul.mubr.f32.gmra.mrb[0].mxu0 %v505
      %v788 = vpop.f32.mrb[0].mxu0
      %v789 = vadd.f32 %v462, %v788
      %v790 = vpop.f32.mrb[0].mxu0
      %791 = vmatprep.mubr.f32.mxu0 0.0
      %792 = vmatmul.mubr.f32.gmra.mrb[0].mxu0 %v508
      %v793 = vpop.f32.mrb[0].mxu0
      %v794 = vadd.f32 %v462, %v793
      %v795 = vpop.f32.mrb[0].mxu0
      %796 = vmatprep.mubr.f32.mxu0 0.0
      %797 = vmatmul.mubr.f32.gmra.mrb[0].mxu0 %v511
      %v798 = vpop.f32.mrb[0].mxu0
      %v799 = vadd.f32 %v462, %v798
      %v800 = vpop.f32.mrb[0].mxu0
      %801 = vmatprep.mubr.f32.mxu0 0.0
      %802 = vmatmul.mubr.f32.gmra.mrb[0].mxu0 %v514
      %v803 = vpop.f32.mrb[0].mxu0
      %v804 = vadd.f32 %v462, %v803
      %v805 = vpop.f32.mrb[0].mxu0
      %806 = vmatprep.mubr.f32.mxu0 0.0
      %807 = vmatmul.mubr.f32.gmra.mrb[0].mxu0 %v517
      %v808 = vpop.f32.mrb[0].mxu0
      %v809 = vadd.f32 %v462, %v808
      %v810 = vpop.f32.mrb[0].mxu0
      %811 = vmatprep.mubr.f32.mxu0 0.0
      %812 = vmatmul.mubr.f32.gmra.mrb[0].mxu0 %v520
      %v813 = vpop.f32.mrb[0].mxu0
      %v814 = vadd.f32 %v462, %v813
      %v815 = vpop.f32.mrb[0].mxu0
      %816 = vmatprep.mubr.f32.mxu0 0.0
      %817 = vmatmul.mubr.f32.gmra.mrb[0].mxu0 %v523
      %v818 = vpop.f32.mrb[0].mxu0
      %v819 = vadd.f32 %v462, %v818
      %v820 = vpop.f32.mrb[0].mxu0
      %821 = vmatprep.mubr.f32.mxu0 0.0
      %822 = vmatmul.mubr.f32.gmra.mrb[0].mxu0 %v526
      %v823 = vpop.f32.mrb[0].mxu0
      %v824 = vadd.f32 %v462, %v823
      %v825 = vpop.f32.mrb[0].mxu0
      %826 = vmatprep.mubr.f32.mxu0 0.0
      %827 = vmatmul.mubr.f32.gmra.mrb[0].mxu0 %v529
      %v828 = vpop.f32.mrb[0].mxu0
      %v829 = vadd.f32 %v462, %v828
      %v830 = vpop.f32.mrb[0].mxu0
      %831 = vmatprep.mubr.f32.mxu0 0.0
      %832 = vmatmul.mubr.f32.gmra.mrb[0].mxu0 %v532
      %v833 = vpop.f32.mrb[0].mxu0
      %v834 = vadd.f32 %v462, %v833
      %v835 = vpop.f32.mrb[0].mxu0
      %836 = vmatprep.mubr.f32.mxu0 0.0
      %837 = vmatmul.mubr.f32.gmra.mrb[0].mxu0 %v535
      %v838 = vpop.f32.mrb[0].mxu0
      %v839 = vadd.f32 %v462, %v838
      %v840 = vpop.f32.mrb[0].mxu0
      %841 = vmatprep.mubr.f32.mxu0 0.0
      %842 = vmatmul.mubr.f32.gmra.mrb[0].mxu0 %v538
      %v843 = vpop.f32.mrb[0].mxu0
      %v844 = vadd.f32 %v462, %v843
      %v845 = vpop.f32.mrb[0].mxu0
      %846 = vmatprep.mubr.f32.mxu0 0.0
      %847 = vmatmul.mubr.f32.gmra.mrb[0].mxu0 %v541
      %v848 = vpop.f32.mrb[0].mxu0
      %v849 = vadd.f32 %v462, %v848
      %v850 = vpop.f32.mrb[0].mxu0
      %851 = vmatprep.mubr.f32.mxu0 0.0
      %852 = vmatmul.mubr.f32.gmra.mrb[0].mxu0 %v544
      %v853 = vpop.f32.mrb[0].mxu0
      %v854 = vadd.f32 %v462, %v853
      %v855 = vpop.f32.mrb[0].mxu0
      %856 = vmatprep.mubr.f32.mxu0 0.0
      %857 = vmatmul.mubr.f32.gmra.mrb[0].mxu0 %v547
      %v858 = vpop.f32.mrb[0].mxu0
      %v859 = vadd.f32 %v462, %v858
      %v860 = vpop.f32.mrb[0].mxu0
      %861 = vmatprep.mubr.f32.mxu0 0.0
      %862 = vmatmul.mubr.f32.gmra.mrb[0].mxu0 %v550
      %v863 = vpop.f32.mrb[0].mxu0
      %v864 = vadd.f32 %v462, %v863
      %v865 = vpop.f32.mrb[0].mxu0
      %866 = vmatprep.mubr.f32.mxu0 0.0
      %867 = vmatmul.mubr.f32.gmra.mrb[0].mxu0 %v553
      %v868 = vpop.f32.mrb[0].mxu0
      %v869 = vadd.f32 %v462, %v868
      %v870 = vpop.f32.mrb[0].mxu0
      %871 = vmatprep.mubr.f32.mxu0 0.0
      %872 = vmatmul.mubr.f32.gmra.mrb[0].mxu0 %v556
      %v873 = vpop.f32.mrb[0].mxu0
      %v874 = vadd.f32 %v462, %v873
      %v875 = vpop.f32.mrb[0].mxu0
      %876 = vmatprep.mubr.f32.mxu0 0.0
      %877 = vmatmul.mubr.f32.gmra.mrb[0].mxu0 %v559
      %v878 = vpop.f32.mrb[0].mxu0
      %v879 = vadd.f32 %v462, %v878
      %v880 = vpop.f32.mrb[0].mxu0
      %881 = vmatprep.mubr.f32.mxu0 0.0
      %882 = vmatmul.mubr.f32.gmra.mrb[0].mxu0 %v562
      %v883 = vpop.f32.mrb[0].mxu0
      %v884 = vadd.f32 %v462, %v883
      %v885 = vpop.f32.mrb[0].mxu0
      %886 = vmatprep.mubr.f32.mxu0 0.0
      %887 = vmatmul.mubr.f32.gmra.mrb[0].mxu0 %v565
      %v888 = vpop.f32.mrb[0].mxu0
      %v889 = vadd.f32 %v462, %v888
      %v890 = vpop.f32.mrb[0].mxu0
      %891 = vmatprep.mubr.f32.mxu0 0.0
      %892 = vmatmul.mubr.f32.gmra.mrb[0].mxu0 %v568
      %v893 = vpop.f32.mrb[0].mxu0
      %v894 = vadd.f32 %v462, %v893
      %v895 = vpop.f32.mrb[0].mxu0
      %896 = vmatprep.mubr.f32.mxu0 0.0
      %897 = vmatmul.mubr.f32.gmra.mrb[0].mxu0 %v571
      %v898 = vpop.f32.mrb[0].mxu0
      %v899 = vadd.f32 %v462, %v898
      %v900 = vpop.f32.mrb[0].mxu0
      %901 = vmatprep.mubr.f32.mxu0 0.0
      %902 = vmatmul.mubr.f32.gmra.mrb[0].mxu0 %v574
      %v903 = vpop.f32.mrb[0].mxu0
      %v904 = vadd.f32 %v462, %v903
      %v905 = vpop.f32.mrb[0].mxu0
      %906 = vmatprep.mubr.f32.mxu0 0.0
      %907 = vmatmul.mubr.f32.gmra.mrb[0].mxu0 %v577
      %v908 = vpop.f32.mrb[0].mxu0
      %v909 = vadd.f32 %v462, %v908
      %v910 = vpop.f32.mrb[0].mxu0
      %911 = vmatprep.mubr.f32.mxu0 0.0
      %912 = vmatmul.mubr.f32.gmra.mrb[0].mxu0 %v580
      %v913 = vpop.f32.mrb[0].mxu0
      %v914 = vadd.f32 %v462, %v913
      %v915 = vpop.f32.mrb[0].mxu0
      %916 = vmatprep.mubr.f32.mxu0 0.0
      %917 = vmatmul.mubr.f32.gmra.mrb[0].mxu0 %v583
      %v918 = vpop.f32.mrb[0].mxu0
      %v919 = vadd.f32 %v462, %v918
      %v920 = vpop.f32.mrb[0].mxu0
      %921 = vmatprep.mubr.f32.mxu0 0.0
      %922 = vmatmul.mubr.f32.gmra.mrb[0].mxu0 %v586
      %v923 = vpop.f32.mrb[0].mxu0
      %v924 = vadd.f32 %v462, %v923
      %v925 = vpop.f32.mrb[0].mxu0
      %926 = vmatprep.mubr.f32.mxu0 0.0
      %927 = vmatmul.mubr.f32.gmra.mrb[0].mxu0 %v589
      %v928 = vpop.f32.mrb[0].mxu0
      %v929 = vadd.f32 %v462, %v928
      %v930 = vpop.f32.mrb[0].mxu0
      %931 = vmatprep.mubr.f32.mxu0 0.0
      %932 = vmatmul.mubr.f32.gmra.mrb[0].mxu0 %v592
      %v933 = vpop.f32.mrb[0].mxu0
      %v934 = vadd.f32 %v462, %v933
      %v935 = vpop.f32.mrb[0].mxu0
      %936 = vmatprep.mubr.f32.mxu0 0.0
      %937 = vmatmul.mubr.f32.gmra.mrb[0].mxu0 %v595
      %v938 = vpop.f32.mrb[0].mxu0
      %v939 = vadd.f32 %v462, %v938
      %v940 = vpop.f32.mrb[0].mxu0
      %941 = vmatprep.mubr.f32.mxu0 0.0
      %942 = vmatmul.mubr.f32.gmra.mrb[0].mxu0 %v598
      %v943 = vpop.f32.mrb[0].mxu0
      %v944 = vadd.f32 %v462, %v943
      %v945 = vpop.f32.mrb[0].mxu0
      %946 = vmatprep.mubr.f32.mxu0 0.0
      %947 = vmatmul.mubr.f32.gmra.mrb[0].mxu0 %v601
      %v948 = vpop.f32.mrb[0].mxu0
      %v949 = vadd.f32 %v462, %v948
      %v950 = vpop.f32.mrb[0].mxu0
      %951 = vmatprep.mubr.f32.mxu0 0.0
      %952 = vmatmul.mubr.f32.gmra.mrb[0].mxu0 %v604
      %v953 = vpop.f32.mrb[0].mxu0
      %v954 = vadd.f32 %v462, %v953
      %v955 = vpop.f32.mrb[0].mxu0
      %956 = vmatprep.mubr.f32.mxu0 0.0
      %957 = vmatmul.mubr.f32.gmra.mrb[0].mxu0 %v607
      %v958 = vpop.f32.mrb[0].mxu0
      %v959 = vadd.f32 %v462, %v958
      %v960 = vpop.f32.mrb[0].mxu0
      %961 = vmatprep.mubr.f32.mxu0 0.0
      %962 = vmatmul.mubr.f32.gmra.mrb[0].mxu0 %v610
      %v963 = vpop.f32.mrb[0].mxu0
      %v964 = vadd.f32 %v462, %v963
      %v965 = vpop.f32.mrb[0].mxu0
      %966 = vmatprep.mubr.f32.mxu0 0.0
      %967 = vmatmul.mubr.f32.gmra.mrb[0].mxu0 %v613
      %v968 = vpop.f32.mrb[0].mxu0
      %v969 = vadd.f32 %v462, %v968
      %v970 = vpop.f32.mrb[0].mxu0
      %971 = vmatprep.mubr.f32.mxu0 0.0
      %972 = vmatmul.mubr.f32.gmra.mrb[0].mxu0 %v616
      %v973 = vpop.f32.mrb[0].mxu0
      %v974 = vadd.f32 %v462, %v973
      %v975 = vpop.f32.mrb[0].mxu0
      %976 = vmatprep.mubr.f32.mxu0 0.0
      %977 = vmatmul.mubr.f32.gmra.mrb[0].mxu0 %v619
      %v978 = vpop.f32.mrb[0].mxu0
      %v979 = vadd.f32 %v462, %v978
      %v980 = vpop.f32.mrb[0].mxu0
      %981 = vmatprep.mubr.f32.mxu0 0.0
      %982 = vmatmul.mubr.f32.gmra.mrb[0].mxu0 %v622
      %v983 = vpop.f32.mrb[0].mxu0
      %v984 = vadd.f32 %v462, %v983
      %v985 = vpop.f32.mrb[0].mxu0
      %986 = vmatprep.mubr.f32.mxu0 0.0
      %987 = vmatmul.mubr.f32.gmra.mrb[0].mxu0 %v625
      %v988 = vpop.f32.mrb[0].mxu0
      %v989 = vadd.f32 %v462, %v988
      %v990 = vpop.f32.mrb[0].mxu0
      %991 = vmatprep.mubr.f32.mxu0 0.0
      %992 = vmatmul.mubr.f32.gmra.mrb[0].mxu0 %v628
      %v993 = vpop.f32.mrb[0].mxu0
      %v994 = vadd.f32 %v462, %v993
      %v995 = vpop.f32.mrb[0].mxu0
      %996 = vmatprep.mubr.f32.mxu0 0.0
      %997 = vmatmul.mubr.f32.gmra.mrb[0].mxu0 %v631
      %v998 = vpop.f32.mrb[0].mxu0
      %v999 = vadd.f32 %v462, %v998
      %v1000 = vpop.f32.mrb[0].mxu0
      %1001 = vmatprep.mubr.f32.mxu0 0.0
      %1002 = vmatmul.mubr.f32.gmra.mrb[0].mxu0 %v634
      %v1003 = vpop.f32.mrb[0].mxu0
      %v1004 = vadd.f32 %v462, %v1003
      %v1005 = vpop.f32.mrb[0].mxu0
      %1006 = vmatprep.mubr.f32.mxu0 0.0
      %1007 = vmatmul.mubr.f32.gmra.mrb[0].mxu0 %v637
      %v1008 = vpop.f32.mrb[0].mxu0
      %v1009 = vadd.f32 %v462, %v1008
      %v1010 = vpop.f32.mrb[0].mxu0
      %1011 = vmatprep.mubr.f32.mxu0 0.0
      %1012 = vmatmul.mubr.f32.gmra.mrb[0].mxu0 %v640
      %v1013 = vpop.f32.mrb[0].mxu0
      %v1014 = vadd.f32 %v462, %v1013
      %v1015 = vpop.f32.mrb[0].mxu0
      %1016 = vmatprep.mubr.f32.mxu0 0.0
      %1017 = vmatmul.mubr.f32.gmra.mrb[0].mxu0 %v643
      %v1018 = vpop.f32.mrb[0].mxu0
      %v1019 = vadd.f32 %v462, %v1018
      %v1020 = vpop.f32.mrb[0].mxu0
      %1021 = vmatprep.mubr.f32.mxu0 0.0
      %1022 = vmatmul.mubr.f32.gmra.mrb[0].mxu0 %v646
      %v1023 = vpop.f32.mrb[0].mxu0
      %v1024 = vadd.f32 %v462, %v1023
      %v1025 = vpop.f32.mrb[0].mxu0
      %1026 = vmatprep.mubr.f32.mxu0 0.0
      %1027 = vmatmul.mubr.f32.gmra.mrb[0].mxu0 %v649
      %v1028 = vpop.f32.mrb[0].mxu0
      %v1029 = vadd.f32 %v462, %v1028
      %v1030 = vpop.f32.mrb[0].mxu0
      %1031 = vmatprep.mubr.f32.mxu0 0.0
      %1032 = vmatmul.mubr.f32.gmra.mrb[0].mxu0 %v652
      %v1033 = vpop.f32.mrb[0].mxu0
      %v1034 = vadd.f32 %v462, %v1033
      %v1035 = vpop.f32.mrb[0].mxu0
      %1036 = vmatprep.mubr.f32.mxu0 0.0
      %1037 = vmatmul.mubr.f32.gmra.mrb[0].mxu0 %v655
      %v1038 = vpop.f32.mrb[0].mxu0
      %v1039 = vadd.f32 %v462, %v1038
      %v1040 = vpop.f32.mrb[0].mxu0
      %1041 = vdwg.mxu0
      %v1042 = vmax.f32 %v724, 0.0
      %v1043 = vmax.f32 %v729, 0.0
      %v1044 = vmax.f32 %v734, 0.0
      %v1045 = vmax.f32 %v739, 0.0
      %v1046 = vmax.f32 %v744, 0.0
      %v1047 = vmax.f32 %v749, 0.0
      %v1048 = vmax.f32 %v754, 0.0
      %v1049 = vmax.f32 %v759, 0.0
      %v1050 = vmax.f32 %v764, 0.0
      %v1051 = vmax.f32 %v769, 0.0
      %v1052 = vmax.f32 %v774, 0.0
      %v1053 = vmax.f32 %v779, 0.0
      %v1054 = vmax.f32 %v784, 0.0
      %v1055 = vmax.f32 %v789, 0.0
      %v1056 = vmax.f32 %v794, 0.0
      %v1057 = vmax.f32 %v799, 0.0
      %v1058 = vmax.f32 %v804, 0.0
      %v1059 = vmax.f32 %v809, 0.0
      %v1060 = vmax.f32 %v814, 0.0
      %v1061 = vmax.f32 %v819, 0.0
      %v1062 = vmax.f32 %v824, 0.0
      %v1063 = vmax.f32 %v829, 0.0
      %v1064 = vmax.f32 %v834, 0.0
      %v1065 = vmax.f32 %v839, 0.0
      %v1066 = vmax.f32 %v844, 0.0
      %v1067 = vmax.f32 %v849, 0.0
      %v1068 = vmax.f32 %v854, 0.0
      %v1069 = vmax.f32 %v859, 0.0
      %v1070 = vmax.f32 %v864, 0.0
      %v1071 = vmax.f32 %v869, 0.0
      %v1072 = vmax.f32 %v874, 0.0
      %v1073 = vmax.f32 %v879, 0.0
      %v1074 = vmax.f32 %v884, 0.0
      %v1075 = vmax.f32 %v889, 0.0
      %v1076 = vmax.f32 %v894, 0.0
      %v1077 = vmax.f32 %v899, 0.0
      %v1078 = vmax.f32 %v904, 0.0
      %v1079 = vmax.f32 %v909, 0.0
      %v1080 = vmax.f32 %v914, 0.0
      %v1081 = vmax.f32 %v919, 0.0
      %v1082 = vmax.f32 %v924, 0.0
      %v1083 = vmax.f32 %v929, 0.0
      %v1084 = vmax.f32 %v934, 0.0
      %v1085 = vmax.f32 %v939, 0.0
      %v1086 = vmax.f32 %v944, 0.0
      %v1087 = vmax.f32 %v949, 0.0
      %v1088 = vmax.f32 %v954, 0.0
      %v1089 = vmax.f32 %v959, 0.0
      %v1090 = vmax.f32 %v964, 0.0
      %v1091 = vmax.f32 %v969, 0.0
      %v1092 = vmax.f32 %v974, 0.0
      %v1093 = vmax.f32 %v979, 0.0
      %v1094 = vmax.f32 %v984, 0.0
      %v1095 = vmax.f32 %v989, 0.0
      %v1096 = vmax.f32 %v994, 0.0
      %v1097 = vmax.f32 %v999, 0.0
      %v1098 = vmax.f32 %v1004, 0.0
      %v1099 = vmax.f32 %v1009, 0.0
      %v1100 = vmax.f32 %v1014, 0.0
      %v1101 = vmax.f32 %v1019, 0.0
      %v1102 = vmax.f32 %v1024, 0.0
      %v1103 = vmax.f32 %v1029, 0.0
      %v1104 = vmax.f32 %v1034, 0.0
      %v1105 = vmax.f32 %v1039, 0.0
      %v1106 = vld [vmem:[%s3] sm:$0xff]
      %v1107 = vld [vmem:[%s3 + $0x8] sm:$0xff]
      %v1108 = vld [vmem:[%s3 + $0x10] sm:$0xff]
      %v1109 = vld [vmem:[%s3 + $0x18] sm:$0xff]
      %v1110 = vld [vmem:[%s4] sm:$0x1]
      %v1112 = vlaneseq
      %v1113 = vshrl.u32 %v1112, 7
      %v1114 = vsub.s32 0, %v1113
      %v1115 = vrot.slane %v1110, %v1114
      %vm1117 = vcmask 261120
      %v1119 = vsel %vm1117, %v1042, 0
      %v1122 = vsel %vm1117, %v1043, 0
      %v1125 = vsel %vm1117, %v1044, 0
      %v1128 = vsel %vm1117, %v1045, 0
      %v1131 = vsel %vm1117, %v1046, 0
      %v1134 = vsel %vm1117, %v1047, 0
      %v1137 = vsel %vm1117, %v1048, 0
      %v1140 = vsel %vm1117, %v1049, 0
      %v1143 = vsel %vm1117, %v1050, 0
      %v1146 = vsel %vm1117, %v1051, 0
      %v1149 = vsel %vm1117, %v1052, 0
      %v1152 = vsel %vm1117, %v1053, 0
      %v1155 = vsel %vm1117, %v1054, 0
      %v1158 = vsel %vm1117, %v1055, 0
      %v1161 = vsel %vm1117, %v1056, 0
      %v1164 = vsel %vm1117, %v1057, 0
      %v1167 = vsel %vm1117, %v1058, 0
      %v1170 = vsel %vm1117, %v1059, 0
      %v1173 = vsel %vm1117, %v1060, 0
      %v1176 = vsel %vm1117, %v1061, 0
      %v1179 = vsel %vm1117, %v1062, 0
      %v1182 = vsel %vm1117, %v1063, 0
      %v1185 = vsel %vm1117, %v1064, 0
      %v1188 = vsel %vm1117, %v1065, 0
      %v1191 = vsel %vm1117, %v1066, 0
      %v1194 = vsel %vm1117, %v1067, 0
      %v1197 = vsel %vm1117, %v1068, 0
      %v1200 = vsel %vm1117, %v1069, 0
      %v1203 = vsel %vm1117, %v1070, 0
      %v1206 = vsel %vm1117, %v1071, 0
      %v1209 = vsel %vm1117, %v1072, 0
      %v1212 = vsel %vm1117, %v1073, 0
      %v1215 = vsel %vm1117, %v1074, 0
      %v1218 = vsel %vm1117, %v1075, 0
      %v1221 = vsel %vm1117, %v1076, 0
      %v1224 = vsel %vm1117, %v1077, 0
      %v1227 = vsel %vm1117, %v1078, 0
      %v1230 = vsel %vm1117, %v1079, 0
      %v1233 = vsel %vm1117, %v1080, 0
      %v1236 = vsel %vm1117, %v1081, 0
      %v1239 = vsel %vm1117, %v1082, 0
      %v1242 = vsel %vm1117, %v1083, 0
      %v1245 = vsel %vm1117, %v1084, 0
      %v1248 = vsel %vm1117, %v1085, 0
      %v1251 = vsel %vm1117, %v1086, 0
      %v1254 = vsel %vm1117, %v1087, 0
      %v1257 = vsel %vm1117, %v1088, 0
      %v1260 = vsel %vm1117, %v1089, 0
      %v1263 = vsel %vm1117, %v1090, 0
      %v1266 = vsel %vm1117, %v1091, 0
      %v1269 = vsel %vm1117, %v1092, 0
      %v1272 = vsel %vm1117, %v1093, 0
      %v1275 = vsel %vm1117, %v1094, 0
      %v1278 = vsel %vm1117, %v1095, 0
      %v1281 = vsel %vm1117, %v1096, 0
      %v1284 = vsel %vm1117, %v1097, 0
      %v1287 = vsel %vm1117, %v1098, 0
      %v1290 = vsel %vm1117, %v1099, 0
      %v1293 = vsel %vm1117, %v1100, 0
      %v1296 = vsel %vm1117, %v1101, 0
      %v1299 = vsel %vm1117, %v1102, 0
      %v1302 = vsel %vm1117, %v1103, 0
      %v1305 = vsel %vm1117, %v1104, 0
      %v1308 = vsel %vm1117, %v1105, 0
      %1310 = vmatprep.subr.mxu0 0.0
      %1311 = vmatpush1.msra.mxu0 %v1106
      %1312 = vmatprep.subr.mxu0 0.0
      %1313 = vmatpush1.msra.mxu0 %v1107
      %1314 = vmatprep.subr.mxu0 0.0
      %1315 = vmatpush1.msra.mxu0 %v1108
      %1316 = vmatprep.subr.mxu0 0.0
      %1317 = vmatpush1.msra.mxu0 %v1109
      %1318 = vmatprep.subr.mxu0 0.0
      %1319 = vmatpush1.msra.mxu0 0.0
      %1320 = vmatprep.subr.mxu0 0.0
      %1321 = vmatpush1.msra.mxu0 0.0
      %1322 = vmatprep.subr.mxu0 0.0
      %1323 = vmatpush1.msra.mxu0 0.0
      %1324 = vmatprep.subr.mxu0 0.0
      %1325 = vmatpush1.msra.mxu0 0.0
      %1326 = vmatprep.subr.mxu0 0.0
      %1327 = vmatpush1.msra.mxu0 0.0
      %1328 = vmatprep.subr.mxu0 0.0
      %1329 = vmatpush1.msra.mxu0 0.0
      %1330 = vmatprep.subr.mxu0 0.0
      %1331 = vmatpush1.msra.mxu0 0.0
      %1332 = vmatprep.subr.mxu0 0.0
      %1333 = vmatpush1.msra.mxu0 0.0
      %1334 = vmatprep.subr.mxu0 0.0
      %1335 = vmatpush1.msra.mxu0 0.0
      %1336 = vmatprep.subr.mxu0 0.0
      %1337 = vmatpush1.msra.mxu0 0.0
      %1338 = vmatprep.subr.mxu0 0.0
      %1339 = vmatpush1.msra.mxu0 0.0
      %1340 = vmatprep.subr.mxu0 0.0
      %1341 = vmatpush1.msra.mxu0 0.0
      %1342 = vmatprep.subr.mxu0 0.0
      %1343 = vmatpush1.msra.mxu0 0.0
      %1344 = vmatprep.subr.mxu0 0.0
      %1345 = vmatpush1.msra.mxu0 0.0
      %1346 = vmatprep.subr.mxu0 0.0
      %1347 = vmatpush1.msra.mxu0 0.0
      %1348 = vmatprep.subr.mxu0 0.0
      %1349 = vmatpush1.msra.mxu0 0.0
      %1350 = vmatprep.subr.mxu0 0.0
      %1351 = vmatpush1.msra.mxu0 0.0
      %1352 = vmatprep.subr.mxu0 0.0
      %1353 = vmatpush1.msra.mxu0 0.0
      %1354 = vmatprep.subr.mxu0 0.0
      %1355 = vmatpush1.msra.mxu0 0.0
      %1356 = vmatprep.subr.mxu0 0.0
      %1357 = vmatpush1.msra.mxu0 0.0
      %1358 = vmatprep.subr.mxu0 0.0
      %1359 = vmatpush1.msra.mxu0 0.0
      %1360 = vmatprep.subr.mxu0 0.0
      %1361 = vmatpush1.msra.mxu0 0.0
      %1362 = vmatprep.subr.mxu0 0.0
      %1363 = vmatpush1.msra.mxu0 0.0
      %1364 = vmatprep.subr.mxu0 0.0
      %1365 = vmatpush1.msra.mxu0 0.0
      %1366 = vmatprep.subr.mxu0 0.0
      %1367 = vmatpush1.msra.mxu0 0.0
      %1368 = vmatprep.subr.mxu0 0.0
      %1369 = vmatpush1.msra.mxu0 0.0
      %1370 = vmatprep.subr.mxu0 0.0
      %1371 = vmatpush1.msra.mxu0 0.0
      %1372 = vmatprep.subr.mxu0 0.0
      %1373 = vmatpush1.msra.mxu0 0.0
      %1374 = vmatprep.mubr.f32.mxu0 0.0
      %1375 = vmatmul.mubr.f32.gmra.mrb[0].mxu0 %v1119
      %v1376 = vpop.f32.mrb[0].mxu0
      %v1377 = vadd.f32 %v1115, %v1376
      %v1378 = vpop.f32.mrb[0].mxu0
      %1379 = vmatprep.mubr.f32.mxu0 0.0
      %1380 = vmatmul.mubr.f32.gmra.mrb[0].mxu0 %v1122
      %v1381 = vpop.f32.mrb[0].mxu0
      %v1382 = vadd.f32 %v1115, %v1381
      %v1383 = vpop.f32.mrb[0].mxu0
      %1384 = vmatprep.mubr.f32.mxu0 0.0
      %1385 = vmatmul.mubr.f32.gmra.mrb[0].mxu0 %v1125
      %v1386 = vpop.f32.mrb[0].mxu0
      %v1387 = vadd.f32 %v1115, %v1386
      %v1388 = vpop.f32.mrb[0].mxu0
      %1389 = vmatprep.mubr.f32.mxu0 0.0
      %1390 = vmatmul.mubr.f32.gmra.mrb[0].mxu0 %v1128
      %v1391 = vpop.f32.mrb[0].mxu0
      %v1392 = vadd.f32 %v1115, %v1391
      %v1393 = vpop.f32.mrb[0].mxu0
      %1394 = vmatprep.mubr.f32.mxu0 0.0
      %1395 = vmatmul.mubr.f32.gmra.mrb[0].mxu0 %v1131
      %v1396 = vpop.f32.mrb[0].mxu0
      %v1397 = vadd.f32 %v1115, %v1396
      %v1398 = vpop.f32.mrb[0].mxu0
      %1399 = vmatprep.mubr.f32.mxu0 0.0
      %1400 = vmatmul.mubr.f32.gmra.mrb[0].mxu0 %v1134
      %v1401 = vpop.f32.mrb[0].mxu0
      %v1402 = vadd.f32 %v1115, %v1401
      %v1403 = vpop.f32.mrb[0].mxu0
      %1404 = vmatprep.mubr.f32.mxu0 0.0
      %1405 = vmatmul.mubr.f32.gmra.mrb[0].mxu0 %v1137
      %v1406 = vpop.f32.mrb[0].mxu0
      %v1407 = vadd.f32 %v1115, %v1406
      %v1408 = vpop.f32.mrb[0].mxu0
      %1409 = vmatprep.mubr.f32.mxu0 0.0
      %1410 = vmatmul.mubr.f32.gmra.mrb[0].mxu0 %v1140
      %v1411 = vpop.f32.mrb[0].mxu0
      %v1412 = vadd.f32 %v1115, %v1411
      %v1413 = vpop.f32.mrb[0].mxu0
      %1414 = vmatprep.mubr.f32.mxu0 0.0
      %1415 = vmatmul.mubr.f32.gmra.mrb[0].mxu0 %v1143
      %v1416 = vpop.f32.mrb[0].mxu0
      %v1417 = vadd.f32 %v1115, %v1416
      %v1418 = vpop.f32.mrb[0].mxu0
      %1419 = vmatprep.mubr.f32.mxu0 0.0
      %1420 = vmatmul.mubr.f32.gmra.mrb[0].mxu0 %v1146
      %v1421 = vpop.f32.mrb[0].mxu0
      %v1422 = vadd.f32 %v1115, %v1421
      %v1423 = vpop.f32.mrb[0].mxu0
      %1424 = vmatprep.mubr.f32.mxu0 0.0
      %1425 = vmatmul.mubr.f32.gmra.mrb[0].mxu0 %v1149
      %v1426 = vpop.f32.mrb[0].mxu0
      %v1427 = vadd.f32 %v1115, %v1426
      %v1428 = vpop.f32.mrb[0].mxu0
      %1429 = vmatprep.mubr.f32.mxu0 0.0
      %1430 = vmatmul.mubr.f32.gmra.mrb[0].mxu0 %v1152
      %v1431 = vpop.f32.mrb[0].mxu0
      %v1432 = vadd.f32 %v1115, %v1431
      %v1433 = vpop.f32.mrb[0].mxu0
      %1434 = vmatprep.mubr.f32.mxu0 0.0
      %1435 = vmatmul.mubr.f32.gmra.mrb[0].mxu0 %v1155
      %v1436 = vpop.f32.mrb[0].mxu0
      %v1437 = vadd.f32 %v1115, %v1436
      %v1438 = vpop.f32.mrb[0].mxu0
      %1439 = vmatprep.mubr.f32.mxu0 0.0
      %1440 = vmatmul.mubr.f32.gmra.mrb[0].mxu0 %v1158
      %v1441 = vpop.f32.mrb[0].mxu0
      %v1442 = vadd.f32 %v1115, %v1441
      %v1443 = vpop.f32.mrb[0].mxu0
      %1444 = vmatprep.mubr.f32.mxu0 0.0
      %1445 = vmatmul.mubr.f32.gmra.mrb[0].mxu0 %v1161
      %v1446 = vpop.f32.mrb[0].mxu0
      %v1447 = vadd.f32 %v1115, %v1446
      %v1448 = vpop.f32.mrb[0].mxu0
      %1449 = vmatprep.mubr.f32.mxu0 0.0
      %1450 = vmatmul.mubr.f32.gmra.mrb[0].mxu0 %v1164
      %v1451 = vpop.f32.mrb[0].mxu0
      %v1452 = vadd.f32 %v1115, %v1451
      %v1453 = vpop.f32.mrb[0].mxu0
      %1454 = vmatprep.mubr.f32.mxu0 0.0
      %1455 = vmatmul.mubr.f32.gmra.mrb[0].mxu0 %v1167
      %v1456 = vpop.f32.mrb[0].mxu0
      %v1457 = vadd.f32 %v1115, %v1456
      %v1458 = vpop.f32.mrb[0].mxu0
      %1459 = vmatprep.mubr.f32.mxu0 0.0
      %1460 = vmatmul.mubr.f32.gmra.mrb[0].mxu0 %v1170
      %v1461 = vpop.f32.mrb[0].mxu0
      %v1462 = vadd.f32 %v1115, %v1461
      %v1463 = vpop.f32.mrb[0].mxu0
      %1464 = vmatprep.mubr.f32.mxu0 0.0
      %1465 = vmatmul.mubr.f32.gmra.mrb[0].mxu0 %v1173
      %v1466 = vpop.f32.mrb[0].mxu0
      %v1467 = vadd.f32 %v1115, %v1466
      %v1468 = vpop.f32.mrb[0].mxu0
      %1469 = vmatprep.mubr.f32.mxu0 0.0
      %1470 = vmatmul.mubr.f32.gmra.mrb[0].mxu0 %v1176
      %v1471 = vpop.f32.mrb[0].mxu0
      %v1472 = vadd.f32 %v1115, %v1471
      %v1473 = vpop.f32.mrb[0].mxu0
      %1474 = vmatprep.mubr.f32.mxu0 0.0
      %1475 = vmatmul.mubr.f32.gmra.mrb[0].mxu0 %v1179
      %v1476 = vpop.f32.mrb[0].mxu0
      %v1477 = vadd.f32 %v1115, %v1476
      %v1478 = vpop.f32.mrb[0].mxu0
      %1479 = vmatprep.mubr.f32.mxu0 0.0
      %1480 = vmatmul.mubr.f32.gmra.mrb[0].mxu0 %v1182
      %v1481 = vpop.f32.mrb[0].mxu0
      %v1482 = vadd.f32 %v1115, %v1481
      %v1483 = vpop.f32.mrb[0].mxu0
      %1484 = vmatprep.mubr.f32.mxu0 0.0
      %1485 = vmatmul.mubr.f32.gmra.mrb[0].mxu0 %v1185
      %v1486 = vpop.f32.mrb[0].mxu0
      %v1487 = vadd.f32 %v1115, %v1486
      %v1488 = vpop.f32.mrb[0].mxu0
      %1489 = vmatprep.mubr.f32.mxu0 0.0
      %1490 = vmatmul.mubr.f32.gmra.mrb[0].mxu0 %v1188
      %v1491 = vpop.f32.mrb[0].mxu0
      %v1492 = vadd.f32 %v1115, %v1491
      %v1493 = vpop.f32.mrb[0].mxu0
      %1494 = vmatprep.mubr.f32.mxu0 0.0
      %1495 = vmatmul.mubr.f32.gmra.mrb[0].mxu0 %v1191
      %v1496 = vpop.f32.mrb[0].mxu0
      %v1497 = vadd.f32 %v1115, %v1496
      %v1498 = vpop.f32.mrb[0].mxu0
      %1499 = vmatprep.mubr.f32.mxu0 0.0
      %1500 = vmatmul.mubr.f32.gmra.mrb[0].mxu0 %v1194
      %v1501 = vpop.f32.mrb[0].mxu0
      %v1502 = vadd.f32 %v1115, %v1501
      %v1503 = vpop.f32.mrb[0].mxu0
      %1504 = vmatprep.mubr.f32.mxu0 0.0
      %1505 = vmatmul.mubr.f32.gmra.mrb[0].mxu0 %v1197
      %v1506 = vpop.f32.mrb[0].mxu0
      %v1507 = vadd.f32 %v1115, %v1506
      %v1508 = vpop.f32.mrb[0].mxu0
      %1509 = vmatprep.mubr.f32.mxu0 0.0
      %1510 = vmatmul.mubr.f32.gmra.mrb[0].mxu0 %v1200
      %v1511 = vpop.f32.mrb[0].mxu0
      %v1512 = vadd.f32 %v1115, %v1511
      %v1513 = vpop.f32.mrb[0].mxu0
      %1514 = vmatprep.mubr.f32.mxu0 0.0
      %1515 = vmatmul.mubr.f32.gmra.mrb[0].mxu0 %v1203
      %v1516 = vpop.f32.mrb[0].mxu0
      %v1517 = vadd.f32 %v1115, %v1516
      %v1518 = vpop.f32.mrb[0].mxu0
      %1519 = vmatprep.mubr.f32.mxu0 0.0
      %1520 = vmatmul.mubr.f32.gmra.mrb[0].mxu0 %v1206
      %v1521 = vpop.f32.mrb[0].mxu0
      %v1522 = vadd.f32 %v1115, %v1521
      %v1523 = vpop.f32.mrb[0].mxu0
      %1524 = vmatprep.mubr.f32.mxu0 0.0
      %1525 = vmatmul.mubr.f32.gmra.mrb[0].mxu0 %v1209
      %v1526 = vpop.f32.mrb[0].mxu0
      %v1527 = vadd.f32 %v1115, %v1526
      %v1528 = vpop.f32.mrb[0].mxu0
      %1529 = vmatprep.mubr.f32.mxu0 0.0
      %1530 = vmatmul.mubr.f32.gmra.mrb[0].mxu0 %v1212
      %v1531 = vpop.f32.mrb[0].mxu0
      %v1532 = vadd.f32 %v1115, %v1531
      %v1533 = vpop.f32.mrb[0].mxu0
      %1534 = vmatprep.mubr.f32.mxu0 0.0
      %1535 = vmatmul.mubr.f32.gmra.mrb[0].mxu0 %v1215
      %v1536 = vpop.f32.mrb[0].mxu0
      %v1537 = vadd.f32 %v1115, %v1536
      %v1538 = vpop.f32.mrb[0].mxu0
      %1539 = vmatprep.mubr.f32.mxu0 0.0
      %1540 = vmatmul.mubr.f32.gmra.mrb[0].mxu0 %v1218
      %v1541 = vpop.f32.mrb[0].mxu0
      %v1542 = vadd.f32 %v1115, %v1541
      %v1543 = vpop.f32.mrb[0].mxu0
      %1544 = vmatprep.mubr.f32.mxu0 0.0
      %1545 = vmatmul.mubr.f32.gmra.mrb[0].mxu0 %v1221
      %v1546 = vpop.f32.mrb[0].mxu0
      %v1547 = vadd.f32 %v1115, %v1546
      %v1548 = vpop.f32.mrb[0].mxu0
      %1549 = vmatprep.mubr.f32.mxu0 0.0
      %1550 = vmatmul.mubr.f32.gmra.mrb[0].mxu0 %v1224
      %v1551 = vpop.f32.mrb[0].mxu0
      %v1552 = vadd.f32 %v1115, %v1551
      %v1553 = vpop.f32.mrb[0].mxu0
      %1554 = vmatprep.mubr.f32.mxu0 0.0
      %1555 = vmatmul.mubr.f32.gmra.mrb[0].mxu0 %v1227
      %v1556 = vpop.f32.mrb[0].mxu0
      %v1557 = vadd.f32 %v1115, %v1556
      %v1558 = vpop.f32.mrb[0].mxu0
      %1559 = vmatprep.mubr.f32.mxu0 0.0
      %1560 = vmatmul.mubr.f32.gmra.mrb[0].mxu0 %v1230
      %v1561 = vpop.f32.mrb[0].mxu0
      %v1562 = vadd.f32 %v1115, %v1561
      %v1563 = vpop.f32.mrb[0].mxu0
      %1564 = vmatprep.mubr.f32.mxu0 0.0
      %1565 = vmatmul.mubr.f32.gmra.mrb[0].mxu0 %v1233
      %v1566 = vpop.f32.mrb[0].mxu0
      %v1567 = vadd.f32 %v1115, %v1566
      %v1568 = vpop.f32.mrb[0].mxu0
      %1569 = vmatprep.mubr.f32.mxu0 0.0
      %1570 = vmatmul.mubr.f32.gmra.mrb[0].mxu0 %v1236
      %v1571 = vpop.f32.mrb[0].mxu0
      %v1572 = vadd.f32 %v1115, %v1571
      %v1573 = vpop.f32.mrb[0].mxu0
      %1574 = vmatprep.mubr.f32.mxu0 0.0
      %1575 = vmatmul.mubr.f32.gmra.mrb[0].mxu0 %v1239
      %v1576 = vpop.f32.mrb[0].mxu0
      %v1577 = vadd.f32 %v1115, %v1576
      %v1578 = vpop.f32.mrb[0].mxu0
      %1579 = vmatprep.mubr.f32.mxu0 0.0
      %1580 = vmatmul.mubr.f32.gmra.mrb[0].mxu0 %v1242
      %v1581 = vpop.f32.mrb[0].mxu0
      %v1582 = vadd.f32 %v1115, %v1581
      %v1583 = vpop.f32.mrb[0].mxu0
      %1584 = vmatprep.mubr.f32.mxu0 0.0
      %1585 = vmatmul.mubr.f32.gmra.mrb[0].mxu0 %v1245
      %v1586 = vpop.f32.mrb[0].mxu0
      %v1587 = vadd.f32 %v1115, %v1586
      %v1588 = vpop.f32.mrb[0].mxu0
      %1589 = vmatprep.mubr.f32.mxu0 0.0
      %1590 = vmatmul.mubr.f32.gmra.mrb[0].mxu0 %v1248
      %v1591 = vpop.f32.mrb[0].mxu0
      %v1592 = vadd.f32 %v1115, %v1591
      %v1593 = vpop.f32.mrb[0].mxu0
      %1594 = vmatprep.mubr.f32.mxu0 0.0
      %1595 = vmatmul.mubr.f32.gmra.mrb[0].mxu0 %v1251
      %v1596 = vpop.f32.mrb[0].mxu0
      %v1597 = vadd.f32 %v1115, %v1596
      %v1598 = vpop.f32.mrb[0].mxu0
      %1599 = vmatprep.mubr.f32.mxu0 0.0
      %1600 = vmatmul.mubr.f32.gmra.mrb[0].mxu0 %v1254
      %v1601 = vpop.f32.mrb[0].mxu0
      %v1602 = vadd.f32 %v1115, %v1601
      %v1603 = vpop.f32.mrb[0].mxu0
      %1604 = vmatprep.mubr.f32.mxu0 0.0
      %1605 = vmatmul.mubr.f32.gmra.mrb[0].mxu0 %v1257
      %v1606 = vpop.f32.mrb[0].mxu0
      %v1607 = vadd.f32 %v1115, %v1606
      %v1608 = vpop.f32.mrb[0].mxu0
      %1609 = vmatprep.mubr.f32.mxu0 0.0
      %1610 = vmatmul.mubr.f32.gmra.mrb[0].mxu0 %v1260
      %v1611 = vpop.f32.mrb[0].mxu0
      %v1612 = vadd.f32 %v1115, %v1611
      %v1613 = vpop.f32.mrb[0].mxu0
      %1614 = vmatprep.mubr.f32.mxu0 0.0
      %1615 = vmatmul.mubr.f32.gmra.mrb[0].mxu0 %v1263
      %v1616 = vpop.f32.mrb[0].mxu0
      %v1617 = vadd.f32 %v1115, %v1616
      %v1618 = vpop.f32.mrb[0].mxu0
      %1619 = vmatprep.mubr.f32.mxu0 0.0
      %1620 = vmatmul.mubr.f32.gmra.mrb[0].mxu0 %v1266
      %v1621 = vpop.f32.mrb[0].mxu0
      %v1622 = vadd.f32 %v1115, %v1621
      %v1623 = vpop.f32.mrb[0].mxu0
      %1624 = vmatprep.mubr.f32.mxu0 0.0
      %1625 = vmatmul.mubr.f32.gmra.mrb[0].mxu0 %v1269
      %v1626 = vpop.f32.mrb[0].mxu0
      %v1627 = vadd.f32 %v1115, %v1626
      %v1628 = vpop.f32.mrb[0].mxu0
      %1629 = vmatprep.mubr.f32.mxu0 0.0
      %1630 = vmatmul.mubr.f32.gmra.mrb[0].mxu0 %v1272
      %v1631 = vpop.f32.mrb[0].mxu0
      %v1632 = vadd.f32 %v1115, %v1631
      %v1633 = vpop.f32.mrb[0].mxu0
      %1634 = vmatprep.mubr.f32.mxu0 0.0
      %1635 = vmatmul.mubr.f32.gmra.mrb[0].mxu0 %v1275
      %v1636 = vpop.f32.mrb[0].mxu0
      %v1637 = vadd.f32 %v1115, %v1636
      %v1638 = vpop.f32.mrb[0].mxu0
      %1639 = vmatprep.mubr.f32.mxu0 0.0
      %1640 = vmatmul.mubr.f32.gmra.mrb[0].mxu0 %v1278
      %v1641 = vpop.f32.mrb[0].mxu0
      %v1642 = vadd.f32 %v1115, %v1641
      %v1643 = vpop.f32.mrb[0].mxu0
      %1644 = vmatprep.mubr.f32.mxu0 0.0
      %1645 = vmatmul.mubr.f32.gmra.mrb[0].mxu0 %v1281
      %v1646 = vpop.f32.mrb[0].mxu0
      %v1647 = vadd.f32 %v1115, %v1646
      %v1648 = vpop.f32.mrb[0].mxu0
      %1649 = vmatprep.mubr.f32.mxu0 0.0
      %1650 = vmatmul.mubr.f32.gmra.mrb[0].mxu0 %v1284
      %v1651 = vpop.f32.mrb[0].mxu0
      %v1652 = vadd.f32 %v1115, %v1651
      %v1653 = vpop.f32.mrb[0].mxu0
      %1654 = vmatprep.mubr.f32.mxu0 0.0
      %1655 = vmatmul.mubr.f32.gmra.mrb[0].mxu0 %v1287
      %v1656 = vpop.f32.mrb[0].mxu0
      %v1657 = vadd.f32 %v1115, %v1656
      %v1658 = vpop.f32.mrb[0].mxu0
      %1659 = vmatprep.mubr.f32.mxu0 0.0
      %1660 = vmatmul.mubr.f32.gmra.mrb[0].mxu0 %v1290
      %v1661 = vpop.f32.mrb[0].mxu0
      %v1662 = vadd.f32 %v1115, %v1661
      %v1663 = vpop.f32.mrb[0].mxu0
      %1664 = vmatprep.mubr.f32.mxu0 0.0
      %1665 = vmatmul.mubr.f32.gmra.mrb[0].mxu0 %v1293
      %v1666 = vpop.f32.mrb[0].mxu0
      %v1667 = vadd.f32 %v1115, %v1666
      %v1668 = vpop.f32.mrb[0].mxu0
      %1669 = vmatprep.mubr.f32.mxu0 0.0
      %1670 = vmatmul.mubr.f32.gmra.mrb[0].mxu0 %v1296
      %v1671 = vpop.f32.mrb[0].mxu0
      %v1672 = vadd.f32 %v1115, %v1671
      %v1673 = vpop.f32.mrb[0].mxu0
      %1674 = vmatprep.mubr.f32.mxu0 0.0
      %1675 = vmatmul.mubr.f32.gmra.mrb[0].mxu0 %v1299
      %v1676 = vpop.f32.mrb[0].mxu0
      %v1677 = vadd.f32 %v1115, %v1676
      %v1678 = vpop.f32.mrb[0].mxu0
      %1679 = vmatprep.mubr.f32.mxu0 0.0
      %1680 = vmatmul.mubr.f32.gmra.mrb[0].mxu0 %v1302
      %v1681 = vpop.f32.mrb[0].mxu0
      %v1682 = vadd.f32 %v1115, %v1681
      %v1683 = vpop.f32.mrb[0].mxu0
      %1684 = vmatprep.mubr.f32.mxu0 0.0
      %1685 = vmatmul.mubr.f32.gmra.mrb[0].mxu0 %v1305
      %v1686 = vpop.f32.mrb[0].mxu0
      %v1687 = vadd.f32 %v1115, %v1686
      %v1688 = vpop.f32.mrb[0].mxu0
      %1689 = vmatprep.mubr.f32.mxu0 0.0
      %1690 = vmatmul.mubr.f32.gmra.mrb[0].mxu0 %v1308
      %v1691 = vpop.f32.mrb[0].mxu0
      %v1692 = vadd.f32 %v1115, %v1691
      %v1693 = vpop.f32.mrb[0].mxu0
      %1694 = vdwg.mxu0
      %v1695 = vmax.f32 %v1377, 0.0
      %v1696 = vmax.f32 %v1382, 0.0
      %v1697 = vmax.f32 %v1387, 0.0
      %v1698 = vmax.f32 %v1392, 0.0
      %v1699 = vmax.f32 %v1397, 0.0
      %v1700 = vmax.f32 %v1402, 0.0
      %v1701 = vmax.f32 %v1407, 0.0
      %v1702 = vmax.f32 %v1412, 0.0
      %v1703 = vmax.f32 %v1417, 0.0
      %v1704 = vmax.f32 %v1422, 0.0
      %v1705 = vmax.f32 %v1427, 0.0
      %v1706 = vmax.f32 %v1432, 0.0
      %v1707 = vmax.f32 %v1437, 0.0
      %v1708 = vmax.f32 %v1442, 0.0
      %v1709 = vmax.f32 %v1447, 0.0
      %v1710 = vmax.f32 %v1452, 0.0
      %v1711 = vmax.f32 %v1457, 0.0
      %v1712 = vmax.f32 %v1462, 0.0
      %v1713 = vmax.f32 %v1467, 0.0
      %v1714 = vmax.f32 %v1472, 0.0
      %v1715 = vmax.f32 %v1477, 0.0
      %v1716 = vmax.f32 %v1482, 0.0
      %v1717 = vmax.f32 %v1487, 0.0
      %v1718 = vmax.f32 %v1492, 0.0
      %v1719 = vmax.f32 %v1497, 0.0
      %v1720 = vmax.f32 %v1502, 0.0
      %v1721 = vmax.f32 %v1507, 0.0
      %v1722 = vmax.f32 %v1512, 0.0
      %v1723 = vmax.f32 %v1517, 0.0
      %v1724 = vmax.f32 %v1522, 0.0
      %v1725 = vmax.f32 %v1527, 0.0
      %v1726 = vmax.f32 %v1532, 0.0
      %v1727 = vmax.f32 %v1537, 0.0
      %v1728 = vmax.f32 %v1542, 0.0
      %v1729 = vmax.f32 %v1547, 0.0
      %v1730 = vmax.f32 %v1552, 0.0
      %v1731 = vmax.f32 %v1557, 0.0
      %v1732 = vmax.f32 %v1562, 0.0
      %v1733 = vmax.f32 %v1567, 0.0
      %v1734 = vmax.f32 %v1572, 0.0
      %v1735 = vmax.f32 %v1577, 0.0
      %v1736 = vmax.f32 %v1582, 0.0
      %v1737 = vmax.f32 %v1587, 0.0
      %v1738 = vmax.f32 %v1592, 0.0
      %v1739 = vmax.f32 %v1597, 0.0
      %v1740 = vmax.f32 %v1602, 0.0
      %v1741 = vmax.f32 %v1607, 0.0
      %v1742 = vmax.f32 %v1612, 0.0
      %v1743 = vmax.f32 %v1617, 0.0
      %v1744 = vmax.f32 %v1622, 0.0
      %v1745 = vmax.f32 %v1627, 0.0
      %v1746 = vmax.f32 %v1632, 0.0
      %v1747 = vmax.f32 %v1637, 0.0
      %v1748 = vmax.f32 %v1642, 0.0
      %v1749 = vmax.f32 %v1647, 0.0
      %v1750 = vmax.f32 %v1652, 0.0
      %v1751 = vmax.f32 %v1657, 0.0
      %v1752 = vmax.f32 %v1662, 0.0
      %v1753 = vmax.f32 %v1667, 0.0
      %v1754 = vmax.f32 %v1672, 0.0
      %v1755 = vmax.f32 %v1677, 0.0
      %v1756 = vmax.f32 %v1682, 0.0
      %v1757 = vmax.f32 %v1687, 0.0
      %v1758 = vmax.f32 %v1692, 0.0
      %v1759 = vld [vmem:[%s5] sm:$0xff]
      %v1760 = vld [vmem:[%s5 + $0x8] sm:$0xff]
      %v1761 = vld [vmem:[%s6] sm:$0x1]
      %v1763 = vlaneseq
      %v1764 = vshrl.u32 %v1763, 7
      %v1765 = vsub.s32 0, %v1764
      %v1766 = vrot.slane %v1761, %v1765
      %vm1768 = vcmask 130048
      %v1770 = vsel %vm1768, %v1695, 0
      %v1773 = vsel %vm1768, %v1696, 0
      %v1776 = vsel %vm1768, %v1697, 0
      %v1779 = vsel %vm1768, %v1698, 0
      %v1782 = vsel %vm1768, %v1699, 0
      %v1785 = vsel %vm1768, %v1700, 0
      %v1788 = vsel %vm1768, %v1701, 0
      %v1791 = vsel %vm1768, %v1702, 0
      %v1794 = vsel %vm1768, %v1703, 0
      %v1797 = vsel %vm1768, %v1704, 0
      %v1800 = vsel %vm1768, %v1705, 0
      %v1803 = vsel %vm1768, %v1706, 0
      %v1806 = vsel %vm1768, %v1707, 0
      %v1809 = vsel %vm1768, %v1708, 0
      %v1812 = vsel %vm1768, %v1709, 0
      %v1815 = vsel %vm1768, %v1710, 0
      %v1818 = vsel %vm1768, %v1711, 0
      %v1821 = vsel %vm1768, %v1712, 0
      %v1824 = vsel %vm1768, %v1713, 0
      %v1827 = vsel %vm1768, %v1714, 0
      %v1830 = vsel %vm1768, %v1715, 0
      %v1833 = vsel %vm1768, %v1716, 0
      %v1836 = vsel %vm1768, %v1717, 0
      %v1839 = vsel %vm1768, %v1718, 0
      %v1842 = vsel %vm1768, %v1719, 0
      %v1845 = vsel %vm1768, %v1720, 0
      %v1848 = vsel %vm1768, %v1721, 0
      %v1851 = vsel %vm1768, %v1722, 0
      %v1854 = vsel %vm1768, %v1723, 0
      %v1857 = vsel %vm1768, %v1724, 0
      %v1860 = vsel %vm1768, %v1725, 0
      %v1863 = vsel %vm1768, %v1726, 0
      %v1866 = vsel %vm1768, %v1727, 0
      %v1869 = vsel %vm1768, %v1728, 0
      %v1872 = vsel %vm1768, %v1729, 0
      %v1875 = vsel %vm1768, %v1730, 0
      %v1878 = vsel %vm1768, %v1731, 0
      %v1881 = vsel %vm1768, %v1732, 0
      %v1884 = vsel %vm1768, %v1733, 0
      %v1887 = vsel %vm1768, %v1734, 0
      %v1890 = vsel %vm1768, %v1735, 0
      %v1893 = vsel %vm1768, %v1736, 0
      %v1896 = vsel %vm1768, %v1737, 0
      %v1899 = vsel %vm1768, %v1738, 0
      %v1902 = vsel %vm1768, %v1739, 0
      %v1905 = vsel %vm1768, %v1740, 0
      %v1908 = vsel %vm1768, %v1741, 0
      %v1911 = vsel %vm1768, %v1742, 0
      %v1914 = vsel %vm1768, %v1743, 0
      %v1917 = vsel %vm1768, %v1744, 0
      %v1920 = vsel %vm1768, %v1745, 0
      %v1923 = vsel %vm1768, %v1746, 0
      %v1926 = vsel %vm1768, %v1747, 0
      %v1929 = vsel %vm1768, %v1748, 0
      %v1932 = vsel %vm1768, %v1749, 0
      %v1935 = vsel %vm1768, %v1750, 0
      %v1938 = vsel %vm1768, %v1751, 0
      %v1941 = vsel %vm1768, %v1752, 0
      %v1944 = vsel %vm1768, %v1753, 0
      %v1947 = vsel %vm1768, %v1754, 0
      %v1950 = vsel %vm1768, %v1755, 0
      %v1953 = vsel %vm1768, %v1756, 0
      %v1956 = vsel %vm1768, %v1757, 0
      %v1959 = vsel %vm1768, %v1758, 0
      %1961 = vmatprep.subr.mxu0 0.0
      %1962 = vmatpush1.msra.mxu0 %v1759
      %1963 = vmatprep.subr.mxu0 0.0
      %1964 = vmatpush1.msra.mxu0 %v1760
      %1965 = vmatprep.subr.mxu0 0.0
      %1966 = vmatpush1.msra.mxu0 0.0
      %1967 = vmatprep.subr.mxu0 0.0
      %1968 = vmatpush1.msra.mxu0 0.0
      %1969 = vmatprep.subr.mxu0 0.0
      %1970 = vmatpush1.msra.mxu0 0.0
      %1971 = vmatprep.subr.mxu0 0.0
      %1972 = vmatpush1.msra.mxu0 0.0
      %1973 = vmatprep.subr.mxu0 0.0
      %1974 = vmatpush1.msra.mxu0 0.0
      %1975 = vmatprep.subr.mxu0 0.0
      %1976 = vmatpush1.msra.mxu0 0.0
      %1977 = vmatprep.subr.mxu0 0.0
      %1978 = vmatpush1.msra.mxu0 0.0
      %1979 = vmatprep.subr.mxu0 0.0
      %1980 = vmatpush1.msra.mxu0 0.0
      %1981 = vmatprep.subr.mxu0 0.0
      %1982 = vmatpush1.msra.mxu0 0.0
      %1983 = vmatprep.subr.mxu0 0.0
      %1984 = vmatpush1.msra.mxu0 0.0
      %1985 = vmatprep.subr.mxu0 0.0
      %1986 = vmatpush1.msra.mxu0 0.0
      %1987 = vmatprep.subr.mxu0 0.0
      %1988 = vmatpush1.msra.mxu0 0.0
      %1989 = vmatprep.subr.mxu0 0.0
      %1990 = vmatpush1.msra.mxu0 0.0
      %1991 = vmatprep.subr.mxu0 0.0
      %1992 = vmatpush1.msra.mxu0 0.0
      %1993 = vmatprep.subr.mxu0 0.0
      %1994 = vmatpush1.msra.mxu0 0.0
      %1995 = vmatprep.subr.mxu0 0.0
      %1996 = vmatpush1.msra.mxu0 0.0
      %1997 = vmatprep.subr.mxu0 0.0
      %1998 = vmatpush1.msra.mxu0 0.0
      %1999 = vmatprep.subr.mxu0 0.0
      %2000 = vmatpush1.msra.mxu0 0.0
      %2001 = vmatprep.subr.mxu0 0.0
      %2002 = vmatpush1.msra.mxu0 0.0
      %2003 = vmatprep.subr.mxu0 0.0
      %2004 = vmatpush1.msra.mxu0 0.0
      %2005 = vmatprep.subr.mxu0 0.0
      %2006 = vmatpush1.msra.mxu0 0.0
      %2007 = vmatprep.subr.mxu0 0.0
      %2008 = vmatpush1.msra.mxu0 0.0
      %2009 = vmatprep.subr.mxu0 0.0
      %2010 = vmatpush1.msra.mxu0 0.0
      %2011 = vmatprep.subr.mxu0 0.0
      %2012 = vmatpush1.msra.mxu0 0.0
      %2013 = vmatprep.subr.mxu0 0.0
      %2014 = vmatpush1.msra.mxu0 0.0
      %2015 = vmatprep.subr.mxu0 0.0
      %2016 = vmatpush1.msra.mxu0 0.0
      %2017 = vmatprep.subr.mxu0 0.0
      %2018 = vmatpush1.msra.mxu0 0.0
      %2019 = vmatprep.subr.mxu0 0.0
      %2020 = vmatpush1.msra.mxu0 0.0
      %2021 = vmatprep.subr.mxu0 0.0
      %2022 = vmatpush1.msra.mxu0 0.0
      %2023 = vmatprep.subr.mxu0 0.0
      %2024 = vmatpush1.msra.mxu0 0.0
      %2025 = vmatprep.mubr.f32.mxu0 0.0
      %2026 = vmatmul.mubr.f32.gmra.mrb[0].mxu0 %v1770
      %v2027 = vpop.f32.mrb[0].mxu0
      %v2028 = vadd.f32 %v1766, %v2027
      %v2029 = vpop.f32.mrb[0].mxu0
      %2030 = vmatprep.mubr.f32.mxu0 0.0
      %2031 = vmatmul.mubr.f32.gmra.mrb[0].mxu0 %v1773
      %v2032 = vpop.f32.mrb[0].mxu0
      %v2033 = vadd.f32 %v1766, %v2032
      %v2034 = vpop.f32.mrb[0].mxu0
      %2035 = vmatprep.mubr.f32.mxu0 0.0
      %2036 = vmatmul.mubr.f32.gmra.mrb[0].mxu0 %v1776
      %v2037 = vpop.f32.mrb[0].mxu0
      %v2038 = vadd.f32 %v1766, %v2037
      %v2039 = vpop.f32.mrb[0].mxu0
      %2040 = vmatprep.mubr.f32.mxu0 0.0
      %2041 = vmatmul.mubr.f32.gmra.mrb[0].mxu0 %v1779
      %v2042 = vpop.f32.mrb[0].mxu0
      %v2043 = vadd.f32 %v1766, %v2042
      %v2044 = vpop.f32.mrb[0].mxu0
      %2045 = vmatprep.mubr.f32.mxu0 0.0
      %2046 = vmatmul.mubr.f32.gmra.mrb[0].mxu0 %v1782
      %v2047 = vpop.f32.mrb[0].mxu0
      %v2048 = vadd.f32 %v1766, %v2047
      %v2049 = vpop.f32.mrb[0].mxu0
      %2050 = vmatprep.mubr.f32.mxu0 0.0
      %2051 = vmatmul.mubr.f32.gmra.mrb[0].mxu0 %v1785
      %v2052 = vpop.f32.mrb[0].mxu0
      %v2053 = vadd.f32 %v1766, %v2052
      %v2054 = vpop.f32.mrb[0].mxu0
      %2055 = vmatprep.mubr.f32.mxu0 0.0
      %2056 = vmatmul.mubr.f32.gmra.mrb[0].mxu0 %v1788
      %v2057 = vpop.f32.mrb[0].mxu0
      %v2058 = vadd.f32 %v1766, %v2057
      %v2059 = vpop.f32.mrb[0].mxu0
      %2060 = vmatprep.mubr.f32.mxu0 0.0
      %2061 = vmatmul.mubr.f32.gmra.mrb[0].mxu0 %v1791
      %v2062 = vpop.f32.mrb[0].mxu0
      %v2063 = vadd.f32 %v1766, %v2062
      %v2064 = vpop.f32.mrb[0].mxu0
      %2065 = vmatprep.mubr.f32.mxu0 0.0
      %2066 = vmatmul.mubr.f32.gmra.mrb[0].mxu0 %v1794
      %v2067 = vpop.f32.mrb[0].mxu0
      %v2068 = vadd.f32 %v1766, %v2067
      %v2069 = vpop.f32.mrb[0].mxu0
      %2070 = vmatprep.mubr.f32.mxu0 0.0
      %2071 = vmatmul.mubr.f32.gmra.mrb[0].mxu0 %v1797
      %v2072 = vpop.f32.mrb[0].mxu0
      %v2073 = vadd.f32 %v1766, %v2072
      %v2074 = vpop.f32.mrb[0].mxu0
      %2075 = vmatprep.mubr.f32.mxu0 0.0
      %2076 = vmatmul.mubr.f32.gmra.mrb[0].mxu0 %v1800
      %v2077 = vpop.f32.mrb[0].mxu0
      %v2078 = vadd.f32 %v1766, %v2077
      %v2079 = vpop.f32.mrb[0].mxu0
      %2080 = vmatprep.mubr.f32.mxu0 0.0
      %2081 = vmatmul.mubr.f32.gmra.mrb[0].mxu0 %v1803
      %v2082 = vpop.f32.mrb[0].mxu0
      %v2083 = vadd.f32 %v1766, %v2082
      %v2084 = vpop.f32.mrb[0].mxu0
      %2085 = vmatprep.mubr.f32.mxu0 0.0
      %2086 = vmatmul.mubr.f32.gmra.mrb[0].mxu0 %v1806
      %v2087 = vpop.f32.mrb[0].mxu0
      %v2088 = vadd.f32 %v1766, %v2087
      %v2089 = vpop.f32.mrb[0].mxu0
      %2090 = vmatprep.mubr.f32.mxu0 0.0
      %2091 = vmatmul.mubr.f32.gmra.mrb[0].mxu0 %v1809
      %v2092 = vpop.f32.mrb[0].mxu0
      %v2093 = vadd.f32 %v1766, %v2092
      %v2094 = vpop.f32.mrb[0].mxu0
      %2095 = vmatprep.mubr.f32.mxu0 0.0
      %2096 = vmatmul.mubr.f32.gmra.mrb[0].mxu0 %v1812
      %v2097 = vpop.f32.mrb[0].mxu0
      %v2098 = vadd.f32 %v1766, %v2097
      %v2099 = vpop.f32.mrb[0].mxu0
      %2100 = vmatprep.mubr.f32.mxu0 0.0
      %2101 = vmatmul.mubr.f32.gmra.mrb[0].mxu0 %v1815
      %v2102 = vpop.f32.mrb[0].mxu0
      %v2103 = vadd.f32 %v1766, %v2102
      %v2104 = vpop.f32.mrb[0].mxu0
      %2105 = vmatprep.mubr.f32.mxu0 0.0
      %2106 = vmatmul.mubr.f32.gmra.mrb[0].mxu0 %v1818
      %v2107 = vpop.f32.mrb[0].mxu0
      %v2108 = vadd.f32 %v1766, %v2107
      %v2109 = vpop.f32.mrb[0].mxu0
      %2110 = vmatprep.mubr.f32.mxu0 0.0
      %2111 = vmatmul.mubr.f32.gmra.mrb[0].mxu0 %v1821
      %v2112 = vpop.f32.mrb[0].mxu0
      %v2113 = vadd.f32 %v1766, %v2112
      %v2114 = vpop.f32.mrb[0].mxu0
      %2115 = vmatprep.mubr.f32.mxu0 0.0
      %2116 = vmatmul.mubr.f32.gmra.mrb[0].mxu0 %v1824
      %v2117 = vpop.f32.mrb[0].mxu0
      %v2118 = vadd.f32 %v1766, %v2117
      %v2119 = vpop.f32.mrb[0].mxu0
      %2120 = vmatprep.mubr.f32.mxu0 0.0
      %2121 = vmatmul.mubr.f32.gmra.mrb[0].mxu0 %v1827
      %v2122 = vpop.f32.mrb[0].mxu0
      %v2123 = vadd.f32 %v1766, %v2122
      %v2124 = vpop.f32.mrb[0].mxu0
      %2125 = vmatprep.mubr.f32.mxu0 0.0
      %2126 = vmatmul.mubr.f32.gmra.mrb[0].mxu0 %v1830
      %v2127 = vpop.f32.mrb[0].mxu0
      %v2128 = vadd.f32 %v1766, %v2127
      %v2129 = vpop.f32.mrb[0].mxu0
      %2130 = vmatprep.mubr.f32.mxu0 0.0
      %2131 = vmatmul.mubr.f32.gmra.mrb[0].mxu0 %v1833
      %v2132 = vpop.f32.mrb[0].mxu0
      %v2133 = vadd.f32 %v1766, %v2132
      %v2134 = vpop.f32.mrb[0].mxu0
      %2135 = vmatprep.mubr.f32.mxu0 0.0
      %2136 = vmatmul.mubr.f32.gmra.mrb[0].mxu0 %v1836
      %v2137 = vpop.f32.mrb[0].mxu0
      %v2138 = vadd.f32 %v1766, %v2137
      %v2139 = vpop.f32.mrb[0].mxu0
      %2140 = vmatprep.mubr.f32.mxu0 0.0
      %2141 = vmatmul.mubr.f32.gmra.mrb[0].mxu0 %v1839
      %v2142 = vpop.f32.mrb[0].mxu0
      %v2143 = vadd.f32 %v1766, %v2142
      %v2144 = vpop.f32.mrb[0].mxu0
      %2145 = vmatprep.mubr.f32.mxu0 0.0
      %2146 = vmatmul.mubr.f32.gmra.mrb[0].mxu0 %v1842
      %v2147 = vpop.f32.mrb[0].mxu0
      %v2148 = vadd.f32 %v1766, %v2147
      %v2149 = vpop.f32.mrb[0].mxu0
      %2150 = vmatprep.mubr.f32.mxu0 0.0
      %2151 = vmatmul.mubr.f32.gmra.mrb[0].mxu0 %v1845
      %v2152 = vpop.f32.mrb[0].mxu0
      %v2153 = vadd.f32 %v1766, %v2152
      %v2154 = vpop.f32.mrb[0].mxu0
      %2155 = vmatprep.mubr.f32.mxu0 0.0
      %2156 = vmatmul.mubr.f32.gmra.mrb[0].mxu0 %v1848
      %v2157 = vpop.f32.mrb[0].mxu0
      %v2158 = vadd.f32 %v1766, %v2157
      %v2159 = vpop.f32.mrb[0].mxu0
      %2160 = vmatprep.mubr.f32.mxu0 0.0
      %2161 = vmatmul.mubr.f32.gmra.mrb[0].mxu0 %v1851
      %v2162 = vpop.f32.mrb[0].mxu0
      %v2163 = vadd.f32 %v1766, %v2162
      %v2164 = vpop.f32.mrb[0].mxu0
      %2165 = vmatprep.mubr.f32.mxu0 0.0
      %2166 = vmatmul.mubr.f32.gmra.mrb[0].mxu0 %v1854
      %v2167 = vpop.f32.mrb[0].mxu0
      %v2168 = vadd.f32 %v1766, %v2167
      %v2169 = vpop.f32.mrb[0].mxu0
      %2170 = vmatprep.mubr.f32.mxu0 0.0
      %2171 = vmatmul.mubr.f32.gmra.mrb[0].mxu0 %v1857
      %v2172 = vpop.f32.mrb[0].mxu0
      %v2173 = vadd.f32 %v1766, %v2172
      %v2174 = vpop.f32.mrb[0].mxu0
      %2175 = vmatprep.mubr.f32.mxu0 0.0
      %2176 = vmatmul.mubr.f32.gmra.mrb[0].mxu0 %v1860
      %v2177 = vpop.f32.mrb[0].mxu0
      %v2178 = vadd.f32 %v1766, %v2177
      %v2179 = vpop.f32.mrb[0].mxu0
      %2180 = vmatprep.mubr.f32.mxu0 0.0
      %2181 = vmatmul.mubr.f32.gmra.mrb[0].mxu0 %v1863
      %v2182 = vpop.f32.mrb[0].mxu0
      %v2183 = vadd.f32 %v1766, %v2182
      %v2184 = vpop.f32.mrb[0].mxu0
      %2185 = vmatprep.mubr.f32.mxu0 0.0
      %2186 = vmatmul.mubr.f32.gmra.mrb[0].mxu0 %v1866
      %v2187 = vpop.f32.mrb[0].mxu0
      %v2188 = vadd.f32 %v1766, %v2187
      %v2189 = vpop.f32.mrb[0].mxu0
      %2190 = vmatprep.mubr.f32.mxu0 0.0
      %2191 = vmatmul.mubr.f32.gmra.mrb[0].mxu0 %v1869
      %v2192 = vpop.f32.mrb[0].mxu0
      %v2193 = vadd.f32 %v1766, %v2192
      %v2194 = vpop.f32.mrb[0].mxu0
      %2195 = vmatprep.mubr.f32.mxu0 0.0
      %2196 = vmatmul.mubr.f32.gmra.mrb[0].mxu0 %v1872
      %v2197 = vpop.f32.mrb[0].mxu0
      %v2198 = vadd.f32 %v1766, %v2197
      %v2199 = vpop.f32.mrb[0].mxu0
      %2200 = vmatprep.mubr.f32.mxu0 0.0
      %2201 = vmatmul.mubr.f32.gmra.mrb[0].mxu0 %v1875
      %v2202 = vpop.f32.mrb[0].mxu0
      %v2203 = vadd.f32 %v1766, %v2202
      %v2204 = vpop.f32.mrb[0].mxu0
      %2205 = vmatprep.mubr.f32.mxu0 0.0
      %2206 = vmatmul.mubr.f32.gmra.mrb[0].mxu0 %v1878
      %v2207 = vpop.f32.mrb[0].mxu0
      %v2208 = vadd.f32 %v1766, %v2207
      %v2209 = vpop.f32.mrb[0].mxu0
      %2210 = vmatprep.mubr.f32.mxu0 0.0
      %2211 = vmatmul.mubr.f32.gmra.mrb[0].mxu0 %v1881
      %v2212 = vpop.f32.mrb[0].mxu0
      %v2213 = vadd.f32 %v1766, %v2212
      %v2214 = vpop.f32.mrb[0].mxu0
      %2215 = vmatprep.mubr.f32.mxu0 0.0
      %2216 = vmatmul.mubr.f32.gmra.mrb[0].mxu0 %v1884
      %v2217 = vpop.f32.mrb[0].mxu0
      %v2218 = vadd.f32 %v1766, %v2217
      %v2219 = vpop.f32.mrb[0].mxu0
      %2220 = vmatprep.mubr.f32.mxu0 0.0
      %2221 = vmatmul.mubr.f32.gmra.mrb[0].mxu0 %v1887
      %v2222 = vpop.f32.mrb[0].mxu0
      %v2223 = vadd.f32 %v1766, %v2222
      %v2224 = vpop.f32.mrb[0].mxu0
      %2225 = vmatprep.mubr.f32.mxu0 0.0
      %2226 = vmatmul.mubr.f32.gmra.mrb[0].mxu0 %v1890
      %v2227 = vpop.f32.mrb[0].mxu0
      %v2228 = vadd.f32 %v1766, %v2227
      %v2229 = vpop.f32.mrb[0].mxu0
      %2230 = vmatprep.mubr.f32.mxu0 0.0
      %2231 = vmatmul.mubr.f32.gmra.mrb[0].mxu0 %v1893
      %v2232 = vpop.f32.mrb[0].mxu0
      %v2233 = vadd.f32 %v1766, %v2232
      %v2234 = vpop.f32.mrb[0].mxu0
      %2235 = vmatprep.mubr.f32.mxu0 0.0
      %2236 = vmatmul.mubr.f32.gmra.mrb[0].mxu0 %v1896
      %v2237 = vpop.f32.mrb[0].mxu0
      %v2238 = vadd.f32 %v1766, %v2237
      %v2239 = vpop.f32.mrb[0].mxu0
      %2240 = vmatprep.mubr.f32.mxu0 0.0
      %2241 = vmatmul.mubr.f32.gmra.mrb[0].mxu0 %v1899
      %v2242 = vpop.f32.mrb[0].mxu0
      %v2243 = vadd.f32 %v1766, %v2242
      %v2244 = vpop.f32.mrb[0].mxu0
      %2245 = vmatprep.mubr.f32.mxu0 0.0
      %2246 = vmatmul.mubr.f32.gmra.mrb[0].mxu0 %v1902
      %v2247 = vpop.f32.mrb[0].mxu0
      %v2248 = vadd.f32 %v1766, %v2247
      %v2249 = vpop.f32.mrb[0].mxu0
      %2250 = vmatprep.mubr.f32.mxu0 0.0
      %2251 = vmatmul.mubr.f32.gmra.mrb[0].mxu0 %v1905
      %v2252 = vpop.f32.mrb[0].mxu0
      %v2253 = vadd.f32 %v1766, %v2252
      %v2254 = vpop.f32.mrb[0].mxu0
      %2255 = vmatprep.mubr.f32.mxu0 0.0
      %2256 = vmatmul.mubr.f32.gmra.mrb[0].mxu0 %v1908
      %v2257 = vpop.f32.mrb[0].mxu0
      %v2258 = vadd.f32 %v1766, %v2257
      %v2259 = vpop.f32.mrb[0].mxu0
      %2260 = vmatprep.mubr.f32.mxu0 0.0
      %2261 = vmatmul.mubr.f32.gmra.mrb[0].mxu0 %v1911
      %v2262 = vpop.f32.mrb[0].mxu0
      %v2263 = vadd.f32 %v1766, %v2262
      %v2264 = vpop.f32.mrb[0].mxu0
      %2265 = vmatprep.mubr.f32.mxu0 0.0
      %2266 = vmatmul.mubr.f32.gmra.mrb[0].mxu0 %v1914
      %v2267 = vpop.f32.mrb[0].mxu0
      %v2268 = vadd.f32 %v1766, %v2267
      %v2269 = vpop.f32.mrb[0].mxu0
      %2270 = vmatprep.mubr.f32.mxu0 0.0
      %2271 = vmatmul.mubr.f32.gmra.mrb[0].mxu0 %v1917
      %v2272 = vpop.f32.mrb[0].mxu0
      %v2273 = vadd.f32 %v1766, %v2272
      %v2274 = vpop.f32.mrb[0].mxu0
      %2275 = vmatprep.mubr.f32.mxu0 0.0
      %2276 = vmatmul.mubr.f32.gmra.mrb[0].mxu0 %v1920
      %v2277 = vpop.f32.mrb[0].mxu0
      %v2278 = vadd.f32 %v1766, %v2277
      %v2279 = vpop.f32.mrb[0].mxu0
      %2280 = vmatprep.mubr.f32.mxu0 0.0
      %2281 = vmatmul.mubr.f32.gmra.mrb[0].mxu0 %v1923
      %v2282 = vpop.f32.mrb[0].mxu0
      %v2283 = vadd.f32 %v1766, %v2282
      %v2284 = vpop.f32.mrb[0].mxu0
      %2285 = vmatprep.mubr.f32.mxu0 0.0
      %2286 = vmatmul.mubr.f32.gmra.mrb[0].mxu0 %v1926
      %v2287 = vpop.f32.mrb[0].mxu0
      %v2288 = vadd.f32 %v1766, %v2287
      %v2289 = vpop.f32.mrb[0].mxu0
      %2290 = vmatprep.mubr.f32.mxu0 0.0
      %2291 = vmatmul.mubr.f32.gmra.mrb[0].mxu0 %v1929
      %v2292 = vpop.f32.mrb[0].mxu0
      %v2293 = vadd.f32 %v1766, %v2292
      %v2294 = vpop.f32.mrb[0].mxu0
      %2295 = vmatprep.mubr.f32.mxu0 0.0
      %2296 = vmatmul.mubr.f32.gmra.mrb[0].mxu0 %v1932
      %v2297 = vpop.f32.mrb[0].mxu0
      %v2298 = vadd.f32 %v1766, %v2297
      %v2299 = vpop.f32.mrb[0].mxu0
      %2300 = vmatprep.mubr.f32.mxu0 0.0
      %2301 = vmatmul.mubr.f32.gmra.mrb[0].mxu0 %v1935
      %v2302 = vpop.f32.mrb[0].mxu0
      %v2303 = vadd.f32 %v1766, %v2302
      %v2304 = vpop.f32.mrb[0].mxu0
      %2305 = vmatprep.mubr.f32.mxu0 0.0
      %2306 = vmatmul.mubr.f32.gmra.mrb[0].mxu0 %v1938
      %v2307 = vpop.f32.mrb[0].mxu0
      %v2308 = vadd.f32 %v1766, %v2307
      %v2309 = vpop.f32.mrb[0].mxu0
      %2310 = vmatprep.mubr.f32.mxu0 0.0
      %2311 = vmatmul.mubr.f32.gmra.mrb[0].mxu0 %v1941
      %v2312 = vpop.f32.mrb[0].mxu0
      %v2313 = vadd.f32 %v1766, %v2312
      %v2314 = vpop.f32.mrb[0].mxu0
      %2315 = vmatprep.mubr.f32.mxu0 0.0
      %2316 = vmatmul.mubr.f32.gmra.mrb[0].mxu0 %v1944
      %v2317 = vpop.f32.mrb[0].mxu0
      %v2318 = vadd.f32 %v1766, %v2317
      %v2319 = vpop.f32.mrb[0].mxu0
      %2320 = vmatprep.mubr.f32.mxu0 0.0
      %2321 = vmatmul.mubr.f32.gmra.mrb[0].mxu0 %v1947
      %v2322 = vpop.f32.mrb[0].mxu0
      %v2323 = vadd.f32 %v1766, %v2322
      %v2324 = vpop.f32.mrb[0].mxu0
      %2325 = vmatprep.mubr.f32.mxu0 0.0
      %2326 = vmatmul.mubr.f32.gmra.mrb[0].mxu0 %v1950
      %v2327 = vpop.f32.mrb[0].mxu0
      %v2328 = vadd.f32 %v1766, %v2327
      %v2329 = vpop.f32.mrb[0].mxu0
      %2330 = vmatprep.mubr.f32.mxu0 0.0
      %2331 = vmatmul.mubr.f32.gmra.mrb[0].mxu0 %v1953
      %v2332 = vpop.f32.mrb[0].mxu0
      %v2333 = vadd.f32 %v1766, %v2332
      %v2334 = vpop.f32.mrb[0].mxu0
      %2335 = vmatprep.mubr.f32.mxu0 0.0
      %2336 = vmatmul.mubr.f32.gmra.mrb[0].mxu0 %v1956
      %v2337 = vpop.f32.mrb[0].mxu0
      %v2338 = vadd.f32 %v1766, %v2337
      %v2339 = vpop.f32.mrb[0].mxu0
      %2340 = vmatprep.mubr.f32.mxu0 0.0
      %2341 = vmatmul.mubr.f32.gmra.mrb[0].mxu0 %v1959
      %v2342 = vpop.f32.mrb[0].mxu0
      %v2343 = vadd.f32 %v1766, %v2342
      %v2344 = vpop.f32.mrb[0].mxu0
      %2345 = vdwg.mxu0
      %v2346 = vld [vmem:[%s377] sm:$0xff]
      %v2347 = vld [vmem:[%s377 + $0x8] sm:$0xff]
      %v2348 = vld [vmem:[%s377 + $0x10] sm:$0xff]
      %v2349 = vld [vmem:[%s377 + $0x18] sm:$0xff]
      %v2350 = vld [vmem:[%s377 + $0x20] sm:$0xff]
      %v2351 = vld [vmem:[%s377 + $0x28] sm:$0xff]
      %v2352 = vld [vmem:[%s377 + $0x30] sm:$0xff]
      %v2353 = vld [vmem:[%s377 + $0x38] sm:$0xff]
      %v2354 = vld [vmem:[%s377 + $0x40] sm:$0xff]
      %v2355 = vld [vmem:[%s377 + $0x48] sm:$0xff]
      %v2356 = vld [vmem:[%s377 + $0x50] sm:$0xff]
      %v2357 = vld [vmem:[%s377 + $0x58] sm:$0xff]
      %v2358 = vld [vmem:[%s377 + $0x60] sm:$0xff]
      %v2359 = vld [vmem:[%s377 + $0x68] sm:$0xff]
      %v2360 = vld [vmem:[%s377 + $0x70] sm:$0xff]
      %v2361 = vld [vmem:[%s377 + $0x78] sm:$0xff]
      %v2362 = vld [vmem:[%s377 + $0x80] sm:$0xff]
      %v2363 = vld [vmem:[%s377 + $0x88] sm:$0xff]
      %v2364 = vld [vmem:[%s377 + $0x90] sm:$0xff]
      %v2365 = vld [vmem:[%s377 + $0x98] sm:$0xff]
      %v2366 = vld [vmem:[%s377 + $0xa0] sm:$0xff]
      %v2367 = vld [vmem:[%s377 + $0xa8] sm:$0xff]
      %v2368 = vld [vmem:[%s377 + $0xb0] sm:$0xff]
      %v2369 = vld [vmem:[%s377 + $0xb8] sm:$0xff]
      %v2370 = vld [vmem:[%s377 + $0xc0] sm:$0xff]
      %v2371 = vld [vmem:[%s377 + $0xc8] sm:$0xff]
      %v2372 = vld [vmem:[%s377 + $0xd0] sm:$0xff]
      %v2373 = vld [vmem:[%s377 + $0xd8] sm:$0xff]
      %v2374 = vld [vmem:[%s377 + $0xe0] sm:$0xff]
      %v2375 = vld [vmem:[%s377 + $0xe8] sm:$0xff]
      %v2376 = vld [vmem:[%s377 + $0xf0] sm:$0xff]
      %v2377 = vld [vmem:[%s377 + $0xf8] sm:$0xff]
      %v2378 = vld [vmem:[%s377 + $0x100] sm:$0xff]
      %v2379 = vld [vmem:[%s377 + $0x108] sm:$0xff]
      %v2380 = vld [vmem:[%s377 + $0x110] sm:$0xff]
      %v2381 = vld [vmem:[%s377 + $0x118] sm:$0xff]
      %v2382 = vld [vmem:[%s377 + $0x120] sm:$0xff]
      %v2383 = vld [vmem:[%s377 + $0x128] sm:$0xff]
      %v2384 = vld [vmem:[%s377 + $0x130] sm:$0xff]
      %v2385 = vld [vmem:[%s377 + $0x138] sm:$0xff]
      %v2386 = vld [vmem:[%s377 + $0x140] sm:$0xff]
      %v2387 = vld [vmem:[%s377 + $0x148] sm:$0xff]
      %v2388 = vld [vmem:[%s377 + $0x150] sm:$0xff]
      %v2389 = vld [vmem:[%s377 + $0x158] sm:$0xff]
      %v2390 = vld [vmem:[%s377 + $0x160] sm:$0xff]
      %v2391 = vld [vmem:[%s377 + $0x168] sm:$0xff]
      %v2392 = vld [vmem:[%s377 + $0x170] sm:$0xff]
      %v2393 = vld [vmem:[%s377 + $0x178] sm:$0xff]
      %v2394 = vld [vmem:[%s377 + $0x180] sm:$0xff]
      %v2395 = vld [vmem:[%s377 + $0x188] sm:$0xff]
      %v2396 = vld [vmem:[%s377 + $0x190] sm:$0xff]
      %v2397 = vld [vmem:[%s377 + $0x198] sm:$0xff]
      %v2398 = vld [vmem:[%s377 + $0x1a0] sm:$0xff]
      %v2399 = vld [vmem:[%s377 + $0x1a8] sm:$0xff]
      %v2400 = vld [vmem:[%s377 + $0x1b0] sm:$0xff]
      %v2401 = vld [vmem:[%s377 + $0x1b8] sm:$0xff]
      %v2402 = vld [vmem:[%s377 + $0x1c0] sm:$0xff]
      %v2403 = vld [vmem:[%s377 + $0x1c8] sm:$0xff]
      %v2404 = vld [vmem:[%s377 + $0x1d0] sm:$0xff]
      %v2405 = vld [vmem:[%s377 + $0x1d8] sm:$0xff]
      %v2406 = vld [vmem:[%s377 + $0x1e0] sm:$0xff]
      %v2407 = vld [vmem:[%s377 + $0x1e8] sm:$0xff]
      %v2408 = vld [vmem:[%s377 + $0x1f0] sm:$0xff]
      %v2409 = vld [vmem:[%s377 + $0x1f8] sm:$0xff]
      %v2410 = vmul.f32 %v2028, 0.5
      %v2411 = vmul.f32 %v2033, 0.5
      %v2412 = vmul.f32 %v2038, 0.5
      %v2413 = vmul.f32 %v2043, 0.5
      %v2414 = vmul.f32 %v2048, 0.5
      %v2415 = vmul.f32 %v2053, 0.5
      %v2416 = vmul.f32 %v2058, 0.5
      %v2417 = vmul.f32 %v2063, 0.5
      %v2418 = vmul.f32 %v2068, 0.5
      %v2419 = vmul.f32 %v2073, 0.5
      %v2420 = vmul.f32 %v2078, 0.5
      %v2421 = vmul.f32 %v2083, 0.5
      %v2422 = vmul.f32 %v2088, 0.5
      %v2423 = vmul.f32 %v2093, 0.5
      %v2424 = vmul.f32 %v2098, 0.5
      %v2425 = vmul.f32 %v2103, 0.5
      %v2426 = vmul.f32 %v2108, 0.5
      %v2427 = vmul.f32 %v2113, 0.5
      %v2428 = vmul.f32 %v2118, 0.5
      %v2429 = vmul.f32 %v2123, 0.5
      %v2430 = vmul.f32 %v2128, 0.5
      %v2431 = vmul.f32 %v2133, 0.5
      %v2432 = vmul.f32 %v2138, 0.5
      %v2433 = vmul.f32 %v2143, 0.5
      %v2434 = vmul.f32 %v2148, 0.5
      %v2435 = vmul.f32 %v2153, 0.5
      %v2436 = vmul.f32 %v2158, 0.5
      %v2437 = vmul.f32 %v2163, 0.5
      %v2438 = vmul.f32 %v2168, 0.5
      %v2439 = vmul.f32 %v2173, 0.5
      %v2440 = vmul.f32 %v2178, 0.5
      %v2441 = vmul.f32 %v2183, 0.5
      %v2442 = vmul.f32 %v2188, 0.5
      %v2443 = vmul.f32 %v2193, 0.5
      %v2444 = vmul.f32 %v2198, 0.5
      %v2445 = vmul.f32 %v2203, 0.5
      %v2446 = vmul.f32 %v2208, 0.5
      %v2447 = vmul.f32 %v2213, 0.5
      %v2448 = vmul.f32 %v2218, 0.5
      %v2449 = vmul.f32 %v2223, 0.5
      %v2450 = vmul.f32 %v2228, 0.5
      %v2451 = vmul.f32 %v2233, 0.5
      %v2452 = vmul.f32 %v2238, 0.5
      %v2453 = vmul.f32 %v2243, 0.5
      %v2454 = vmul.f32 %v2248, 0.5
      %v2455 = vmul.f32 %v2253, 0.5
      %v2456 = vmul.f32 %v2258, 0.5
      %v2457 = vmul.f32 %v2263, 0.5
      %v2458 = vmul.f32 %v2268, 0.5
      %v2459 = vmul.f32 %v2273, 0.5
      %v2460 = vmul.f32 %v2278, 0.5
      %v2461 = vmul.f32 %v2283, 0.5
      %v2462 = vmul.f32 %v2288, 0.5
      %v2463 = vmul.f32 %v2293, 0.5
      %v2464 = vmul.f32 %v2298, 0.5
      %v2465 = vmul.f32 %v2303, 0.5
      %v2466 = vmul.f32 %v2308, 0.5
      %v2467 = vmul.f32 %v2313, 0.5
      %v2468 = vmul.f32 %v2318, 0.5
      %v2469 = vmul.f32 %v2323, 0.5
      %v2470 = vmul.f32 %v2328, 0.5
      %v2471 = vmul.f32 %v2333, 0.5
      %v2472 = vmul.f32 %v2338, 0.5
      %v2473 = vmul.f32 %v2343, 0.5
      %v2474 = vmul.f32 %v2410, 1.442695
      %v2475 = vpow.pop %v2474
      %v2476 = vmul.f32 %v2411, 1.442695
      %v2477 = vpow.pop %v2476
      %v2478 = vmul.f32 %v2412, 1.442695
      %v2479 = vpow.pop %v2478
      %v2480 = vmul.f32 %v2413, 1.442695
      %v2481 = vpow.pop %v2480
      %v2482 = vmul.f32 %v2414, 1.442695
      %v2483 = vpow.pop %v2482
      %v2484 = vmul.f32 %v2415, 1.442695
      %v2485 = vpow.pop %v2484
      %v2486 = vmul.f32 %v2416, 1.442695
      %v2487 = vpow.pop %v2486
      %v2488 = vmul.f32 %v2417, 1.442695
      %v2489 = vpow.pop %v2488
      %v2490 = vmul.f32 %v2418, 1.442695
      %v2491 = vpow.pop %v2490
      %v2492 = vmul.f32 %v2419, 1.442695
      %v2493 = vpow.pop %v2492
      %v2494 = vmul.f32 %v2420, 1.442695
      %v2495 = vpow.pop %v2494
      %v2496 = vmul.f32 %v2421, 1.442695
      %v2497 = vpow.pop %v2496
      %v2498 = vmul.f32 %v2422, 1.442695
      %v2499 = vpow.pop %v2498
      %v2500 = vmul.f32 %v2423, 1.442695
      %v2501 = vpow.pop %v2500
      %v2502 = vmul.f32 %v2424, 1.442695
      %v2503 = vpow.pop %v2502
      %v2504 = vmul.f32 %v2425, 1.442695
      %v2505 = vpow.pop %v2504
      %v2506 = vmul.f32 %v2426, 1.442695
      %v2507 = vpow.pop %v2506
      %v2508 = vmul.f32 %v2427, 1.442695
      %v2509 = vpow.pop %v2508
      %v2510 = vmul.f32 %v2428, 1.442695
      %v2511 = vpow.pop %v2510
      %v2512 = vmul.f32 %v2429, 1.442695
      %v2513 = vpow.pop %v2512
      %v2514 = vmul.f32 %v2430, 1.442695
      %v2515 = vpow.pop %v2514
      %v2516 = vmul.f32 %v2431, 1.442695
      %v2517 = vpow.pop %v2516
      %v2518 = vmul.f32 %v2432, 1.442695
      %v2519 = vpow.pop %v2518
      %v2520 = vmul.f32 %v2433, 1.442695
      %v2521 = vpow.pop %v2520
      %v2522 = vmul.f32 %v2434, 1.442695
      %v2523 = vpow.pop %v2522
      %v2524 = vmul.f32 %v2435, 1.442695
      %v2525 = vpow.pop %v2524
      %v2526 = vmul.f32 %v2436, 1.442695
      %v2527 = vpow.pop %v2526
      %v2528 = vmul.f32 %v2437, 1.442695
      %v2529 = vpow.pop %v2528
      %v2530 = vmul.f32 %v2438, 1.442695
      %v2531 = vpow.pop %v2530
      %v2532 = vmul.f32 %v2439, 1.442695
      %v2533 = vpow.pop %v2532
      %v2534 = vmul.f32 %v2440, 1.442695
      %v2535 = vpow.pop %v2534
      %v2536 = vmul.f32 %v2441, 1.442695
      %v2537 = vpow.pop %v2536
      %v2538 = vmul.f32 %v2442, 1.442695
      %v2539 = vpow.pop %v2538
      %v2540 = vmul.f32 %v2443, 1.442695
      %v2541 = vpow.pop %v2540
      %v2542 = vmul.f32 %v2444, 1.442695
      %v2543 = vpow.pop %v2542
      %v2544 = vmul.f32 %v2445, 1.442695
      %v2545 = vpow.pop %v2544
      %v2546 = vmul.f32 %v2446, 1.442695
      %v2547 = vpow.pop %v2546
      %v2548 = vmul.f32 %v2447, 1.442695
      %v2549 = vpow.pop %v2548
      %v2550 = vmul.f32 %v2448, 1.442695
      %v2551 = vpow.pop %v2550
      %v2552 = vmul.f32 %v2449, 1.442695
      %v2553 = vpow.pop %v2552
      %v2554 = vmul.f32 %v2450, 1.442695
      %v2555 = vpow.pop %v2554
      %v2556 = vmul.f32 %v2451, 1.442695
      %v2557 = vpow.pop %v2556
      %v2558 = vmul.f32 %v2452, 1.442695
      %v2559 = vpow.pop %v2558
      %v2560 = vmul.f32 %v2453, 1.442695
      %v2561 = vpow.pop %v2560
      %v2562 = vmul.f32 %v2454, 1.442695
      %v2563 = vpow.pop %v2562
      %v2564 = vmul.f32 %v2455, 1.442695
      %v2565 = vpow.pop %v2564
      %v2566 = vmul.f32 %v2456, 1.442695
      %v2567 = vpow.pop %v2566
      %v2568 = vmul.f32 %v2457, 1.442695
      %v2569 = vpow.pop %v2568
      %v2570 = vmul.f32 %v2458, 1.442695
      %v2571 = vpow.pop %v2570
      %v2572 = vmul.f32 %v2459, 1.442695
      %v2573 = vpow.pop %v2572
      %v2574 = vmul.f32 %v2460, 1.442695
      %v2575 = vpow.pop %v2574
      %v2576 = vmul.f32 %v2461, 1.442695
      %v2577 = vpow.pop %v2576
      %v2578 = vmul.f32 %v2462, 1.442695
      %v2579 = vpow.pop %v2578
      %v2580 = vmul.f32 %v2463, 1.442695
      %v2581 = vpow.pop %v2580
      %v2582 = vmul.f32 %v2464, 1.442695
      %v2583 = vpow.pop %v2582
      %v2584 = vmul.f32 %v2465, 1.442695
      %v2585 = vpow.pop %v2584
      %v2586 = vmul.f32 %v2466, 1.442695
      %v2587 = vpow.pop %v2586
      %v2588 = vmul.f32 %v2467, 1.442695
      %v2589 = vpow.pop %v2588
      %v2590 = vmul.f32 %v2468, 1.442695
      %v2591 = vpow.pop %v2590
      %v2592 = vmul.f32 %v2469, 1.442695
      %v2593 = vpow.pop %v2592
      %v2594 = vmul.f32 %v2470, 1.442695
      %v2595 = vpow.pop %v2594
      %v2596 = vmul.f32 %v2471, 1.442695
      %v2597 = vpow.pop %v2596
      %v2598 = vmul.f32 %v2472, 1.442695
      %v2599 = vpow.pop %v2598
      %v2600 = vmul.f32 %v2473, 1.442695
      %v2601 = vpow.pop %v2600
      %2666 = vrot.lane.b32.xlu0 %v2475, 96
      %v2667 = vpop.permute.xlu0 %2666
      %2668 = vrot.lane.b32.xlu0 %v2477, 96
      %v2669 = vpop.permute.xlu0 %2668
      %2670 = vrot.lane.b32.xlu0 %v2479, 96
      %v2671 = vpop.permute.xlu0 %2670
      %2672 = vrot.lane.b32.xlu0 %v2481, 96
      %v2673 = vpop.permute.xlu0 %2672
      %2674 = vrot.lane.b32.xlu0 %v2483, 96
      %v2675 = vpop.permute.xlu0 %2674
      %2676 = vrot.lane.b32.xlu0 %v2485, 96
      %v2677 = vpop.permute.xlu0 %2676
      %2678 = vrot.lane.b32.xlu0 %v2487, 96
      %v2679 = vpop.permute.xlu0 %2678
      %2680 = vrot.lane.b32.xlu0 %v2489, 96
      %v2681 = vpop.permute.xlu0 %2680
      %2682 = vrot.lane.b32.xlu0 %v2491, 96
      %v2683 = vpop.permute.xlu0 %2682
      %2684 = vrot.lane.b32.xlu0 %v2493, 96
      %v2685 = vpop.permute.xlu0 %2684
      %2686 = vrot.lane.b32.xlu0 %v2495, 96
      %v2687 = vpop.permute.xlu0 %2686
      %2688 = vrot.lane.b32.xlu0 %v2497, 96
      %v2689 = vpop.permute.xlu0 %2688
      %2690 = vrot.lane.b32.xlu0 %v2499, 96
      %v2691 = vpop.permute.xlu0 %2690
      %2692 = vrot.lane.b32.xlu0 %v2501, 96
      %v2693 = vpop.permute.xlu0 %2692
      %2694 = vrot.lane.b32.xlu0 %v2503, 96
      %v2695 = vpop.permute.xlu0 %2694
      %2696 = vrot.lane.b32.xlu0 %v2505, 96
      %v2697 = vpop.permute.xlu0 %2696
      %2698 = vrot.lane.b32.xlu0 %v2507, 96
      %v2699 = vpop.permute.xlu0 %2698
      %2700 = vrot.lane.b32.xlu0 %v2509, 96
      %v2701 = vpop.permute.xlu0 %2700
      %2702 = vrot.lane.b32.xlu0 %v2511, 96
      %v2703 = vpop.permute.xlu0 %2702
      %2704 = vrot.lane.b32.xlu0 %v2513, 96
      %v2705 = vpop.permute.xlu0 %2704
      %2706 = vrot.lane.b32.xlu0 %v2515, 96
      %v2707 = vpop.permute.xlu0 %2706
      %2708 = vrot.lane.b32.xlu0 %v2517, 96
      %v2709 = vpop.permute.xlu0 %2708
      %2710 = vrot.lane.b32.xlu0 %v2519, 96
      %v2711 = vpop.permute.xlu0 %2710
      %2712 = vrot.lane.b32.xlu0 %v2521, 96
      %v2713 = vpop.permute.xlu0 %2712
      %2714 = vrot.lane.b32.xlu0 %v2523, 96
      %v2715 = vpop.permute.xlu0 %2714
      %2716 = vrot.lane.b32.xlu0 %v2525, 96
      %v2717 = vpop.permute.xlu0 %2716
      %2718 = vrot.lane.b32.xlu0 %v2527, 96
      %v2719 = vpop.permute.xlu0 %2718
      %2720 = vrot.lane.b32.xlu0 %v2529, 96
      %v2721 = vpop.permute.xlu0 %2720
      %2722 = vrot.lane.b32.xlu0 %v2531, 96
      %v2723 = vpop.permute.xlu0 %2722
      %2724 = vrot.lane.b32.xlu0 %v2533, 96
      %v2725 = vpop.permute.xlu0 %2724
      %2726 = vrot.lane.b32.xlu0 %v2535, 96
      %v2727 = vpop.permute.xlu0 %2726
      %2728 = vrot.lane.b32.xlu0 %v2537, 96
      %v2729 = vpop.permute.xlu0 %2728
      %2730 = vrot.lane.b32.xlu0 %v2539, 96
      %v2731 = vpop.permute.xlu0 %2730
      %2732 = vrot.lane.b32.xlu0 %v2541, 96
      %v2733 = vpop.permute.xlu0 %2732
      %2734 = vrot.lane.b32.xlu0 %v2543, 96
      %v2735 = vpop.permute.xlu0 %2734
      %2736 = vrot.lane.b32.xlu0 %v2545, 96
      %v2737 = vpop.permute.xlu0 %2736
      %2738 = vrot.lane.b32.xlu0 %v2547, 96
      %v2739 = vpop.permute.xlu0 %2738
      %2740 = vrot.lane.b32.xlu0 %v2549, 96
      %v2741 = vpop.permute.xlu0 %2740
      %2742 = vrot.lane.b32.xlu0 %v2551, 96
      %v2743 = vpop.permute.xlu0 %2742
      %2744 = vrot.lane.b32.xlu0 %v2553, 96
      %v2745 = vpop.permute.xlu0 %2744
      %2746 = vrot.lane.b32.xlu0 %v2555, 96
      %v2747 = vpop.permute.xlu0 %2746
      %2748 = vrot.lane.b32.xlu0 %v2557, 96
      %v2749 = vpop.permute.xlu0 %2748
      %2750 = vrot.lane.b32.xlu0 %v2559, 96
      %v2751 = vpop.permute.xlu0 %2750
      %2752 = vrot.lane.b32.xlu0 %v2561, 96
      %v2753 = vpop.permute.xlu0 %2752
      %2754 = vrot.lane.b32.xlu0 %v2563, 96
      %v2755 = vpop.permute.xlu0 %2754
      %2756 = vrot.lane.b32.xlu0 %v2565, 96
      %v2757 = vpop.permute.xlu0 %2756
      %2758 = vrot.lane.b32.xlu0 %v2567, 96
      %v2759 = vpop.permute.xlu0 %2758
      %2760 = vrot.lane.b32.xlu0 %v2569, 96
      %v2761 = vpop.permute.xlu0 %2760
      %2762 = vrot.lane.b32.xlu0 %v2571, 96
      %v2763 = vpop.permute.xlu0 %2762
      %2764 = vrot.lane.b32.xlu0 %v2573, 96
      %v2765 = vpop.permute.xlu0 %2764
      %2766 = vrot.lane.b32.xlu0 %v2575, 96
      %v2767 = vpop.permute.xlu0 %2766
      %2768 = vrot.lane.b32.xlu0 %v2577, 96
      %v2769 = vpop.permute.xlu0 %2768
      %2770 = vrot.lane.b32.xlu0 %v2579, 96
      %v2771 = vpop.permute.xlu0 %2770
      %2772 = vrot.lane.b32.xlu0 %v2581, 96
      %v2773 = vpop.permute.xlu0 %2772
      %2774 = vrot.lane.b32.xlu0 %v2583, 96
      %v2775 = vpop.permute.xlu0 %2774
      %2776 = vrot.lane.b32.xlu0 %v2585, 96
      %v2777 = vpop.permute.xlu0 %2776
      %2778 = vrot.lane.b32.xlu0 %v2587, 96
      %v2779 = vpop.permute.xlu0 %2778
      %2780 = vrot.lane.b32.xlu0 %v2589, 96
      %v2781 = vpop.permute.xlu0 %2780
      %2782 = vrot.lane.b32.xlu0 %v2591, 96
      %v2783 = vpop.permute.xlu0 %2782
      %2784 = vrot.lane.b32.xlu0 %v2593, 96
      %v2785 = vpop.permute.xlu0 %2784
      %2786 = vrot.lane.b32.xlu0 %v2595, 96
      %v2787 = vpop.permute.xlu0 %2786
      %2788 = vrot.lane.b32.xlu0 %v2597, 96
      %v2789 = vpop.permute.xlu0 %2788
      %2790 = vrot.lane.b32.xlu0 %v2599, 96
      %v2791 = vpop.permute.xlu0 %2790
      %2792 = vrot.lane.b32.xlu0 %v2601, 96
      %v2793 = vpop.permute.xlu0 %2792
      %v2858 = vmul.f32 %v2346, %v2667
      %v2859 = vmul.f32 %v2347, %v2669
      %v2860 = vmul.f32 %v2348, %v2671
      %v2861 = vmul.f32 %v2349, %v2673
      %v2862 = vmul.f32 %v2350, %v2675
      %v2863 = vmul.f32 %v2351, %v2677
      %v2864 = vmul.f32 %v2352, %v2679
      %v2865 = vmul.f32 %v2353, %v2681
      %v2866 = vmul.f32 %v2354, %v2683
      %v2867 = vmul.f32 %v2355, %v2685
      %v2868 = vmul.f32 %v2356, %v2687
      %v2869 = vmul.f32 %v2357, %v2689
      %v2870 = vmul.f32 %v2358, %v2691
      %v2871 = vmul.f32 %v2359, %v2693
      %v2872 = vmul.f32 %v2360, %v2695
      %v2873 = vmul.f32 %v2361, %v2697
      %v2874 = vmul.f32 %v2362, %v2699
      %v2875 = vmul.f32 %v2363, %v2701
      %v2876 = vmul.f32 %v2364, %v2703
      %v2877 = vmul.f32 %v2365, %v2705
      %v2878 = vmul.f32 %v2366, %v2707
      %v2879 = vmul.f32 %v2367, %v2709
      %v2880 = vmul.f32 %v2368, %v2711
      %v2881 = vmul.f32 %v2369, %v2713
      %v2882 = vmul.f32 %v2370, %v2715
      %v2883 = vmul.f32 %v2371, %v2717
      %v2884 = vmul.f32 %v2372, %v2719
      %v2885 = vmul.f32 %v2373, %v2721
      %v2886 = vmul.f32 %v2374, %v2723
      %v2887 = vmul.f32 %v2375, %v2725
      %v2888 = vmul.f32 %v2376, %v2727
      %v2889 = vmul.f32 %v2377, %v2729
      %v2890 = vmul.f32 %v2378, %v2731
      %v2891 = vmul.f32 %v2379, %v2733
      %v2892 = vmul.f32 %v2380, %v2735
      %v2893 = vmul.f32 %v2381, %v2737
      %v2894 = vmul.f32 %v2382, %v2739
      %v2895 = vmul.f32 %v2383, %v2741
      %v2896 = vmul.f32 %v2384, %v2743
      %v2897 = vmul.f32 %v2385, %v2745
      %v2898 = vmul.f32 %v2386, %v2747
      %v2899 = vmul.f32 %v2387, %v2749
      %v2900 = vmul.f32 %v2388, %v2751
      %v2901 = vmul.f32 %v2389, %v2753
      %v2902 = vmul.f32 %v2390, %v2755
      %v2903 = vmul.f32 %v2391, %v2757
      %v2904 = vmul.f32 %v2392, %v2759
      %v2905 = vmul.f32 %v2393, %v2761
      %v2906 = vmul.f32 %v2394, %v2763
      %v2907 = vmul.f32 %v2395, %v2765
      %v2908 = vmul.f32 %v2396, %v2767
      %v2909 = vmul.f32 %v2397, %v2769
      %v2910 = vmul.f32 %v2398, %v2771
      %v2911 = vmul.f32 %v2399, %v2773
      %v2912 = vmul.f32 %v2400, %v2775
      %v2913 = vmul.f32 %v2401, %v2777
      %v2914 = vmul.f32 %v2402, %v2779
      %v2915 = vmul.f32 %v2403, %v2781
      %v2916 = vmul.f32 %v2404, %v2783
      %v2917 = vmul.f32 %v2405, %v2785
      %v2918 = vmul.f32 %v2406, %v2787
      %v2919 = vmul.f32 %v2407, %v2789
      %v2920 = vmul.f32 %v2408, %v2791
      %v2921 = vmul.f32 %v2409, %v2793
      %v2922 = vadd.f32 %v2028, %v2858
      %v2923 = vadd.f32 %v2033, %v2859
      %v2924 = vadd.f32 %v2038, %v2860
      %v2925 = vadd.f32 %v2043, %v2861
      %v2926 = vadd.f32 %v2048, %v2862
      %v2927 = vadd.f32 %v2053, %v2863
      %v2928 = vadd.f32 %v2058, %v2864
      %v2929 = vadd.f32 %v2063, %v2865
      %v2930 = vadd.f32 %v2068, %v2866
      %v2931 = vadd.f32 %v2073, %v2867
      %v2932 = vadd.f32 %v2078, %v2868
      %v2933 = vadd.f32 %v2083, %v2869
      %v2934 = vadd.f32 %v2088, %v2870
      %v2935 = vadd.f32 %v2093, %v2871
      %v2936 = vadd.f32 %v2098, %v2872
      %v2937 = vadd.f32 %v2103, %v2873
      %v2938 = vadd.f32 %v2108, %v2874
      %v2939 = vadd.f32 %v2113, %v2875
      %v2940 = vadd.f32 %v2118, %v2876
      %v2941 = vadd.f32 %v2123, %v2877
      %v2942 = vadd.f32 %v2128, %v2878
      %v2943 = vadd.f32 %v2133, %v2879
      %v2944 = vadd.f32 %v2138, %v2880
      %v2945 = vadd.f32 %v2143, %v2881
      %v2946 = vadd.f32 %v2148, %v2882
      %v2947 = vadd.f32 %v2153, %v2883
      %v2948 = vadd.f32 %v2158, %v2884
      %v2949 = vadd.f32 %v2163, %v2885
      %v2950 = vadd.f32 %v2168, %v2886
      %v2951 = vadd.f32 %v2173, %v2887
      %v2952 = vadd.f32 %v2178, %v2888
      %v2953 = vadd.f32 %v2183, %v2889
      %v2954 = vadd.f32 %v2188, %v2890
      %v2955 = vadd.f32 %v2193, %v2891
      %v2956 = vadd.f32 %v2198, %v2892
      %v2957 = vadd.f32 %v2203, %v2893
      %v2958 = vadd.f32 %v2208, %v2894
      %v2959 = vadd.f32 %v2213, %v2895
      %v2960 = vadd.f32 %v2218, %v2896
      %v2961 = vadd.f32 %v2223, %v2897
      %v2962 = vadd.f32 %v2228, %v2898
      %v2963 = vadd.f32 %v2233, %v2899
      %v2964 = vadd.f32 %v2238, %v2900
      %v2965 = vadd.f32 %v2243, %v2901
      %v2966 = vadd.f32 %v2248, %v2902
      %v2967 = vadd.f32 %v2253, %v2903
      %v2968 = vadd.f32 %v2258, %v2904
      %v2969 = vadd.f32 %v2263, %v2905
      %v2970 = vadd.f32 %v2268, %v2906
      %v2971 = vadd.f32 %v2273, %v2907
      %v2972 = vadd.f32 %v2278, %v2908
      %v2973 = vadd.f32 %v2283, %v2909
      %v2974 = vadd.f32 %v2288, %v2910
      %v2975 = vadd.f32 %v2293, %v2911
      %v2976 = vadd.f32 %v2298, %v2912
      %v2977 = vadd.f32 %v2303, %v2913
      %v2978 = vadd.f32 %v2308, %v2914
      %v2979 = vadd.f32 %v2313, %v2915
      %v2980 = vadd.f32 %v2318, %v2916
      %v2981 = vadd.f32 %v2323, %v2917
      %v2982 = vadd.f32 %v2328, %v2918
      %v2983 = vadd.f32 %v2333, %v2919
      %v2984 = vadd.f32 %v2338, %v2920
      %v2985 = vadd.f32 %v2343, %v2921
      %v2986 = vld [vmem:[%s7] sm:$0xff]
      %v2987 = vld [vmem:[%s7 + $0x8] sm:$0xff]
      %v2988 = vld [vmem:[%s7 + $0x10] sm:$0xff]
      %v2989 = vld [vmem:[%s7 + $0x18] sm:$0xff]
      %v2990 = vld [vmem:[%s8] sm:$0x1]
      %v2992 = vlaneseq
      %v2993 = vshrl.u32 %v2992, 7
      %v2994 = vsub.s32 0, %v2993
      %v2995 = vrot.slane %v2990, %v2994
      %v2998 = vsel %vm1117, %v2922, 0
      %v3001 = vsel %vm1117, %v2923, 0
      %v3004 = vsel %vm1117, %v2924, 0
      %v3007 = vsel %vm1117, %v2925, 0
      %v3010 = vsel %vm1117, %v2926, 0
      %v3013 = vsel %vm1117, %v2927, 0
      %v3016 = vsel %vm1117, %v2928, 0
      %v3019 = vsel %vm1117, %v2929, 0
      %v3022 = vsel %vm1117, %v2930, 0
      %v3025 = vsel %vm1117, %v2931, 0
      %v3028 = vsel %vm1117, %v2932, 0
      %v3031 = vsel %vm1117, %v2933, 0
      %v3034 = vsel %vm1117, %v2934, 0
      %v3037 = vsel %vm1117, %v2935, 0
      %v3040 = vsel %vm1117, %v2936, 0
      %v3043 = vsel %vm1117, %v2937, 0
      %v3046 = vsel %vm1117, %v2938, 0
      %v3049 = vsel %vm1117, %v2939, 0
      %v3052 = vsel %vm1117, %v2940, 0
      %v3055 = vsel %vm1117, %v2941, 0
      %v3058 = vsel %vm1117, %v2942, 0
      %v3061 = vsel %vm1117, %v2943, 0
      %v3064 = vsel %vm1117, %v2944, 0
      %v3067 = vsel %vm1117, %v2945, 0
      %v3070 = vsel %vm1117, %v2946, 0
      %v3073 = vsel %vm1117, %v2947, 0
      %v3076 = vsel %vm1117, %v2948, 0
      %v3079 = vsel %vm1117, %v2949, 0
      %v3082 = vsel %vm1117, %v2950, 0
      %v3085 = vsel %vm1117, %v2951, 0
      %v3088 = vsel %vm1117, %v2952, 0
      %v3091 = vsel %vm1117, %v2953, 0
      %v3094 = vsel %vm1117, %v2954, 0
      %v3097 = vsel %vm1117, %v2955, 0
      %v3100 = vsel %vm1117, %v2956, 0
      %v3103 = vsel %vm1117, %v2957, 0
      %v3106 = vsel %vm1117, %v2958, 0
      %v3109 = vsel %vm1117, %v2959, 0
      %v3112 = vsel %vm1117, %v2960, 0
      %v3115 = vsel %vm1117, %v2961, 0
      %v3118 = vsel %vm1117, %v2962, 0
      %v3121 = vsel %vm1117, %v2963, 0
      %v3124 = vsel %vm1117, %v2964, 0
      %v3127 = vsel %vm1117, %v2965, 0
      %v3130 = vsel %vm1117, %v2966, 0
      %v3133 = vsel %vm1117, %v2967, 0
      %v3136 = vsel %vm1117, %v2968, 0
      %v3139 = vsel %vm1117, %v2969, 0
      %v3142 = vsel %vm1117, %v2970, 0
      %v3145 = vsel %vm1117, %v2971, 0
      %v3148 = vsel %vm1117, %v2972, 0
      %v3151 = vsel %vm1117, %v2973, 0
      %v3154 = vsel %vm1117, %v2974, 0
      %v3157 = vsel %vm1117, %v2975, 0
      %v3160 = vsel %vm1117, %v2976, 0
      %v3163 = vsel %vm1117, %v2977, 0
      %v3166 = vsel %vm1117, %v2978, 0
      %v3169 = vsel %vm1117, %v2979, 0
      %v3172 = vsel %vm1117, %v2980, 0
      %v3175 = vsel %vm1117, %v2981, 0
      %v3178 = vsel %vm1117, %v2982, 0
      %v3181 = vsel %vm1117, %v2983, 0
      %v3184 = vsel %vm1117, %v2984, 0
      %v3187 = vsel %vm1117, %v2985, 0
      %3189 = vmatprep.subr.mxu0 0.0
      %3190 = vmatpush1.msra.mxu0 %v2986
      %3191 = vmatprep.subr.mxu0 0.0
      %3192 = vmatpush1.msra.mxu0 %v2987
      %3193 = vmatprep.subr.mxu0 0.0
      %3194 = vmatpush1.msra.mxu0 %v2988
      %3195 = vmatprep.subr.mxu0 0.0
      %3196 = vmatpush1.msra.mxu0 %v2989
      %3197 = vmatprep.subr.mxu0 0.0
      %3198 = vmatpush1.msra.mxu0 0.0
      %3199 = vmatprep.subr.mxu0 0.0
      %3200 = vmatpush1.msra.mxu0 0.0
      %3201 = vmatprep.subr.mxu0 0.0
      %3202 = vmatpush1.msra.mxu0 0.0
      %3203 = vmatprep.subr.mxu0 0.0
      %3204 = vmatpush1.msra.mxu0 0.0
      %3205 = vmatprep.subr.mxu0 0.0
      %3206 = vmatpush1.msra.mxu0 0.0
      %3207 = vmatprep.subr.mxu0 0.0
      %3208 = vmatpush1.msra.mxu0 0.0
      %3209 = vmatprep.subr.mxu0 0.0
      %3210 = vmatpush1.msra.mxu0 0.0
      %3211 = vmatprep.subr.mxu0 0.0
      %3212 = vmatpush1.msra.mxu0 0.0
      %3213 = vmatprep.subr.mxu0 0.0
      %3214 = vmatpush1.msra.mxu0 0.0
      %3215 = vmatprep.subr.mxu0 0.0
      %3216 = vmatpush1.msra.mxu0 0.0
      %3217 = vmatprep.subr.mxu0 0.0
      %3218 = vmatpush1.msra.mxu0 0.0
      %3219 = vmatprep.subr.mxu0 0.0
      %3220 = vmatpush1.msra.mxu0 0.0
      %3221 = vmatprep.subr.mxu0 0.0
      %3222 = vmatpush1.msra.mxu0 0.0
      %3223 = vmatprep.subr.mxu0 0.0
      %3224 = vmatpush1.msra.mxu0 0.0
      %3225 = vmatprep.subr.mxu0 0.0
      %3226 = vmatpush1.msra.mxu0 0.0
      %3227 = vmatprep.subr.mxu0 0.0
      %3228 = vmatpush1.msra.mxu0 0.0
      %3229 = vmatprep.subr.mxu0 0.0
      %3230 = vmatpush1.msra.mxu0 0.0
      %3231 = vmatprep.subr.mxu0 0.0
      %3232 = vmatpush1.msra.mxu0 0.0
      %3233 = vmatprep.subr.mxu0 0.0
      %3234 = vmatpush1.msra.mxu0 0.0
      %3235 = vmatprep.subr.mxu0 0.0
      %3236 = vmatpush1.msra.mxu0 0.0
      %3237 = vmatprep.subr.mxu0 0.0
      %3238 = vmatpush1.msra.mxu0 0.0
      %3239 = vmatprep.subr.mxu0 0.0
      %3240 = vmatpush1.msra.mxu0 0.0
      %3241 = vmatprep.subr.mxu0 0.0
      %3242 = vmatpush1.msra.mxu0 0.0
      %3243 = vmatprep.subr.mxu0 0.0
      %3244 = vmatpush1.msra.mxu0 0.0
      %3245 = vmatprep.subr.mxu0 0.0
      %3246 = vmatpush1.msra.mxu0 0.0
      %3247 = vmatprep.subr.mxu0 0.0
      %3248 = vmatpush1.msra.mxu0 0.0
      %3249 = vmatprep.subr.mxu0 0.0
      %3250 = vmatpush1.msra.mxu0 0.0
      %3251 = vmatprep.subr.mxu0 0.0
      %3252 = vmatpush1.msra.mxu0 0.0
      %3253 = vmatprep.mubr.f32.mxu0 0.0
      %3254 = vmatmul.mubr.f32.gmra.mrb[0].mxu0 %v2998
      %v3255 = vpop.f32.mrb[0].mxu0
      %v3256 = vadd.f32 %v2995, %v3255
      %v3257 = vpop.f32.mrb[0].mxu0
      %3258 = vmatprep.mubr.f32.mxu0 0.0
      %3259 = vmatmul.mubr.f32.gmra.mrb[0].mxu0 %v3001
      %v3260 = vpop.f32.mrb[0].mxu0
      %v3261 = vadd.f32 %v2995, %v3260
      %v3262 = vpop.f32.mrb[0].mxu0
      %3263 = vmatprep.mubr.f32.mxu0 0.0
      %3264 = vmatmul.mubr.f32.gmra.mrb[0].mxu0 %v3004
      %v3265 = vpop.f32.mrb[0].mxu0
      %v3266 = vadd.f32 %v2995, %v3265
      %v3267 = vpop.f32.mrb[0].mxu0
      %3268 = vmatprep.mubr.f32.mxu0 0.0
      %3269 = vmatmul.mubr.f32.gmra.mrb[0].mxu0 %v3007
      %v3270 = vpop.f32.mrb[0].mxu0
      %v3271 = vadd.f32 %v2995, %v3270
      %v3272 = vpop.f32.mrb[0].mxu0
      %3273 = vmatprep.mubr.f32.mxu0 0.0
      %3274 = vmatmul.mubr.f32.gmra.mrb[0].mxu0 %v3010
      %v3275 = vpop.f32.mrb[0].mxu0
      %v3276 = vadd.f32 %v2995, %v3275
      %v3277 = vpop.f32.mrb[0].mxu0
      %3278 = vmatprep.mubr.f32.mxu0 0.0
      %3279 = vmatmul.mubr.f32.gmra.mrb[0].mxu0 %v3013
      %v3280 = vpop.f32.mrb[0].mxu0
      %v3281 = vadd.f32 %v2995, %v3280
      %v3282 = vpop.f32.mrb[0].mxu0
      %3283 = vmatprep.mubr.f32.mxu0 0.0
      %3284 = vmatmul.mubr.f32.gmra.mrb[0].mxu0 %v3016
      %v3285 = vpop.f32.mrb[0].mxu0
      %v3286 = vadd.f32 %v2995, %v3285
      %v3287 = vpop.f32.mrb[0].mxu0
      %3288 = vmatprep.mubr.f32.mxu0 0.0
      %3289 = vmatmul.mubr.f32.gmra.mrb[0].mxu0 %v3019
      %v3290 = vpop.f32.mrb[0].mxu0
      %v3291 = vadd.f32 %v2995, %v3290
      %v3292 = vpop.f32.mrb[0].mxu0
      %3293 = vmatprep.mubr.f32.mxu0 0.0
      %3294 = vmatmul.mubr.f32.gmra.mrb[0].mxu0 %v3022
      %v3295 = vpop.f32.mrb[0].mxu0
      %v3296 = vadd.f32 %v2995, %v3295
      %v3297 = vpop.f32.mrb[0].mxu0
      %3298 = vmatprep.mubr.f32.mxu0 0.0
      %3299 = vmatmul.mubr.f32.gmra.mrb[0].mxu0 %v3025
      %v3300 = vpop.f32.mrb[0].mxu0
      %v3301 = vadd.f32 %v2995, %v3300
      %v3302 = vpop.f32.mrb[0].mxu0
      %3303 = vmatprep.mubr.f32.mxu0 0.0
      %3304 = vmatmul.mubr.f32.gmra.mrb[0].mxu0 %v3028
      %v3305 = vpop.f32.mrb[0].mxu0
      %v3306 = vadd.f32 %v2995, %v3305
      %v3307 = vpop.f32.mrb[0].mxu0
      %3308 = vmatprep.mubr.f32.mxu0 0.0
      %3309 = vmatmul.mubr.f32.gmra.mrb[0].mxu0 %v3031
      %v3310 = vpop.f32.mrb[0].mxu0
      %v3311 = vadd.f32 %v2995, %v3310
      %v3312 = vpop.f32.mrb[0].mxu0
      %3313 = vmatprep.mubr.f32.mxu0 0.0
      %3314 = vmatmul.mubr.f32.gmra.mrb[0].mxu0 %v3034
      %v3315 = vpop.f32.mrb[0].mxu0
      %v3316 = vadd.f32 %v2995, %v3315
      %v3317 = vpop.f32.mrb[0].mxu0
      %3318 = vmatprep.mubr.f32.mxu0 0.0
      %3319 = vmatmul.mubr.f32.gmra.mrb[0].mxu0 %v3037
      %v3320 = vpop.f32.mrb[0].mxu0
      %v3321 = vadd.f32 %v2995, %v3320
      %v3322 = vpop.f32.mrb[0].mxu0
      %3323 = vmatprep.mubr.f32.mxu0 0.0
      %3324 = vmatmul.mubr.f32.gmra.mrb[0].mxu0 %v3040
      %v3325 = vpop.f32.mrb[0].mxu0
      %v3326 = vadd.f32 %v2995, %v3325
      %v3327 = vpop.f32.mrb[0].mxu0
      %3328 = vmatprep.mubr.f32.mxu0 0.0
      %3329 = vmatmul.mubr.f32.gmra.mrb[0].mxu0 %v3043
      %v3330 = vpop.f32.mrb[0].mxu0
      %v3331 = vadd.f32 %v2995, %v3330
      %v3332 = vpop.f32.mrb[0].mxu0
      %3333 = vmatprep.mubr.f32.mxu0 0.0
      %3334 = vmatmul.mubr.f32.gmra.mrb[0].mxu0 %v3046
      %v3335 = vpop.f32.mrb[0].mxu0
      %v3336 = vadd.f32 %v2995, %v3335
      %v3337 = vpop.f32.mrb[0].mxu0
      %3338 = vmatprep.mubr.f32.mxu0 0.0
      %3339 = vmatmul.mubr.f32.gmra.mrb[0].mxu0 %v3049
      %v3340 = vpop.f32.mrb[0].mxu0
      %v3341 = vadd.f32 %v2995, %v3340
      %v3342 = vpop.f32.mrb[0].mxu0
      %3343 = vmatprep.mubr.f32.mxu0 0.0
      %3344 = vmatmul.mubr.f32.gmra.mrb[0].mxu0 %v3052
      %v3345 = vpop.f32.mrb[0].mxu0
      %v3346 = vadd.f32 %v2995, %v3345
      %v3347 = vpop.f32.mrb[0].mxu0
      %3348 = vmatprep.mubr.f32.mxu0 0.0
      %3349 = vmatmul.mubr.f32.gmra.mrb[0].mxu0 %v3055
      %v3350 = vpop.f32.mrb[0].mxu0
      %v3351 = vadd.f32 %v2995, %v3350
      %v3352 = vpop.f32.mrb[0].mxu0
      %3353 = vmatprep.mubr.f32.mxu0 0.0
      %3354 = vmatmul.mubr.f32.gmra.mrb[0].mxu0 %v3058
      %v3355 = vpop.f32.mrb[0].mxu0
      %v3356 = vadd.f32 %v2995, %v3355
      %v3357 = vpop.f32.mrb[0].mxu0
      %3358 = vmatprep.mubr.f32.mxu0 0.0
      %3359 = vmatmul.mubr.f32.gmra.mrb[0].mxu0 %v3061
      %v3360 = vpop.f32.mrb[0].mxu0
      %v3361 = vadd.f32 %v2995, %v3360
      %v3362 = vpop.f32.mrb[0].mxu0
      %3363 = vmatprep.mubr.f32.mxu0 0.0
      %3364 = vmatmul.mubr.f32.gmra.mrb[0].mxu0 %v3064
      %v3365 = vpop.f32.mrb[0].mxu0
      %v3366 = vadd.f32 %v2995, %v3365
      %v3367 = vpop.f32.mrb[0].mxu0
      %3368 = vmatprep.mubr.f32.mxu0 0.0
      %3369 = vmatmul.mubr.f32.gmra.mrb[0].mxu0 %v3067
      %v3370 = vpop.f32.mrb[0].mxu0
      %v3371 = vadd.f32 %v2995, %v3370
      %v3372 = vpop.f32.mrb[0].mxu0
      %3373 = vmatprep.mubr.f32.mxu0 0.0
      %3374 = vmatmul.mubr.f32.gmra.mrb[0].mxu0 %v3070
      %v3375 = vpop.f32.mrb[0].mxu0
      %v3376 = vadd.f32 %v2995, %v3375
      %v3377 = vpop.f32.mrb[0].mxu0
      %3378 = vmatprep.mubr.f32.mxu0 0.0
      %3379 = vmatmul.mubr.f32.gmra.mrb[0].mxu0 %v3073
      %v3380 = vpop.f32.mrb[0].mxu0
      %v3381 = vadd.f32 %v2995, %v3380
      %v3382 = vpop.f32.mrb[0].mxu0
      %3383 = vmatprep.mubr.f32.mxu0 0.0
      %3384 = vmatmul.mubr.f32.gmra.mrb[0].mxu0 %v3076
      %v3385 = vpop.f32.mrb[0].mxu0
      %v3386 = vadd.f32 %v2995, %v3385
      %v3387 = vpop.f32.mrb[0].mxu0
      %3388 = vmatprep.mubr.f32.mxu0 0.0
      %3389 = vmatmul.mubr.f32.gmra.mrb[0].mxu0 %v3079
      %v3390 = vpop.f32.mrb[0].mxu0
      %v3391 = vadd.f32 %v2995, %v3390
      %v3392 = vpop.f32.mrb[0].mxu0
      %3393 = vmatprep.mubr.f32.mxu0 0.0
      %3394 = vmatmul.mubr.f32.gmra.mrb[0].mxu0 %v3082
      %v3395 = vpop.f32.mrb[0].mxu0
      %v3396 = vadd.f32 %v2995, %v3395
      %v3397 = vpop.f32.mrb[0].mxu0
      %3398 = vmatprep.mubr.f32.mxu0 0.0
      %3399 = vmatmul.mubr.f32.gmra.mrb[0].mxu0 %v3085
      %v3400 = vpop.f32.mrb[0].mxu0
      %v3401 = vadd.f32 %v2995, %v3400
      %v3402 = vpop.f32.mrb[0].mxu0
      %3403 = vmatprep.mubr.f32.mxu0 0.0
      %3404 = vmatmul.mubr.f32.gmra.mrb[0].mxu0 %v3088
      %v3405 = vpop.f32.mrb[0].mxu0
      %v3406 = vadd.f32 %v2995, %v3405
      %v3407 = vpop.f32.mrb[0].mxu0
      %3408 = vmatprep.mubr.f32.mxu0 0.0
      %3409 = vmatmul.mubr.f32.gmra.mrb[0].mxu0 %v3091
      %v3410 = vpop.f32.mrb[0].mxu0
      %v3411 = vadd.f32 %v2995, %v3410
      %v3412 = vpop.f32.mrb[0].mxu0
      %3413 = vmatprep.mubr.f32.mxu0 0.0
      %3414 = vmatmul.mubr.f32.gmra.mrb[0].mxu0 %v3094
      %v3415 = vpop.f32.mrb[0].mxu0
      %v3416 = vadd.f32 %v2995, %v3415
      %v3417 = vpop.f32.mrb[0].mxu0
      %3418 = vmatprep.mubr.f32.mxu0 0.0
      %3419 = vmatmul.mubr.f32.gmra.mrb[0].mxu0 %v3097
      %v3420 = vpop.f32.mrb[0].mxu0
      %v3421 = vadd.f32 %v2995, %v3420
      %v3422 = vpop.f32.mrb[0].mxu0
      %3423 = vmatprep.mubr.f32.mxu0 0.0
      %3424 = vmatmul.mubr.f32.gmra.mrb[0].mxu0 %v3100
      %v3425 = vpop.f32.mrb[0].mxu0
      %v3426 = vadd.f32 %v2995, %v3425
      %v3427 = vpop.f32.mrb[0].mxu0
      %3428 = vmatprep.mubr.f32.mxu0 0.0
      %3429 = vmatmul.mubr.f32.gmra.mrb[0].mxu0 %v3103
      %v3430 = vpop.f32.mrb[0].mxu0
      %v3431 = vadd.f32 %v2995, %v3430
      %v3432 = vpop.f32.mrb[0].mxu0
      %3433 = vmatprep.mubr.f32.mxu0 0.0
      %3434 = vmatmul.mubr.f32.gmra.mrb[0].mxu0 %v3106
      %v3435 = vpop.f32.mrb[0].mxu0
      %v3436 = vadd.f32 %v2995, %v3435
      %v3437 = vpop.f32.mrb[0].mxu0
      %3438 = vmatprep.mubr.f32.mxu0 0.0
      %3439 = vmatmul.mubr.f32.gmra.mrb[0].mxu0 %v3109
      %v3440 = vpop.f32.mrb[0].mxu0
      %v3441 = vadd.f32 %v2995, %v3440
      %v3442 = vpop.f32.mrb[0].mxu0
      %3443 = vmatprep.mubr.f32.mxu0 0.0
      %3444 = vmatmul.mubr.f32.gmra.mrb[0].mxu0 %v3112
      %v3445 = vpop.f32.mrb[0].mxu0
      %v3446 = vadd.f32 %v2995, %v3445
      %v3447 = vpop.f32.mrb[0].mxu0
      %3448 = vmatprep.mubr.f32.mxu0 0.0
      %3449 = vmatmul.mubr.f32.gmra.mrb[0].mxu0 %v3115
      %v3450 = vpop.f32.mrb[0].mxu0
      %v3451 = vadd.f32 %v2995, %v3450
      %v3452 = vpop.f32.mrb[0].mxu0
      %3453 = vmatprep.mubr.f32.mxu0 0.0
      %3454 = vmatmul.mubr.f32.gmra.mrb[0].mxu0 %v3118
      %v3455 = vpop.f32.mrb[0].mxu0
      %v3456 = vadd.f32 %v2995, %v3455
      %v3457 = vpop.f32.mrb[0].mxu0
      %3458 = vmatprep.mubr.f32.mxu0 0.0
      %3459 = vmatmul.mubr.f32.gmra.mrb[0].mxu0 %v3121
      %v3460 = vpop.f32.mrb[0].mxu0
      %v3461 = vadd.f32 %v2995, %v3460
      %v3462 = vpop.f32.mrb[0].mxu0
      %3463 = vmatprep.mubr.f32.mxu0 0.0
      %3464 = vmatmul.mubr.f32.gmra.mrb[0].mxu0 %v3124
      %v3465 = vpop.f32.mrb[0].mxu0
      %v3466 = vadd.f32 %v2995, %v3465
      %v3467 = vpop.f32.mrb[0].mxu0
      %3468 = vmatprep.mubr.f32.mxu0 0.0
      %3469 = vmatmul.mubr.f32.gmra.mrb[0].mxu0 %v3127
      %v3470 = vpop.f32.mrb[0].mxu0
      %v3471 = vadd.f32 %v2995, %v3470
      %v3472 = vpop.f32.mrb[0].mxu0
      %3473 = vmatprep.mubr.f32.mxu0 0.0
      %3474 = vmatmul.mubr.f32.gmra.mrb[0].mxu0 %v3130
      %v3475 = vpop.f32.mrb[0].mxu0
      %v3476 = vadd.f32 %v2995, %v3475
      %v3477 = vpop.f32.mrb[0].mxu0
      %3478 = vmatprep.mubr.f32.mxu0 0.0
      %3479 = vmatmul.mubr.f32.gmra.mrb[0].mxu0 %v3133
      %v3480 = vpop.f32.mrb[0].mxu0
      %v3481 = vadd.f32 %v2995, %v3480
      %v3482 = vpop.f32.mrb[0].mxu0
      %3483 = vmatprep.mubr.f32.mxu0 0.0
      %3484 = vmatmul.mubr.f32.gmra.mrb[0].mxu0 %v3136
      %v3485 = vpop.f32.mrb[0].mxu0
      %v3486 = vadd.f32 %v2995, %v3485
      %v3487 = vpop.f32.mrb[0].mxu0
      %3488 = vmatprep.mubr.f32.mxu0 0.0
      %3489 = vmatmul.mubr.f32.gmra.mrb[0].mxu0 %v3139
      %v3490 = vpop.f32.mrb[0].mxu0
      %v3491 = vadd.f32 %v2995, %v3490
      %v3492 = vpop.f32.mrb[0].mxu0
      %3493 = vmatprep.mubr.f32.mxu0 0.0
      %3494 = vmatmul.mubr.f32.gmra.mrb[0].mxu0 %v3142
      %v3495 = vpop.f32.mrb[0].mxu0
      %v3496 = vadd.f32 %v2995, %v3495
      %v3497 = vpop.f32.mrb[0].mxu0
      %3498 = vmatprep.mubr.f32.mxu0 0.0
      %3499 = vmatmul.mubr.f32.gmra.mrb[0].mxu0 %v3145
      %v3500 = vpop.f32.mrb[0].mxu0
      %v3501 = vadd.f32 %v2995, %v3500
      %v3502 = vpop.f32.mrb[0].mxu0
      %3503 = vmatprep.mubr.f32.mxu0 0.0
      %3504 = vmatmul.mubr.f32.gmra.mrb[0].mxu0 %v3148
      %v3505 = vpop.f32.mrb[0].mxu0
      %v3506 = vadd.f32 %v2995, %v3505
      %v3507 = vpop.f32.mrb[0].mxu0
      %3508 = vmatprep.mubr.f32.mxu0 0.0
      %3509 = vmatmul.mubr.f32.gmra.mrb[0].mxu0 %v3151
      %v3510 = vpop.f32.mrb[0].mxu0
      %v3511 = vadd.f32 %v2995, %v3510
      %v3512 = vpop.f32.mrb[0].mxu0
      %3513 = vmatprep.mubr.f32.mxu0 0.0
      %3514 = vmatmul.mubr.f32.gmra.mrb[0].mxu0 %v3154
      %v3515 = vpop.f32.mrb[0].mxu0
      %v3516 = vadd.f32 %v2995, %v3515
      %v3517 = vpop.f32.mrb[0].mxu0
      %3518 = vmatprep.mubr.f32.mxu0 0.0
      %3519 = vmatmul.mubr.f32.gmra.mrb[0].mxu0 %v3157
      %v3520 = vpop.f32.mrb[0].mxu0
      %v3521 = vadd.f32 %v2995, %v3520
      %v3522 = vpop.f32.mrb[0].mxu0
      %3523 = vmatprep.mubr.f32.mxu0 0.0
      %3524 = vmatmul.mubr.f32.gmra.mrb[0].mxu0 %v3160
      %v3525 = vpop.f32.mrb[0].mxu0
      %v3526 = vadd.f32 %v2995, %v3525
      %v3527 = vpop.f32.mrb[0].mxu0
      %3528 = vmatprep.mubr.f32.mxu0 0.0
      %3529 = vmatmul.mubr.f32.gmra.mrb[0].mxu0 %v3163
      %v3530 = vpop.f32.mrb[0].mxu0
      %v3531 = vadd.f32 %v2995, %v3530
      %v3532 = vpop.f32.mrb[0].mxu0
      %3533 = vmatprep.mubr.f32.mxu0 0.0
      %3534 = vmatmul.mubr.f32.gmra.mrb[0].mxu0 %v3166
      %v3535 = vpop.f32.mrb[0].mxu0
      %v3536 = vadd.f32 %v2995, %v3535
      %v3537 = vpop.f32.mrb[0].mxu0
      %3538 = vmatprep.mubr.f32.mxu0 0.0
      %3539 = vmatmul.mubr.f32.gmra.mrb[0].mxu0 %v3169
      %v3540 = vpop.f32.mrb[0].mxu0
      %v3541 = vadd.f32 %v2995, %v3540
      %v3542 = vpop.f32.mrb[0].mxu0
      %3543 = vmatprep.mubr.f32.mxu0 0.0
      %3544 = vmatmul.mubr.f32.gmra.mrb[0].mxu0 %v3172
      %v3545 = vpop.f32.mrb[0].mxu0
      %v3546 = vadd.f32 %v2995, %v3545
      %v3547 = vpop.f32.mrb[0].mxu0
      %3548 = vmatprep.mubr.f32.mxu0 0.0
      %3549 = vmatmul.mubr.f32.gmra.mrb[0].mxu0 %v3175
      %v3550 = vpop.f32.mrb[0].mxu0
      %v3551 = vadd.f32 %v2995, %v3550
      %v3552 = vpop.f32.mrb[0].mxu0
      %3553 = vmatprep.mubr.f32.mxu0 0.0
      %3554 = vmatmul.mubr.f32.gmra.mrb[0].mxu0 %v3178
      %v3555 = vpop.f32.mrb[0].mxu0
      %v3556 = vadd.f32 %v2995, %v3555
      %v3557 = vpop.f32.mrb[0].mxu0
      %3558 = vmatprep.mubr.f32.mxu0 0.0
      %3559 = vmatmul.mubr.f32.gmra.mrb[0].mxu0 %v3181
      %v3560 = vpop.f32.mrb[0].mxu0
      %v3561 = vadd.f32 %v2995, %v3560
      %v3562 = vpop.f32.mrb[0].mxu0
      %3563 = vmatprep.mubr.f32.mxu0 0.0
      %3564 = vmatmul.mubr.f32.gmra.mrb[0].mxu0 %v3184
      %v3565 = vpop.f32.mrb[0].mxu0
      %v3566 = vadd.f32 %v2995, %v3565
      %v3567 = vpop.f32.mrb[0].mxu0
      %3568 = vmatprep.mubr.f32.mxu0 0.0
      %3569 = vmatmul.mubr.f32.gmra.mrb[0].mxu0 %v3187
      %v3570 = vpop.f32.mrb[0].mxu0
      %v3571 = vadd.f32 %v2995, %v3570
      %v3572 = vpop.f32.mrb[0].mxu0
      %3573 = vdwg.mxu0
      %v3574 = vand.u32 2147483647, %v3256
      %v3575 = vand.u32 2147483647, %v3261
      %v3576 = vand.u32 2147483647, %v3266
      %v3577 = vand.u32 2147483647, %v3271
      %v3578 = vand.u32 2147483647, %v3276
      %v3579 = vand.u32 2147483647, %v3281
      %v3580 = vand.u32 2147483647, %v3286
      %v3581 = vand.u32 2147483647, %v3291
      %v3582 = vand.u32 2147483647, %v3296
      %v3583 = vand.u32 2147483647, %v3301
      %v3584 = vand.u32 2147483647, %v3306
      %v3585 = vand.u32 2147483647, %v3311
      %v3586 = vand.u32 2147483647, %v3316
      %v3587 = vand.u32 2147483647, %v3321
      %v3588 = vand.u32 2147483647, %v3326
      %v3589 = vand.u32 2147483647, %v3331
      %v3590 = vand.u32 2147483647, %v3336
      %v3591 = vand.u32 2147483647, %v3341
      %v3592 = vand.u32 2147483647, %v3346
      %v3593 = vand.u32 2147483647, %v3351
      %v3594 = vand.u32 2147483647, %v3356
      %v3595 = vand.u32 2147483647, %v3361
      %v3596 = vand.u32 2147483647, %v3366
      %v3597 = vand.u32 2147483647, %v3371
      %v3598 = vand.u32 2147483647, %v3376
      %v3599 = vand.u32 2147483647, %v3381
      %v3600 = vand.u32 2147483647, %v3386
      %v3601 = vand.u32 2147483647, %v3391
      %v3602 = vand.u32 2147483647, %v3396
      %v3603 = vand.u32 2147483647, %v3401
      %v3604 = vand.u32 2147483647, %v3406
      %v3605 = vand.u32 2147483647, %v3411
      %v3606 = vand.u32 2147483647, %v3416
      %v3607 = vand.u32 2147483647, %v3421
      %v3608 = vand.u32 2147483647, %v3426
      %v3609 = vand.u32 2147483647, %v3431
      %v3610 = vand.u32 2147483647, %v3436
      %v3611 = vand.u32 2147483647, %v3441
      %v3612 = vand.u32 2147483647, %v3446
      %v3613 = vand.u32 2147483647, %v3451
      %v3614 = vand.u32 2147483647, %v3456
      %v3615 = vand.u32 2147483647, %v3461
      %v3616 = vand.u32 2147483647, %v3466
      %v3617 = vand.u32 2147483647, %v3471
      %v3618 = vand.u32 2147483647, %v3476
      %v3619 = vand.u32 2147483647, %v3481
      %v3620 = vand.u32 2147483647, %v3486
      %v3621 = vand.u32 2147483647, %v3491
      %v3622 = vand.u32 2147483647, %v3496
      %v3623 = vand.u32 2147483647, %v3501
      %v3624 = vand.u32 2147483647, %v3506
      %v3625 = vand.u32 2147483647, %v3511
      %v3626 = vand.u32 2147483647, %v3516
      %v3627 = vand.u32 2147483647, %v3521
      %v3628 = vand.u32 2147483647, %v3526
      %v3629 = vand.u32 2147483647, %v3531
      %v3630 = vand.u32 2147483647, %v3536
      %v3631 = vand.u32 2147483647, %v3541
      %v3632 = vand.u32 2147483647, %v3546
      %v3633 = vand.u32 2147483647, %v3551
      %v3634 = vand.u32 2147483647, %v3556
      %v3635 = vand.u32 2147483647, %v3561
      %v3636 = vand.u32 2147483647, %v3566
      %v3637 = vand.u32 2147483647, %v3571
      %v3638 = vsub.f32 0.0, %v3574
      %v3639 = vsub.f32 0.0, %v3575
      %v3640 = vsub.f32 0.0, %v3576
      %v3641 = vsub.f32 0.0, %v3577
      %v3642 = vsub.f32 0.0, %v3578
      %v3643 = vsub.f32 0.0, %v3579
      %v3644 = vsub.f32 0.0, %v3580
      %v3645 = vsub.f32 0.0, %v3581
      %v3646 = vsub.f32 0.0, %v3582
      %v3647 = vsub.f32 0.0, %v3583
      %v3648 = vsub.f32 0.0, %v3584
      %v3649 = vsub.f32 0.0, %v3585
      %v3650 = vsub.f32 0.0, %v3586
      %v3651 = vsub.f32 0.0, %v3587
      %v3652 = vsub.f32 0.0, %v3588
      %v3653 = vsub.f32 0.0, %v3589
      %v3654 = vsub.f32 0.0, %v3590
      %v3655 = vsub.f32 0.0, %v3591
      %v3656 = vsub.f32 0.0, %v3592
      %v3657 = vsub.f32 0.0, %v3593
      %v3658 = vsub.f32 0.0, %v3594
      %v3659 = vsub.f32 0.0, %v3595
      %v3660 = vsub.f32 0.0, %v3596
      %v3661 = vsub.f32 0.0, %v3597
      %v3662 = vsub.f32 0.0, %v3598
      %v3663 = vsub.f32 0.0, %v3599
      %v3664 = vsub.f32 0.0, %v3600
      %v3665 = vsub.f32 0.0, %v3601
      %v3666 = vsub.f32 0.0, %v3602
      %v3667 = vsub.f32 0.0, %v3603
      %v3668 = vsub.f32 0.0, %v3604
      %v3669 = vsub.f32 0.0, %v3605
      %v3670 = vsub.f32 0.0, %v3606
      %v3671 = vsub.f32 0.0, %v3607
      %v3672 = vsub.f32 0.0, %v3608
      %v3673 = vsub.f32 0.0, %v3609
      %v3674 = vsub.f32 0.0, %v3610
      %v3675 = vsub.f32 0.0, %v3611
      %v3676 = vsub.f32 0.0, %v3612
      %v3677 = vsub.f32 0.0, %v3613
      %v3678 = vsub.f32 0.0, %v3614
      %v3679 = vsub.f32 0.0, %v3615
      %v3680 = vsub.f32 0.0, %v3616
      %v3681 = vsub.f32 0.0, %v3617
      %v3682 = vsub.f32 0.0, %v3618
      %v3683 = vsub.f32 0.0, %v3619
      %v3684 = vsub.f32 0.0, %v3620
      %v3685 = vsub.f32 0.0, %v3621
      %v3686 = vsub.f32 0.0, %v3622
      %v3687 = vsub.f32 0.0, %v3623
      %v3688 = vsub.f32 0.0, %v3624
      %v3689 = vsub.f32 0.0, %v3625
      %v3690 = vsub.f32 0.0, %v3626
      %v3691 = vsub.f32 0.0, %v3627
      %v3692 = vsub.f32 0.0, %v3628
      %v3693 = vsub.f32 0.0, %v3629
      %v3694 = vsub.f32 0.0, %v3630
      %v3695 = vsub.f32 0.0, %v3631
      %v3696 = vsub.f32 0.0, %v3632
      %v3697 = vsub.f32 0.0, %v3633
      %v3698 = vsub.f32 0.0, %v3634
      %v3699 = vsub.f32 0.0, %v3635
      %v3700 = vsub.f32 0.0, %v3636
      %v3701 = vsub.f32 0.0, %v3637
      %v3702 = vmul.f32 %v3638, 1.442695
      %v3703 = vpow.pop %v3702
      %v3704 = vmul.f32 %v3639, 1.442695
      %v3705 = vpow.pop %v3704
      %v3706 = vmul.f32 %v3640, 1.442695
      %v3707 = vpow.pop %v3706
      %v3708 = vmul.f32 %v3641, 1.442695
      %v3709 = vpow.pop %v3708
      %v3710 = vmul.f32 %v3642, 1.442695
      %v3711 = vpow.pop %v3710
      %v3712 = vmul.f32 %v3643, 1.442695
      %v3713 = vpow.pop %v3712
      %v3714 = vmul.f32 %v3644, 1.442695
      %v3715 = vpow.pop %v3714
      %v3716 = vmul.f32 %v3645, 1.442695
      %v3717 = vpow.pop %v3716
      %v3718 = vmul.f32 %v3646, 1.442695
      %v3719 = vpow.pop %v3718
      %v3720 = vmul.f32 %v3647, 1.442695
      %v3721 = vpow.pop %v3720
      %v3722 = vmul.f32 %v3648, 1.442695
      %v3723 = vpow.pop %v3722
      %v3724 = vmul.f32 %v3649, 1.442695
      %v3725 = vpow.pop %v3724
      %v3726 = vmul.f32 %v3650, 1.442695
      %v3727 = vpow.pop %v3726
      %v3728 = vmul.f32 %v3651, 1.442695
      %v3729 = vpow.pop %v3728
      %v3730 = vmul.f32 %v3652, 1.442695
      %v3731 = vpow.pop %v3730
      %v3732 = vmul.f32 %v3653, 1.442695
      %v3733 = vpow.pop %v3732
      %v3734 = vmul.f32 %v3654, 1.442695
      %v3735 = vpow.pop %v3734
      %v3736 = vmul.f32 %v3655, 1.442695
      %v3737 = vpow.pop %v3736
      %v3738 = vmul.f32 %v3656, 1.442695
      %v3739 = vpow.pop %v3738
      %v3740 = vmul.f32 %v3657, 1.442695
      %v3741 = vpow.pop %v3740
      %v3742 = vmul.f32 %v3658, 1.442695
      %v3743 = vpow.pop %v3742
      %v3744 = vmul.f32 %v3659, 1.442695
      %v3745 = vpow.pop %v3744
      %v3746 = vmul.f32 %v3660, 1.442695
      %v3747 = vpow.pop %v3746
      %v3748 = vmul.f32 %v3661, 1.442695
      %v3749 = vpow.pop %v3748
      %v3750 = vmul.f32 %v3662, 1.442695
      %v3751 = vpow.pop %v3750
      %v3752 = vmul.f32 %v3663, 1.442695
      %v3753 = vpow.pop %v3752
      %v3754 = vmul.f32 %v3664, 1.442695
      %v3755 = vpow.pop %v3754
      %v3756 = vmul.f32 %v3665, 1.442695
      %v3757 = vpow.pop %v3756
      %v3758 = vmul.f32 %v3666, 1.442695
      %v3759 = vpow.pop %v3758
      %v3760 = vmul.f32 %v3667, 1.442695
      %v3761 = vpow.pop %v3760
      %v3762 = vmul.f32 %v3668, 1.442695
      %v3763 = vpow.pop %v3762
      %v3764 = vmul.f32 %v3669, 1.442695
      %v3765 = vpow.pop %v3764
      %v3766 = vmul.f32 %v3670, 1.442695
      %v3767 = vpow.pop %v3766
      %v3768 = vmul.f32 %v3671, 1.442695
      %v3769 = vpow.pop %v3768
      %v3770 = vmul.f32 %v3672, 1.442695
      %v3771 = vpow.pop %v3770
      %v3772 = vmul.f32 %v3673, 1.442695
      %v3773 = vpow.pop %v3772
      %v3774 = vmul.f32 %v3674, 1.442695
      %v3775 = vpow.pop %v3774
      %v3776 = vmul.f32 %v3675, 1.442695
      %v3777 = vpow.pop %v3776
      %v3778 = vmul.f32 %v3676, 1.442695
      %v3779 = vpow.pop %v3778
      %v3780 = vmul.f32 %v3677, 1.442695
      %v3781 = vpow.pop %v3780
      %v3782 = vmul.f32 %v3678, 1.442695
      %v3783 = vpow.pop %v3782
      %v3784 = vmul.f32 %v3679, 1.442695
      %v3785 = vpow.pop %v3784
      %v3786 = vmul.f32 %v3680, 1.442695
      %v3787 = vpow.pop %v3786
      %v3788 = vmul.f32 %v3681, 1.442695
      %v3789 = vpow.pop %v3788
      %v3790 = vmul.f32 %v3682, 1.442695
      %v3791 = vpow.pop %v3790
      %v3792 = vmul.f32 %v3683, 1.442695
      %v3793 = vpow.pop %v3792
      %v3794 = vmul.f32 %v3684, 1.442695
      %v3795 = vpow.pop %v3794
      %v3796 = vmul.f32 %v3685, 1.442695
      %v3797 = vpow.pop %v3796
      %v3798 = vmul.f32 %v3686, 1.442695
      %v3799 = vpow.pop %v3798
      %v3800 = vmul.f32 %v3687, 1.442695
      %v3801 = vpow.pop %v3800
      %v3802 = vmul.f32 %v3688, 1.442695
      %v3803 = vpow.pop %v3802
      %v3804 = vmul.f32 %v3689, 1.442695
      %v3805 = vpow.pop %v3804
      %v3806 = vmul.f32 %v3690, 1.442695
      %v3807 = vpow.pop %v3806
      %v3808 = vmul.f32 %v3691, 1.442695
      %v3809 = vpow.pop %v3808
      %v3810 = vmul.f32 %v3692, 1.442695
      %v3811 = vpow.pop %v3810
      %v3812 = vmul.f32 %v3693, 1.442695
      %v3813 = vpow.pop %v3812
      %v3814 = vmul.f32 %v3694, 1.442695
      %v3815 = vpow.pop %v3814
      %v3816 = vmul.f32 %v3695, 1.442695
      %v3817 = vpow.pop %v3816
      %v3818 = vmul.f32 %v3696, 1.442695
      %v3819 = vpow.pop %v3818
      %v3820 = vmul.f32 %v3697, 1.442695
      %v3821 = vpow.pop %v3820
      %v3822 = vmul.f32 %v3698, 1.442695
      %v3823 = vpow.pop %v3822
      %v3824 = vmul.f32 %v3699, 1.442695
      %v3825 = vpow.pop %v3824
      %v3826 = vmul.f32 %v3700, 1.442695
      %v3827 = vpow.pop %v3826
      %v3828 = vmul.f32 %v3701, 1.442695
      %v3829 = vpow.pop %v3828
      %v3830 = vadd.f32 %v3703, 1.0
      %v3831 = vadd.f32 %v3705, 1.0
      %v3832 = vadd.f32 %v3707, 1.0
      %v3833 = vadd.f32 %v3709, 1.0
      %v3834 = vadd.f32 %v3711, 1.0
      %v3835 = vadd.f32 %v3713, 1.0
      %v3836 = vadd.f32 %v3715, 1.0
      %v3837 = vadd.f32 %v3717, 1.0
      %v3838 = vadd.f32 %v3719, 1.0
      %v3839 = vadd.f32 %v3721, 1.0
      %v3840 = vadd.f32 %v3723, 1.0
      %v3841 = vadd.f32 %v3725, 1.0
      %v3842 = vadd.f32 %v3727, 1.0
      %v3843 = vadd.f32 %v3729, 1.0
      %v3844 = vadd.f32 %v3731, 1.0
      %v3845 = vadd.f32 %v3733, 1.0
      %v3846 = vadd.f32 %v3735, 1.0
      %v3847 = vadd.f32 %v3737, 1.0
      %v3848 = vadd.f32 %v3739, 1.0
      %v3849 = vadd.f32 %v3741, 1.0
      %v3850 = vadd.f32 %v3743, 1.0
      %v3851 = vadd.f32 %v3745, 1.0
      %v3852 = vadd.f32 %v3747, 1.0
      %v3853 = vadd.f32 %v3749, 1.0
      %v3854 = vadd.f32 %v3751, 1.0
      %v3855 = vadd.f32 %v3753, 1.0
      %v3856 = vadd.f32 %v3755, 1.0
      %v3857 = vadd.f32 %v3757, 1.0
      %v3858 = vadd.f32 %v3759, 1.0
      %v3859 = vadd.f32 %v3761, 1.0
      %v3860 = vadd.f32 %v3763, 1.0
      %v3861 = vadd.f32 %v3765, 1.0
      %v3862 = vadd.f32 %v3767, 1.0
      %v3863 = vadd.f32 %v3769, 1.0
      %v3864 = vadd.f32 %v3771, 1.0
      %v3865 = vadd.f32 %v3773, 1.0
      %v3866 = vadd.f32 %v3775, 1.0
      %v3867 = vadd.f32 %v3777, 1.0
      %v3868 = vadd.f32 %v3779, 1.0
      %v3869 = vadd.f32 %v3781, 1.0
      %v3870 = vadd.f32 %v3783, 1.0
      %v3871 = vadd.f32 %v3785, 1.0
      %v3872 = vadd.f32 %v3787, 1.0
      %v3873 = vadd.f32 %v3789, 1.0
      %v3874 = vadd.f32 %v3791, 1.0
      %v3875 = vadd.f32 %v3793, 1.0
      %v3876 = vadd.f32 %v3795, 1.0
      %v3877 = vadd.f32 %v3797, 1.0
      %v3878 = vadd.f32 %v3799, 1.0
      %v3879 = vadd.f32 %v3801, 1.0
      %v3880 = vadd.f32 %v3803, 1.0
      %v3881 = vadd.f32 %v3805, 1.0
      %v3882 = vadd.f32 %v3807, 1.0
      %v3883 = vadd.f32 %v3809, 1.0
      %v3884 = vadd.f32 %v3811, 1.0
      %v3885 = vadd.f32 %v3813, 1.0
      %v3886 = vadd.f32 %v3815, 1.0
      %v3887 = vadd.f32 %v3817, 1.0
      %v3888 = vadd.f32 %v3819, 1.0
      %v3889 = vadd.f32 %v3821, 1.0
      %v3890 = vadd.f32 %v3823, 1.0
      %v3891 = vadd.f32 %v3825, 1.0
      %v3892 = vadd.f32 %v3827, 1.0
      %v3893 = vadd.f32 %v3829, 1.0
      %v3894 = vrcp.pop %v3830
      %v3895 = vrcp.pop %v3831
      %v3896 = vrcp.pop %v3832
      %v3897 = vrcp.pop %v3833
      %v3898 = vrcp.pop %v3834
      %v3899 = vrcp.pop %v3835
      %v3900 = vrcp.pop %v3836
      %v3901 = vrcp.pop %v3837
      %v3902 = vrcp.pop %v3838
      %v3903 = vrcp.pop %v3839
      %v3904 = vrcp.pop %v3840
      %v3905 = vrcp.pop %v3841
      %v3906 = vrcp.pop %v3842
      %v3907 = vrcp.pop %v3843
      %v3908 = vrcp.pop %v3844
      %v3909 = vrcp.pop %v3845
      %v3910 = vrcp.pop %v3846
      %v3911 = vrcp.pop %v3847
      %v3912 = vrcp.pop %v3848
      %v3913 = vrcp.pop %v3849
      %v3914 = vrcp.pop %v3850
      %v3915 = vrcp.pop %v3851
      %v3916 = vrcp.pop %v3852
      %v3917 = vrcp.pop %v3853
      %v3918 = vrcp.pop %v3854
      %v3919 = vrcp.pop %v3855
      %v3920 = vrcp.pop %v3856
      %v3921 = vrcp.pop %v3857
      %v3922 = vrcp.pop %v3858
      %v3923 = vrcp.pop %v3859
      %v3924 = vrcp.pop %v3860
      %v3925 = vrcp.pop %v3861
      %v3926 = vrcp.pop %v3862
      %v3927 = vrcp.pop %v3863
      %v3928 = vrcp.pop %v3864
      %v3929 = vrcp.pop %v3865
      %v3930 = vrcp.pop %v3866
      %v3931 = vrcp.pop %v3867
      %v3932 = vrcp.pop %v3868
      %v3933 = vrcp.pop %v3869
      %v3934 = vrcp.pop %v3870
      %v3935 = vrcp.pop %v3871
      %v3936 = vrcp.pop %v3872
      %v3937 = vrcp.pop %v3873
      %v3938 = vrcp.pop %v3874
      %v3939 = vrcp.pop %v3875
      %v3940 = vrcp.pop %v3876
      %v3941 = vrcp.pop %v3877
      %v3942 = vrcp.pop %v3878
      %v3943 = vrcp.pop %v3879
      %v3944 = vrcp.pop %v3880
      %v3945 = vrcp.pop %v3881
      %v3946 = vrcp.pop %v3882
      %v3947 = vrcp.pop %v3883
      %v3948 = vrcp.pop %v3884
      %v3949 = vrcp.pop %v3885
      %v3950 = vrcp.pop %v3886
      %v3951 = vrcp.pop %v3887
      %v3952 = vrcp.pop %v3888
      %v3953 = vrcp.pop %v3889
      %v3954 = vrcp.pop %v3890
      %v3955 = vrcp.pop %v3891
      %v3956 = vrcp.pop %v3892
      %v3957 = vrcp.pop %v3893
      %vm3958 = vcmp.ge.f32.partialorder %v3256, 0.0
      %vm3959 = vcmp.ge.f32.partialorder %v3261, 0.0
      %vm3960 = vcmp.ge.f32.partialorder %v3266, 0.0
      %vm3961 = vcmp.ge.f32.partialorder %v3271, 0.0
      %vm3962 = vcmp.ge.f32.partialorder %v3276, 0.0
      %vm3963 = vcmp.ge.f32.partialorder %v3281, 0.0
      %vm3964 = vcmp.ge.f32.partialorder %v3286, 0.0
      %vm3965 = vcmp.ge.f32.partialorder %v3291, 0.0
      %vm3966 = vcmp.ge.f32.partialorder %v3296, 0.0
      %vm3967 = vcmp.ge.f32.partialorder %v3301, 0.0
      %vm3968 = vcmp.ge.f32.partialorder %v3306, 0.0
      %vm3969 = vcmp.ge.f32.partialorder %v3311, 0.0
      %vm3970 = vcmp.ge.f32.partialorder %v3316, 0.0
      %vm3971 = vcmp.ge.f32.partialorder %v3321, 0.0
      %vm3972 = vcmp.ge.f32.partialorder %v3326, 0.0
      %vm3973 = vcmp.ge.f32.partialorder %v3331, 0.0
      %vm3974 = vcmp.ge.f32.partialorder %v3336, 0.0
      %vm3975 = vcmp.ge.f32.partialorder %v3341, 0.0
      %vm3976 = vcmp.ge.f32.partialorder %v3346, 0.0
      %vm3977 = vcmp.ge.f32.partialorder %v3351, 0.0
      %vm3978 = vcmp.ge.f32.partialorder %v3356, 0.0
      %vm3979 = vcmp.ge.f32.partialorder %v3361, 0.0
      %vm3980 = vcmp.ge.f32.partialorder %v3366, 0.0
      %vm3981 = vcmp.ge.f32.partialorder %v3371, 0.0
      %vm3982 = vcmp.ge.f32.partialorder %v3376, 0.0
      %vm3983 = vcmp.ge.f32.partialorder %v3381, 0.0
      %vm3984 = vcmp.ge.f32.partialorder %v3386, 0.0
      %vm3985 = vcmp.ge.f32.partialorder %v3391, 0.0
      %vm3986 = vcmp.ge.f32.partialorder %v3396, 0.0
      %vm3987 = vcmp.ge.f32.partialorder %v3401, 0.0
      %vm3988 = vcmp.ge.f32.partialorder %v3406, 0.0
      %vm3989 = vcmp.ge.f32.partialorder %v3411, 0.0
      %vm3990 = vcmp.ge.f32.partialorder %v3416, 0.0
      %vm3991 = vcmp.ge.f32.partialorder %v3421, 0.0
      %vm3992 = vcmp.ge.f32.partialorder %v3426, 0.0
      %vm3993 = vcmp.ge.f32.partialorder %v3431, 0.0
      %vm3994 = vcmp.ge.f32.partialorder %v3436, 0.0
      %vm3995 = vcmp.ge.f32.partialorder %v3441, 0.0
      %vm3996 = vcmp.ge.f32.partialorder %v3446, 0.0
      %vm3997 = vcmp.ge.f32.partialorder %v3451, 0.0
      %vm3998 = vcmp.ge.f32.partialorder %v3456, 0.0
      %vm3999 = vcmp.ge.f32.partialorder %v3461, 0.0
      %vm4000 = vcmp.ge.f32.partialorder %v3466, 0.0
      %vm4001 = vcmp.ge.f32.partialorder %v3471, 0.0
      %vm4002 = vcmp.ge.f32.partialorder %v3476, 0.0
      %vm4003 = vcmp.ge.f32.partialorder %v3481, 0.0
      %vm4004 = vcmp.ge.f32.partialorder %v3486, 0.0
      %vm4005 = vcmp.ge.f32.partialorder %v3491, 0.0
      %vm4006 = vcmp.ge.f32.partialorder %v3496, 0.0
      %vm4007 = vcmp.ge.f32.partialorder %v3501, 0.0
      %vm4008 = vcmp.ge.f32.partialorder %v3506, 0.0
      %vm4009 = vcmp.ge.f32.partialorder %v3511, 0.0
      %vm4010 = vcmp.ge.f32.partialorder %v3516, 0.0
      %vm4011 = vcmp.ge.f32.partialorder %v3521, 0.0
      %vm4012 = vcmp.ge.f32.partialorder %v3526, 0.0
      %vm4013 = vcmp.ge.f32.partialorder %v3531, 0.0
      %vm4014 = vcmp.ge.f32.partialorder %v3536, 0.0
      %vm4015 = vcmp.ge.f32.partialorder %v3541, 0.0
      %vm4016 = vcmp.ge.f32.partialorder %v3546, 0.0
      %vm4017 = vcmp.ge.f32.partialorder %v3551, 0.0
      %vm4018 = vcmp.ge.f32.partialorder %v3556, 0.0
      %vm4019 = vcmp.ge.f32.partialorder %v3561, 0.0
      %vm4020 = vcmp.ge.f32.partialorder %v3566, 0.0
      %vm4021 = vcmp.ge.f32.partialorder %v3571, 0.0
      %v4022 = vsub.f32 1.0, %v3894
      %v4023 = vsub.f32 1.0, %v3895
      %v4024 = vsub.f32 1.0, %v3896
      %v4025 = vsub.f32 1.0, %v3897
      %v4026 = vsub.f32 1.0, %v3898
      %v4027 = vsub.f32 1.0, %v3899
      %v4028 = vsub.f32 1.0, %v3900
      %v4029 = vsub.f32 1.0, %v3901
      %v4030 = vsub.f32 1.0, %v3902
      %v4031 = vsub.f32 1.0, %v3903
      %v4032 = vsub.f32 1.0, %v3904
      %v4033 = vsub.f32 1.0, %v3905
      %v4034 = vsub.f32 1.0, %v3906
      %v4035 = vsub.f32 1.0, %v3907
      %v4036 = vsub.f32 1.0, %v3908
      %v4037 = vsub.f32 1.0, %v3909
      %v4038 = vsub.f32 1.0, %v3910
      %v4039 = vsub.f32 1.0, %v3911
      %v4040 = vsub.f32 1.0, %v3912
      %v4041 = vsub.f32 1.0, %v3913
      %v4042 = vsub.f32 1.0, %v3914
      %v4043 = vsub.f32 1.0, %v3915
      %v4044 = vsub.f32 1.0, %v3916
      %v4045 = vsub.f32 1.0, %v3917
      %v4046 = vsub.f32 1.0, %v3918
      %v4047 = vsub.f32 1.0, %v3919
      %v4048 = vsub.f32 1.0, %v3920
      %v4049 = vsub.f32 1.0, %v3921
      %v4050 = vsub.f32 1.0, %v3922
      %v4051 = vsub.f32 1.0, %v3923
      %v4052 = vsub.f32 1.0, %v3924
      %v4053 = vsub.f32 1.0, %v3925
      %v4054 = vsub.f32 1.0, %v3926
      %v4055 = vsub.f32 1.0, %v3927
      %v4056 = vsub.f32 1.0, %v3928
      %v4057 = vsub.f32 1.0, %v3929
      %v4058 = vsub.f32 1.0, %v3930
      %v4059 = vsub.f32 1.0, %v3931
      %v4060 = vsub.f32 1.0, %v3932
      %v4061 = vsub.f32 1.0, %v3933
      %v4062 = vsub.f32 1.0, %v3934
      %v4063 = vsub.f32 1.0, %v3935
      %v4064 = vsub.f32 1.0, %v3936
      %v4065 = vsub.f32 1.0, %v3937
      %v4066 = vsub.f32 1.0, %v3938
      %v4067 = vsub.f32 1.0, %v3939
      %v4068 = vsub.f32 1.0, %v3940
      %v4069 = vsub.f32 1.0, %v3941
      %v4070 = vsub.f32 1.0, %v3942
      %v4071 = vsub.f32 1.0, %v3943
      %v4072 = vsub.f32 1.0, %v3944
      %v4073 = vsub.f32 1.0, %v3945
      %v4074 = vsub.f32 1.0, %v3946
      %v4075 = vsub.f32 1.0, %v3947
      %v4076 = vsub.f32 1.0, %v3948
      %v4077 = vsub.f32 1.0, %v3949
      %v4078 = vsub.f32 1.0, %v3950
      %v4079 = vsub.f32 1.0, %v3951
      %v4080 = vsub.f32 1.0, %v3952
      %v4081 = vsub.f32 1.0, %v3953
      %v4082 = vsub.f32 1.0, %v3954
      %v4083 = vsub.f32 1.0, %v3955
      %v4084 = vsub.f32 1.0, %v3956
      %v4085 = vsub.f32 1.0, %v3957
      %v4086 = vsel %vm3958, %v3894, %v4022
      %v4087 = vsel %vm3959, %v3895, %v4023
      %v4088 = vsel %vm3960, %v3896, %v4024
      %v4089 = vsel %vm3961, %v3897, %v4025
      %v4090 = vsel %vm3962, %v3898, %v4026
      %v4091 = vsel %vm3963, %v3899, %v4027
      %v4092 = vsel %vm3964, %v3900, %v4028
      %v4093 = vsel %vm3965, %v3901, %v4029
      %v4094 = vsel %vm3966, %v3902, %v4030
      %v4095 = vsel %vm3967, %v3903, %v4031
      %v4096 = vsel %vm3968, %v3904, %v4032
      %v4097 = vsel %vm3969, %v3905, %v4033
      %v4098 = vsel %vm3970, %v3906, %v4034
      %v4099 = vsel %vm3971, %v3907, %v4035
      %v4100 = vsel %vm3972, %v3908, %v4036
      %v4101 = vsel %vm3973, %v3909, %v4037
      %v4102 = vsel %vm3974, %v3910, %v4038
      %v4103 = vsel %vm3975, %v3911, %v4039
      %v4104 = vsel %vm3976, %v3912, %v4040
      %v4105 = vsel %vm3977, %v3913, %v4041
      %v4106 = vsel %vm3978, %v3914, %v4042
      %v4107 = vsel %vm3979, %v3915, %v4043
      %v4108 = vsel %vm3980, %v3916, %v4044
      %v4109 = vsel %vm3981, %v3917, %v4045
      %v4110 = vsel %vm3982, %v3918, %v4046
      %v4111 = vsel %vm3983, %v3919, %v4047
      %v4112 = vsel %vm3984, %v3920, %v4048
      %v4113 = vsel %vm3985, %v3921, %v4049
      %v4114 = vsel %vm3986, %v3922, %v4050
      %v4115 = vsel %vm3987, %v3923, %v4051
      %v4116 = vsel %vm3988, %v3924, %v4052
      %v4117 = vsel %vm3989, %v3925, %v4053
      %v4118 = vsel %vm3990, %v3926, %v4054
      %v4119 = vsel %vm3991, %v3927, %v4055
      %v4120 = vsel %vm3992, %v3928, %v4056
      %v4121 = vsel %vm3993, %v3929, %v4057
      %v4122 = vsel %vm3994, %v3930, %v4058
      %v4123 = vsel %vm3995, %v3931, %v4059
      %v4124 = vsel %vm3996, %v3932, %v4060
      %v4125 = vsel %vm3997, %v3933, %v4061
      %v4126 = vsel %vm3998, %v3934, %v4062
      %v4127 = vsel %vm3999, %v3935, %v4063
      %v4128 = vsel %vm4000, %v3936, %v4064
      %v4129 = vsel %vm4001, %v3937, %v4065
      %v4130 = vsel %vm4002, %v3938, %v4066
      %v4131 = vsel %vm4003, %v3939, %v4067
      %v4132 = vsel %vm4004, %v3940, %v4068
      %v4133 = vsel %vm4005, %v3941, %v4069
      %v4134 = vsel %vm4006, %v3942, %v4070
      %v4135 = vsel %vm4007, %v3943, %v4071
      %v4136 = vsel %vm4008, %v3944, %v4072
      %v4137 = vsel %vm4009, %v3945, %v4073
      %v4138 = vsel %vm4010, %v3946, %v4074
      %v4139 = vsel %vm4011, %v3947, %v4075
      %v4140 = vsel %vm4012, %v3948, %v4076
      %v4141 = vsel %vm4013, %v3949, %v4077
      %v4142 = vsel %vm4014, %v3950, %v4078
      %v4143 = vsel %vm4015, %v3951, %v4079
      %v4144 = vsel %vm4016, %v3952, %v4080
      %v4145 = vsel %vm4017, %v3953, %v4081
      %v4146 = vsel %vm4018, %v3954, %v4082
      %v4147 = vsel %vm4019, %v3955, %v4083
      %v4148 = vsel %vm4020, %v3956, %v4084
      %v4149 = vsel %vm4021, %v3957, %v4085
      %4150 = vst.msk [vmem:[%s383] sm:$0xff] %vm464, %v4086
      %4151 = vst.msk [vmem:[%s383 + $0x8] sm:$0xff] %vm464, %v4087
      %4152 = vst.msk [vmem:[%s383 + $0x10] sm:$0xff] %vm464, %v4088
      %4153 = vst.msk [vmem:[%s383 + $0x18] sm:$0xff] %vm464, %v4089
      %4154 = vst.msk [vmem:[%s383 + $0x20] sm:$0xff] %vm464, %v4090
      %4155 = vst.msk [vmem:[%s383 + $0x28] sm:$0xff] %vm464, %v4091
      %4156 = vst.msk [vmem:[%s383 + $0x30] sm:$0xff] %vm464, %v4092
      %4157 = vst.msk [vmem:[%s383 + $0x38] sm:$0xff] %vm464, %v4093
      %4158 = vst.msk [vmem:[%s383 + $0x40] sm:$0xff] %vm464, %v4094
      %4159 = vst.msk [vmem:[%s383 + $0x48] sm:$0xff] %vm464, %v4095
      %4160 = vst.msk [vmem:[%s383 + $0x50] sm:$0xff] %vm464, %v4096
      %4161 = vst.msk [vmem:[%s383 + $0x58] sm:$0xff] %vm464, %v4097
      %4162 = vst.msk [vmem:[%s383 + $0x60] sm:$0xff] %vm464, %v4098
      %4163 = vst.msk [vmem:[%s383 + $0x68] sm:$0xff] %vm464, %v4099
      %4164 = vst.msk [vmem:[%s383 + $0x70] sm:$0xff] %vm464, %v4100
      %4165 = vst.msk [vmem:[%s383 + $0x78] sm:$0xff] %vm464, %v4101
      %4166 = vst.msk [vmem:[%s383 + $0x80] sm:$0xff] %vm464, %v4102
      %4167 = vst.msk [vmem:[%s383 + $0x88] sm:$0xff] %vm464, %v4103
      %4168 = vst.msk [vmem:[%s383 + $0x90] sm:$0xff] %vm464, %v4104
      %4169 = vst.msk [vmem:[%s383 + $0x98] sm:$0xff] %vm464, %v4105
      %4170 = vst.msk [vmem:[%s383 + $0xa0] sm:$0xff] %vm464, %v4106
      %4171 = vst.msk [vmem:[%s383 + $0xa8] sm:$0xff] %vm464, %v4107
      %4172 = vst.msk [vmem:[%s383 + $0xb0] sm:$0xff] %vm464, %v4108
      %4173 = vst.msk [vmem:[%s383 + $0xb8] sm:$0xff] %vm464, %v4109
      %4174 = vst.msk [vmem:[%s383 + $0xc0] sm:$0xff] %vm464, %v4110
      %4175 = vst.msk [vmem:[%s383 + $0xc8] sm:$0xff] %vm464, %v4111
      %4176 = vst.msk [vmem:[%s383 + $0xd0] sm:$0xff] %vm464, %v4112
      %4177 = vst.msk [vmem:[%s383 + $0xd8] sm:$0xff] %vm464, %v4113
      %4178 = vst.msk [vmem:[%s383 + $0xe0] sm:$0xff] %vm464, %v4114
      %4179 = vst.msk [vmem:[%s383 + $0xe8] sm:$0xff] %vm464, %v4115
      %4180 = vst.msk [vmem:[%s383 + $0xf0] sm:$0xff] %vm464, %v4116
      %4181 = vst.msk [vmem:[%s383 + $0xf8] sm:$0xff] %vm464, %v4117
      %4182 = vst.msk [vmem:[%s383 + $0x100] sm:$0xff] %vm464, %v4118
      %4183 = vst.msk [vmem:[%s383 + $0x108] sm:$0xff] %vm464, %v4119
      %4184 = vst.msk [vmem:[%s383 + $0x110] sm:$0xff] %vm464, %v4120
      %4185 = vst.msk [vmem:[%s383 + $0x118] sm:$0xff] %vm464, %v4121
      %4186 = vst.msk [vmem:[%s383 + $0x120] sm:$0xff] %vm464, %v4122
      %4187 = vst.msk [vmem:[%s383 + $0x128] sm:$0xff] %vm464, %v4123
      %4188 = vst.msk [vmem:[%s383 + $0x130] sm:$0xff] %vm464, %v4124
      %4189 = vst.msk [vmem:[%s383 + $0x138] sm:$0xff] %vm464, %v4125
      %4190 = vst.msk [vmem:[%s383 + $0x140] sm:$0xff] %vm464, %v4126
      %4191 = vst.msk [vmem:[%s383 + $0x148] sm:$0xff] %vm464, %v4127
      %4192 = vst.msk [vmem:[%s383 + $0x150] sm:$0xff] %vm464, %v4128
      %4193 = vst.msk [vmem:[%s383 + $0x158] sm:$0xff] %vm464, %v4129
      %4194 = vst.msk [vmem:[%s383 + $0x160] sm:$0xff] %vm464, %v4130
      %4195 = vst.msk [vmem:[%s383 + $0x168] sm:$0xff] %vm464, %v4131
      %4196 = vst.msk [vmem:[%s383 + $0x170] sm:$0xff] %vm464, %v4132
      %4197 = vst.msk [vmem:[%s383 + $0x178] sm:$0xff] %vm464, %v4133
      %4198 = vst.msk [vmem:[%s383 + $0x180] sm:$0xff] %vm464, %v4134
      %4199 = vst.msk [vmem:[%s383 + $0x188] sm:$0xff] %vm464, %v4135
      %4200 = vst.msk [vmem:[%s383 + $0x190] sm:$0xff] %vm464, %v4136
      %4201 = vst.msk [vmem:[%s383 + $0x198] sm:$0xff] %vm464, %v4137
      %4202 = vst.msk [vmem:[%s383 + $0x1a0] sm:$0xff] %vm464, %v4138
      %4203 = vst.msk [vmem:[%s383 + $0x1a8] sm:$0xff] %vm464, %v4139
      %4204 = vst.msk [vmem:[%s383 + $0x1b0] sm:$0xff] %vm464, %v4140
      %4205 = vst.msk [vmem:[%s383 + $0x1b8] sm:$0xff] %vm464, %v4141
      %4206 = vst.msk [vmem:[%s383 + $0x1c0] sm:$0xff] %vm464, %v4142
      %4207 = vst.msk [vmem:[%s383 + $0x1c8] sm:$0xff] %vm464, %v4143
      %4208 = vst.msk [vmem:[%s383 + $0x1d0] sm:$0xff] %vm464, %v4144
      %4209 = vst.msk [vmem:[%s383 + $0x1d8] sm:$0xff] %vm464, %v4145
      %4210 = vst.msk [vmem:[%s383 + $0x1e0] sm:$0xff] %vm464, %v4146
      %4211 = vst.msk [vmem:[%s383 + $0x1e8] sm:$0xff] %vm464, %v4147
      %4212 = vst.msk [vmem:[%s383 + $0x1f0] sm:$0xff] %vm464, %v4148
      %4213 = vst.msk [vmem:[%s383 + $0x1f8] sm:$0xff] %vm464, %v4149
      %4278 = vrot.lane.b32.xlu0 %v2028, 64
      %v4279 = vpop.permute.xlu0 %4278
      %4280 = vrot.lane.b32.xlu0 %v2033, 64
      %v4281 = vpop.permute.xlu0 %4280
      %4282 = vrot.lane.b32.xlu0 %v2038, 64
      %v4283 = vpop.permute.xlu0 %4282
      %4284 = vrot.lane.b32.xlu0 %v2043, 64
      %v4285 = vpop.permute.xlu0 %4284
      %4286 = vrot.lane.b32.xlu0 %v2048, 64
      %v4287 = vpop.permute.xlu0 %4286
      %4288 = vrot.lane.b32.xlu0 %v2053, 64
      %v4289 = vpop.permute.xlu0 %4288
      %4290 = vrot.lane.b32.xlu0 %v2058, 64
      %v4291 = vpop.permute.xlu0 %4290
      %4292 = vrot.lane.b32.xlu0 %v2063, 64
      %v4293 = vpop.permute.xlu0 %4292
      %4294 = vrot.lane.b32.xlu0 %v2068, 64
      %v4295 = vpop.permute.xlu0 %4294
      %4296 = vrot.lane.b32.xlu0 %v2073, 64
      %v4297 = vpop.permute.xlu0 %4296
      %4298 = vrot.lane.b32.xlu0 %v2078, 64
      %v4299 = vpop.permute.xlu0 %4298
      %4300 = vrot.lane.b32.xlu0 %v2083, 64
      %v4301 = vpop.permute.xlu0 %4300
      %4302 = vrot.lane.b32.xlu0 %v2088, 64
      %v4303 = vpop.permute.xlu0 %4302
      %4304 = vrot.lane.b32.xlu0 %v2093, 64
      %v4305 = vpop.permute.xlu0 %4304
      %4306 = vrot.lane.b32.xlu0 %v2098, 64
      %v4307 = vpop.permute.xlu0 %4306
      %4308 = vrot.lane.b32.xlu0 %v2103, 64
      %v4309 = vpop.permute.xlu0 %4308
      %4310 = vrot.lane.b32.xlu0 %v2108, 64
      %v4311 = vpop.permute.xlu0 %4310
      %4312 = vrot.lane.b32.xlu0 %v2113, 64
      %v4313 = vpop.permute.xlu0 %4312
      %4314 = vrot.lane.b32.xlu0 %v2118, 64
      %v4315 = vpop.permute.xlu0 %4314
      %4316 = vrot.lane.b32.xlu0 %v2123, 64
      %v4317 = vpop.permute.xlu0 %4316
      %4318 = vrot.lane.b32.xlu0 %v2128, 64
      %v4319 = vpop.permute.xlu0 %4318
      %4320 = vrot.lane.b32.xlu0 %v2133, 64
      %v4321 = vpop.permute.xlu0 %4320
      %4322 = vrot.lane.b32.xlu0 %v2138, 64
      %v4323 = vpop.permute.xlu0 %4322
      %4324 = vrot.lane.b32.xlu0 %v2143, 64
      %v4325 = vpop.permute.xlu0 %4324
      %4326 = vrot.lane.b32.xlu0 %v2148, 64
      %v4327 = vpop.permute.xlu0 %4326
      %4328 = vrot.lane.b32.xlu0 %v2153, 64
      %v4329 = vpop.permute.xlu0 %4328
      %4330 = vrot.lane.b32.xlu0 %v2158, 64
      %v4331 = vpop.permute.xlu0 %4330
      %4332 = vrot.lane.b32.xlu0 %v2163, 64
      %v4333 = vpop.permute.xlu0 %4332
      %4334 = vrot.lane.b32.xlu0 %v2168, 64
      %v4335 = vpop.permute.xlu0 %4334
      %4336 = vrot.lane.b32.xlu0 %v2173, 64
      %v4337 = vpop.permute.xlu0 %4336
      %4338 = vrot.lane.b32.xlu0 %v2178, 64
      %v4339 = vpop.permute.xlu0 %4338
      %4340 = vrot.lane.b32.xlu0 %v2183, 64
      %v4341 = vpop.permute.xlu0 %4340
      %4342 = vrot.lane.b32.xlu0 %v2188, 64
      %v4343 = vpop.permute.xlu0 %4342
      %4344 = vrot.lane.b32.xlu0 %v2193, 64
      %v4345 = vpop.permute.xlu0 %4344
      %4346 = vrot.lane.b32.xlu0 %v2198, 64
      %v4347 = vpop.permute.xlu0 %4346
      %4348 = vrot.lane.b32.xlu0 %v2203, 64
      %v4349 = vpop.permute.xlu0 %4348
      %4350 = vrot.lane.b32.xlu0 %v2208, 64
      %v4351 = vpop.permute.xlu0 %4350
      %4352 = vrot.lane.b32.xlu0 %v2213, 64
      %v4353 = vpop.permute.xlu0 %4352
      %4354 = vrot.lane.b32.xlu0 %v2218, 64
      %v4355 = vpop.permute.xlu0 %4354
      %4356 = vrot.lane.b32.xlu0 %v2223, 64
      %v4357 = vpop.permute.xlu0 %4356
      %4358 = vrot.lane.b32.xlu0 %v2228, 64
      %v4359 = vpop.permute.xlu0 %4358
      %4360 = vrot.lane.b32.xlu0 %v2233, 64
      %v4361 = vpop.permute.xlu0 %4360
      %4362 = vrot.lane.b32.xlu0 %v2238, 64
      %v4363 = vpop.permute.xlu0 %4362
      %4364 = vrot.lane.b32.xlu0 %v2243, 64
      %v4365 = vpop.permute.xlu0 %4364
      %4366 = vrot.lane.b32.xlu0 %v2248, 64
      %v4367 = vpop.permute.xlu0 %4366
      %4368 = vrot.lane.b32.xlu0 %v2253, 64
      %v4369 = vpop.permute.xlu0 %4368
      %4370 = vrot.lane.b32.xlu0 %v2258, 64
      %v4371 = vpop.permute.xlu0 %4370
      %4372 = vrot.lane.b32.xlu0 %v2263, 64
      %v4373 = vpop.permute.xlu0 %4372
      %4374 = vrot.lane.b32.xlu0 %v2268, 64
      %v4375 = vpop.permute.xlu0 %4374
      %4376 = vrot.lane.b32.xlu0 %v2273, 64
      %v4377 = vpop.permute.xlu0 %4376
      %4378 = vrot.lane.b32.xlu0 %v2278, 64
      %v4379 = vpop.permute.xlu0 %4378
      %4380 = vrot.lane.b32.xlu0 %v2283, 64
      %v4381 = vpop.permute.xlu0 %4380
      %4382 = vrot.lane.b32.xlu0 %v2288, 64
      %v4383 = vpop.permute.xlu0 %4382
      %4384 = vrot.lane.b32.xlu0 %v2293, 64
      %v4385 = vpop.permute.xlu0 %4384
      %4386 = vrot.lane.b32.xlu0 %v2298, 64
      %v4387 = vpop.permute.xlu0 %4386
      %4388 = vrot.lane.b32.xlu0 %v2303, 64
      %v4389 = vpop.permute.xlu0 %4388
      %4390 = vrot.lane.b32.xlu0 %v2308, 64
      %v4391 = vpop.permute.xlu0 %4390
      %4392 = vrot.lane.b32.xlu0 %v2313, 64
      %v4393 = vpop.permute.xlu0 %4392
      %4394 = vrot.lane.b32.xlu0 %v2318, 64
      %v4395 = vpop.permute.xlu0 %4394
      %4396 = vrot.lane.b32.xlu0 %v2323, 64
      %v4397 = vpop.permute.xlu0 %4396
      %4398 = vrot.lane.b32.xlu0 %v2328, 64
      %v4399 = vpop.permute.xlu0 %4398
      %4400 = vrot.lane.b32.xlu0 %v2333, 64
      %v4401 = vpop.permute.xlu0 %4400
      %4402 = vrot.lane.b32.xlu0 %v2338, 64
      %v4403 = vpop.permute.xlu0 %4402
      %4404 = vrot.lane.b32.xlu0 %v2343, 64
      %v4405 = vpop.permute.xlu0 %4404
      %vm4470 = vcmask 1048064
      %4471 = vst.msk [vmem:[%s383] sm:$0xff] %vm4470, %v4279
      %4472 = vst.msk [vmem:[%s383 + $0x8] sm:$0xff] %vm4470, %v4281
      %4473 = vst.msk [vmem:[%s383 + $0x10] sm:$0xff] %vm4470, %v4283
      %4474 = vst.msk [vmem:[%s383 + $0x18] sm:$0xff] %vm4470, %v4285
      %4475 = vst.msk [vmem:[%s383 + $0x20] sm:$0xff] %vm4470, %v4287
      %4476 = vst.msk [vmem:[%s383 + $0x28] sm:$0xff] %vm4470, %v4289
      %4477 = vst.msk [vmem:[%s383 + $0x30] sm:$0xff] %vm4470, %v4291
      %4478 = vst.msk [vmem:[%s383 + $0x38] sm:$0xff] %vm4470, %v4293
      %4479 = vst.msk [vmem:[%s383 + $0x40] sm:$0xff] %vm4470, %v4295
      %4480 = vst.msk [vmem:[%s383 + $0x48] sm:$0xff] %vm4470, %v4297
      %4481 = vst.msk [vmem:[%s383 + $0x50] sm:$0xff] %vm4470, %v4299
      %4482 = vst.msk [vmem:[%s383 + $0x58] sm:$0xff] %vm4470, %v4301
      %4483 = vst.msk [vmem:[%s383 + $0x60] sm:$0xff] %vm4470, %v4303
      %4484 = vst.msk [vmem:[%s383 + $0x68] sm:$0xff] %vm4470, %v4305
      %4485 = vst.msk [vmem:[%s383 + $0x70] sm:$0xff] %vm4470, %v4307
      %4486 = vst.msk [vmem:[%s383 + $0x78] sm:$0xff] %vm4470, %v4309
      %4487 = vst.msk [vmem:[%s383 + $0x80] sm:$0xff] %vm4470, %v4311
      %4488 = vst.msk [vmem:[%s383 + $0x88] sm:$0xff] %vm4470, %v4313
      %4489 = vst.msk [vmem:[%s383 + $0x90] sm:$0xff] %vm4470, %v4315
      %4490 = vst.msk [vmem:[%s383 + $0x98] sm:$0xff] %vm4470, %v4317
      %4491 = vst.msk [vmem:[%s383 + $0xa0] sm:$0xff] %vm4470, %v4319
      %4492 = vst.msk [vmem:[%s383 + $0xa8] sm:$0xff] %vm4470, %v4321
      %4493 = vst.msk [vmem:[%s383 + $0xb0] sm:$0xff] %vm4470, %v4323
      %4494 = vst.msk [vmem:[%s383 + $0xb8] sm:$0xff] %vm4470, %v4325
      %4495 = vst.msk [vmem:[%s383 + $0xc0] sm:$0xff] %vm4470, %v4327
      %4496 = vst.msk [vmem:[%s383 + $0xc8] sm:$0xff] %vm4470, %v4329
      %4497 = vst.msk [vmem:[%s383 + $0xd0] sm:$0xff] %vm4470, %v4331
      %4498 = vst.msk [vmem:[%s383 + $0xd8] sm:$0xff] %vm4470, %v4333
      %4499 = vst.msk [vmem:[%s383 + $0xe0] sm:$0xff] %vm4470, %v4335
      %4500 = vst.msk [vmem:[%s383 + $0xe8] sm:$0xff] %vm4470, %v4337
      %4501 = vst.msk [vmem:[%s383 + $0xf0] sm:$0xff] %vm4470, %v4339
      %4502 = vst.msk [vmem:[%s383 + $0xf8] sm:$0xff] %vm4470, %v4341
      %4503 = vst.msk [vmem:[%s383 + $0x100] sm:$0xff] %vm4470, %v4343
      %4504 = vst.msk [vmem:[%s383 + $0x108] sm:$0xff] %vm4470, %v4345
      %4505 = vst.msk [vmem:[%s383 + $0x110] sm:$0xff] %vm4470, %v4347
      %4506 = vst.msk [vmem:[%s383 + $0x118] sm:$0xff] %vm4470, %v4349
      %4507 = vst.msk [vmem:[%s383 + $0x120] sm:$0xff] %vm4470, %v4351
      %4508 = vst.msk [vmem:[%s383 + $0x128] sm:$0xff] %vm4470, %v4353
      %4509 = vst.msk [vmem:[%s383 + $0x130] sm:$0xff] %vm4470, %v4355
      %4510 = vst.msk [vmem:[%s383 + $0x138] sm:$0xff] %vm4470, %v4357
      %4511 = vst.msk [vmem:[%s383 + $0x140] sm:$0xff] %vm4470, %v4359
      %4512 = vst.msk [vmem:[%s383 + $0x148] sm:$0xff] %vm4470, %v4361
      %4513 = vst.msk [vmem:[%s383 + $0x150] sm:$0xff] %vm4470, %v4363
      %4514 = vst.msk [vmem:[%s383 + $0x158] sm:$0xff] %vm4470, %v4365
      %4515 = vst.msk [vmem:[%s383 + $0x160] sm:$0xff] %vm4470, %v4367
      %4516 = vst.msk [vmem:[%s383 + $0x168] sm:$0xff] %vm4470, %v4369
      %4517 = vst.msk [vmem:[%s383 + $0x170] sm:$0xff] %vm4470, %v4371
      %4518 = vst.msk [vmem:[%s383 + $0x178] sm:$0xff] %vm4470, %v4373
      %4519 = vst.msk [vmem:[%s383 + $0x180] sm:$0xff] %vm4470, %v4375
      %4520 = vst.msk [vmem:[%s383 + $0x188] sm:$0xff] %vm4470, %v4377
      %4521 = vst.msk [vmem:[%s383 + $0x190] sm:$0xff] %vm4470, %v4379
      %4522 = vst.msk [vmem:[%s383 + $0x198] sm:$0xff] %vm4470, %v4381
      %4523 = vst.msk [vmem:[%s383 + $0x1a0] sm:$0xff] %vm4470, %v4383
      %4524 = vst.msk [vmem:[%s383 + $0x1a8] sm:$0xff] %vm4470, %v4385
      %4525 = vst.msk [vmem:[%s383 + $0x1b0] sm:$0xff] %vm4470, %v4387
      %4526 = vst.msk [vmem:[%s383 + $0x1b8] sm:$0xff] %vm4470, %v4389
      %4527 = vst.msk [vmem:[%s383 + $0x1c0] sm:$0xff] %vm4470, %v4391
      %4528 = vst.msk [vmem:[%s383 + $0x1c8] sm:$0xff] %vm4470, %v4393
      %4529 = vst.msk [vmem:[%s383 + $0x1d0] sm:$0xff] %vm4470, %v4395
      %4530 = vst.msk [vmem:[%s383 + $0x1d8] sm:$0xff] %vm4470, %v4397
      %4531 = vst.msk [vmem:[%s383 + $0x1e0] sm:$0xff] %vm4470, %v4399
      %4532 = vst.msk [vmem:[%s383 + $0x1e8] sm:$0xff] %vm4470, %v4401
      %4533 = vst.msk [vmem:[%s383 + $0x1f0] sm:$0xff] %vm4470, %v4403
      %4534 = vst.msk [vmem:[%s383 + $0x1f8] sm:$0xff] %vm4470, %v4405
      %s4535 = smul.u32 64, %s21
      %p4536 = scmp.lt.s32.totalorder %s4535, 127
      %s4537 = scalar_select %p4536, %s4535, 127
      %s4538 = smul.addr %s4537, 8
      %s4539 = scalar_lea.vmem %s10, %s4538
      // Predicated region
      $region61: #{vae_forward.1} parent=59 // pred_check
        %p4540 = pneg %p259
      $region62: #{vae_forward.1} parent=59 // pred_check_branch
        %4542 = sbr.rel (%p4540) target = $region64
      $region63: #{vae_forward.1} parent=59 // pred_region
        %s4543 = smul.u32 64, %s21
      $region64: #{vae_forward.1} parent=59 // pred_fallthru
        _
    $region60: #{vae_forward.1} parent=5 // pred_fallthru
      _
    %p4544 = scmp.le.s32.totalorder 2, %s16
    // Predicated region
    $region65: #{vae_forward.1} parent=5 // pred_check
      %p4545 = pneg %p4544
    $region66: #{vae_forward.1} parent=5 // pred_check_branch
      %4547 = sbr.rel (%p4545) target = $region68
    $region67: #{vae_forward.1} parent=5 // pred_region
      %s4548 = ssub.s32 %s16, 2
      // Predicated region
      $region69: #{vae_forward.1} parent=67 // pred_check
        %p4549 = pneg %p265
      $region70: #{vae_forward.1} parent=67 // pred_check_branch
        %4551 = sbr.rel (%p4549) target = $region72
      $region71: #{vae_forward.1} parent=67 // pred_region
        %s4552 = smul.u32 64, %s22
        %p4553 = scmp.lt.s32.totalorder %s4552, 127
        %s4554 = scalar_select %p4553, %s4552, 127
        %s4555 = smul.addr %s4554, 8
        %s4556 = scalar_lea.vmem %s10, %s4555
      $region72: #{vae_forward.1} parent=67 // pred_fallthru
        _
    $region68: #{vae_forward.1} parent=5 // pred_fallthru
      _
  $region6: #{vae_forward.1} parent=0 // loop_footer
    %s20 = sadd.s32 1, %s16
  $region7: #{vae_forward.1} parent=0 // loop_footer_branch
    %15 = sbr.rel target = $region3
  $region8: #{vae_forward.1} parent=0 // loop_exit
    _

</llo_original>
